<compile_context>
chip_gen: v7x
topology: tpu7x:2x2x1
jax: 0.10.0
libtpu: 0.0.40
codegen_flags: <defaults>
</compile_context>

<pallas_src>
import functools

import numpy as np
import jax
import jax.numpy as jnp
from jax import lax
from jax.experimental import pallas as pl
from jax.experimental.pallas import tpu as pltpu


# --------------------- host-side (numpy) matrix builders, run once ---------------------

def adaptive_pool_matrix(s, n):
    """P (s, n): pooled = P @ x, matching nn.AdaptiveAvgPool2d semantics."""
    P = np.zeros((s, n), np.float32)
    for i in range(s):
        start = (i * n) // s
        end = -(-((i + 1) * n) // s)          # ceil
        P[i, start:end] = 1.0 / (end - start)
    return P


def bilinear_up_matrix(n_out, s):
    """U (n_out, s): up = U @ y, bilinear, align_corners=True."""
    U = np.zeros((n_out, s), np.float32)
    if s == 1:
        U[:, 0] = 1.0
    else:
        scale = (s - 1) / (n_out - 1)         # NOTE: requires n_out > 1
        for i in range(n_out):
            src = i * scale
            i0 = int(np.floor(src))
            i1 = min(i0 + 1, s - 1)
            frac = src - i0
            U[i, i0] += 1.0 - frac
            U[i, i1] += frac
    return U


def bn_fold_np(gamma, beta, mean, var, eps=1e-5):
    gamma = np.asarray(gamma, np.float32)
    beta = np.asarray(beta, np.float32)
    mean = np.asarray(mean, np.float32)
    var = np.asarray(var, np.float32)
    scale = gamma / np.sqrt(var + eps)
    return scale, beta - mean * scale


def build_operands(params, H, W):
    """Precompute all constant operands for the fused kernel (numpy, once)."""
    stages = params["stages"]
    n_st = len(stages)
    Cin, Cout = np.asarray(stages[0]["w"]).shape
    Wp = W + 2                                  # padded width (1-col halo each side)
    Hp = H + 4                                  # 2 extra pad rows top/bottom keep tap slices in-bounds
    Lpf = Hp * Wp                               # padded, flattened spatial length
    Lout = H * Wp                               # output rows in padded-column layout
    Smax2 = max(st["size"] ** 2 for st in stages)
    Ctot = n_st * Cout + Cin
    Cpad = ((Cout + 127) // 128) * 128          # lane-dense output store

    # flat padded index of interior spatial position (h, w): row h+2, col w+1
    idx = ((np.arange(H)[:, None] + 2) * Wp + 1 + np.arange(W)[None, :]).reshape(-1)

    P2_all = np.zeros((n_st, Smax2, Lpf), np.float32)
    U2_all = np.zeros((n_st, Lpf, Smax2), np.float32)
    W1_all = np.zeros((n_st, Cin, Cout), np.float32)
    Sh_all = np.zeros((n_st, 1, Cout), np.float32)
    for si, st in enumerate(stages):
        s = st["size"]
        s2 = s * s
        P2 = np.kron(adaptive_pool_matrix(s, H), adaptive_pool_matrix(s, W))   # (s2, H*W)
        U2 = np.kron(bilinear_up_matrix(H, s), bilinear_up_matrix(W, s))       # (H*W, s2)
        P2_all[si][:s2, idx] = P2           # pool reads only interior positions
        U2_all[si][idx, :s2] = U2           # upsample writes interior; pad rows stay zero
        scale, shift = bn_fold_np(st["gamma"], st["beta"], st["mean"], st["var"])
        W1_all[si] = np.asarray(st["w"], np.float32) * scale[None, :]          # fold BN scale
        Sh_all[si, 0] = shift

    bt = params["bottleneck"]
    w3 = np.asarray(bt["w"], np.float32)                                       # (3,3,Ctot,Cout) HWIO
    scale, shift = bn_fold_np(bt["gamma"], bt["beta"], bt["mean"], bt["var"])
    W3_all = np.zeros((9, Ctot, Cpad), np.float32)
    for kh in range(3):
        for kw in range(3):
            W3_all[kh * 3 + kw, :, :Cout] = w3[kh, kw] * scale[None, :]        # fold BN scale
    Bsh = np.zeros((1, Cpad), np.float32)
    Bsh[0, :Cout] = shift

    arrays = tuple(jnp.asarray(a) for a in (P2_all, U2_all, W1_all, Sh_all, W3_all, Bsh))
    dims = dict(n_st=n_st, Cin=int(Cin), Cout=int(Cout), Ctot=Ctot, Cpad=Cpad,
                Lpf=Lpf, Lout=Lout, Wp=Wp)
    return arrays, dims


# --------------------------------- fused Pallas kernel ---------------------------------

def _psp_fused_kernel(x_ref, p2_ref, u2_ref, w1_ref, sh_ref, w3_ref, bsh_ref,
                      o_ref, cat_ref, *, n_stages, Cin, Cout, Wp, Lout):
    """One batch element: stages + concat (in VMEM) + 3x3 conv + BN + ReLU."""
    xpf = x_ref[0]                                           # (Lpf, Cin), padded + flattened

    # identity branch of the concat (last Cin channels); pads already zero in xpf
    cat_ref[:, n_stages * Cout:n_stages * Cout + Cin] = xpf

    # pyramid stages: adaptive-avg-pool -> 1x1 conv (BN scale folded) + shift
    #                 -> bilinear upsample scattered straight into the padded layout
    for si in range(n_stages):
        pooled = jnp.dot(p2_ref[si], xpf, preferred_element_type=jnp.float32)        # (Smax2, Cin)
        y = jnp.dot(pooled, w1_ref[si], preferred_element_type=jnp.float32) + sh_ref[si]
        cat_ref[:, si * Cout:(si + 1) * Cout] = jnp.dot(
            u2_ref[si], y, preferred_element_type=jnp.float32)                       # (Lpf, Cout)

    # bottleneck 3x3 conv (BN scale folded into w3): 9 contiguous shifted-slice matmuls
    acc = None
    for kh in range(3):
        for kw in range(3):
            off = (kh + 1) * Wp + (kw - 1)
            term = jnp.dot(cat_ref[off:off + Lout, :], w3_ref[kh * 3 + kw],
                           preferred_element_type=jnp.float32)                       # (Lout, Cpad)
            acc = term if acc is None else acc + term

    o_ref[0] = jnp.maximum(acc + bsh_ref[...], 0.0)          # BN shift + ReLU (f32 epilogue)


# ------------------------------ PSPModule forward (wrapper) ------------------------------

def psp_module_forward(feats_nchw, params):
    x = jnp.transpose(feats_nchw, (0, 2, 3, 1)).astype(jnp.float32)     # NCHW -> NHWC
    N, H, W, Cin = x.shape
    (P2_all, U2_all, W1_all, Sh_all, W3_all, Bsh), d = build_operands(params, H, W)
    assert Cin == d["Cin"]
    Wp, Lpf, Lout, Cpad, Cout = d["Wp"], d["Lpf"], d["Lout"], d["Cpad"], d["Cout"]

    # x with spatial zero-pad (2 rows top/bot, 1 col each side), flattened row-major.
    # Only Cin channels — tiny; the big concat tensor never touches HBM.
    x_pf = jnp.pad(x, ((0, 0), (2, 2), (1, 1), (0, 0))).reshape(N, Lpf, Cin)

    kern = functools.partial(_psp_fused_kernel, n_stages=d["n_st"],
                             Cin=Cin, Cout=Cout, Wp=Wp, Lout=Lout)

    out_flat = pl.pallas_call(
        kern,
        out_shape=jax.ShapeDtypeStruct((N, Lout, Cpad), jnp.float32),
        grid_spec=pltpu.PrefetchScalarGridSpec(
            num_scalar_prefetch=0,
            grid=(N,),
            in_specs=[
                pl.BlockSpec((1, Lpf, Cin), lambda n: (n, 0, 0)),
                pl.BlockSpec(P2_all.shape, lambda n: (0, 0, 0)),
                pl.BlockSpec(U2_all.shape, lambda n: (0, 0, 0)),
                pl.BlockSpec(W1_all.shape, lambda n: (0, 0, 0)),
                pl.BlockSpec(Sh_all.shape, lambda n: (0, 0, 0)),
                pl.BlockSpec(W3_all.shape, lambda n: (0, 0, 0)),
                pl.BlockSpec(Bsh.shape, lambda n: (0, 0)),
            ],
            out_specs=pl.BlockSpec((1, Lout, Cpad), lambda n: (n, 0, 0)),
            scratch_shapes=[pltpu.VMEM((Lpf, d["Ctot"]), jnp.float32)],
        ),
        compiler_params=pltpu.CompilerParams(dimension_semantics=("parallel",)),
    )(x_pf, P2_all, U2_all, W1_all, Sh_all, W3_all, Bsh)

    # drop pad columns / padded channels, back to NCHW
    out = out_flat.reshape(N, H, Wp, Cpad)[:, :, 1:W + 1, :Cout]
    # Dropout2d(0.1): identity in eval mode.
    return jnp.transpose(out, (0, 3, 1, 2))


# --------------------------- pure-JAX reference for validation ---------------------------

def psp_reference(feats_nchw, params):
    x = jnp.transpose(feats_nchw, (0, 2, 3, 1)).astype(jnp.float32)
    N, H, W, Cin = x.shape
    priors = []
    for st in params["stages"]:
        s = st["size"]
        ph = adaptive_pool_matrix(s, H)
        pw = adaptive_pool_matrix(s, W)
        uh = bilinear_up_matrix(H, s)
        uw = bilinear_up_matrix(W, s)
        pooled = jnp.einsum("sh,nhwc->nswc", ph, x)
        pooled = jnp.einsum("tw,nswc->nstc", pw, pooled)
        y = jnp.einsum("nstc,cd->nstd", pooled, st["w"])
        scale, shift = bn_fold_np(st["gamma"], st["beta"], st["mean"], st["var"])
        y = y * scale + shift
        up = jnp.einsum("hs,nstd->nhtd", uh, y)
        up = jnp.einsum("wt,nhtd->nhwd", uw, up)
        priors.append(up)
    priors.append(x)
    cat = jnp.concatenate(priors, axis=-1)
    bt = params["bottleneck"]
    out = lax.conv_general_dilated(cat, bt["w"], (1, 1), "SAME",
                                   dimension_numbers=("NHWC", "HWIO", "NHWC"))
    scale, shift = bn_fold_np(bt["gamma"], bt["beta"], bt["mean"], bt["var"])
    out = jnp.maximum(out * scale + shift, 0.0)
    return jnp.transpose(out, (0, 3, 1, 2))


# ------------------------------ deterministic parameter init ------------------------------

def init_params(key, features, out_features, sizes):
    stages = []
    for s in sizes:
        k1, k2, k3, key = jax.random.split(key, 4)
        stages.append(dict(
            size=s,
            w=0.1 * jax.random.normal(k1, (features, out_features), jnp.float32),
            gamma=1.0 + 0.1 * jax.random.normal(k2, (out_features,), jnp.float32),
            beta=0.1 * jax.random.normal(k3, (out_features,), jnp.float32),
            mean=jnp.zeros((out_features,), jnp.float32),
            var=jnp.ones((out_features,), jnp.float32),
        ))
    ctot = features + len(sizes) * out_features
    k1, k2, k3, key = jax.random.split(key, 4)
    bottleneck = dict(
        w=0.05 * jax.random.normal(k1, (3, 3, ctot, out_features), jnp.float32),
        gamma=1.0 + 0.1 * jax.random.normal(k2, (out_features,), jnp.float32),
        beta=0.1 * jax.random.normal(k3, (out_features,), jnp.float32),
        mean=jnp.zeros((out_features,), jnp.float32),
        var=jnp.ones((out_features,), jnp.float32),
    )
    return dict(stages=stages, bottleneck=bottleneck)


# ----------------------------------------- main -----------------------------------------

if __name__ == "__main__":
    key = jax.random.PRNGKey(0)
    kx, kp = jax.random.split(key)

    N, features, H, W = 2, 8, 12, 12      # small shapes; H,W divisible by all pool sizes
    out_features = 16
    sizes = (1, 2, 3, 6)

    feats = jax.random.normal(kx, (N, features, H, W), jnp.float32)   # NCHW like PyTorch
    params = init_params(kp, features, out_features, sizes)

    out = psp_module_forward(feats, params)
    out = jax.block_until_ready(out)
    assert out.shape == (N, out_features, H, W), out.shape

    ref = jax.block_until_ready(psp_reference(feats, params))
    np.testing.assert_allclose(np.asarray(out), np.asarray(ref), rtol=2e-3, atol=2e-3)

    print("KERNEL_OK")
</pallas_src>

<mosaic_0001>
module attributes {stable_mosaic.version = 11 : i64} {
  func.func @_psp_fused_kernel(%arg0: i32, %arg1: memref<1x224x8xf32, #tpu.memory_space<vmem>>, %arg2: memref<4x36x224xf32, #tpu.memory_space<vmem>>, %arg3: memref<4x224x36xf32, #tpu.memory_space<vmem>>, %arg4: memref<4x8x16xf32, #tpu.memory_space<vmem>>, %arg5: memref<4x1x16xf32, #tpu.memory_space<vmem>>, %arg6: memref<9x72x128xf32, #tpu.memory_space<vmem>>, %arg7: memref<1x128xf32, #tpu.memory_space<vmem>>, %arg8: memref<1x168x128xf32, #tpu.memory_space<vmem>>, %arg9: memref<224x72xf32, #tpu.memory_space<vmem>>) attributes {dimension_semantics = [#tpu.dimension_semantics<parallel>], iteration_bounds = array<i64: 2>, scalar_prefetch = 0 : i64, scratch_operands = 1 : i64, tpu.core_type = #tpu.core_type<tc>, window_params = [{transform_indices = @transform_0, window_bounds = array<i64: 1, 224, 8>}, {pipeline_mode = #tpu.pipeline_mode<synchronous>, transform_indices = @transform_1, window_bounds = array<i64: 4, 36, 224>}, {pipeline_mode = #tpu.pipeline_mode<synchronous>, transform_indices = @transform_2, window_bounds = array<i64: 4, 224, 36>}, {pipeline_mode = #tpu.pipeline_mode<synchronous>, transform_indices = @transform_3, window_bounds = array<i64: 4, 8, 16>}, {pipeline_mode = #tpu.pipeline_mode<synchronous>, transform_indices = @transform_4, window_bounds = array<i64: 4, 1, 16>}, {pipeline_mode = #tpu.pipeline_mode<synchronous>, transform_indices = @transform_5, window_bounds = array<i64: 9, 72, 128>}, {pipeline_mode = #tpu.pipeline_mode<synchronous>, transform_indices = @transform_6, window_bounds = array<i64: 1, 128>}, {transform_indices = @transform_7, window_bounds = array<i64: 1, 168, 128>}]} {
    %c0 = arith.constant 0 : index
    %c0_0 = arith.constant 0 : index
    %c0_1 = arith.constant 0 : index
    %0 = vector.load %arg1[%c0, %c0_0, %c0_1] : memref<1x224x8xf32, #tpu.memory_space<vmem>>, vector<1x224x8xf32>
    %1 = vector.shape_cast %0 : vector<1x224x8xf32> to vector<224x8xf32>
    %c0_2 = arith.constant 0 : index
    %c64 = arith.constant 64 : index
    %2 = vector.load %arg9[%c0_2, %c64] : memref<224x72xf32, #tpu.memory_space<vmem>>, vector<224x8xf32>
    tpu.vector_store %arg9[%c0_2, %c64], %1 {strides = array<i32>} : memref<224x72xf32, #tpu.memory_space<vmem>>, vector<224x8xf32>,
    %c0_3 = arith.constant 0 : index
    %c0_4 = arith.constant 0 : index
    %c0_5 = arith.constant 0 : index
    %3 = vector.load %arg2[%c0_3, %c0_4, %c0_5] : memref<4x36x224xf32, #tpu.memory_space<vmem>>, vector<1x36x224xf32>
    %4 = vector.shape_cast %3 : vector<1x36x224xf32> to vector<36x224xf32>
    %cst = arith.constant dense<0.000000e+00> : vector<36x8xf32>
    %5 = tpu.matmul %4, %1, %cst {dimension_numbers = #tpu.dot_dimension_numbers<[1], [0], [0], [1], [0, 0, 1, 1], [], []>} : vector<36x224xf32>, vector<224x8xf32>, vector<36x8xf32> -> vector<36x8xf32>
    %c0_6 = arith.constant 0 : index
    %c0_7 = arith.constant 0 : index
    %c0_8 = arith.constant 0 : index
    %6 = vector.load %arg4[%c0_6, %c0_7, %c0_8] : memref<4x8x16xf32, #tpu.memory_space<vmem>>, vector<1x8x16xf32>
    %7 = vector.shape_cast %6 : vector<1x8x16xf32> to vector<8x16xf32>
    %cst_9 = arith.constant dense<0.000000e+00> : vector<36x16xf32>
    %8 = tpu.matmul %5, %7, %cst_9 {dimension_numbers = #tpu.dot_dimension_numbers<[1], [0], [0], [1], [0, 0, 1, 1], [], []>} : vector<36x8xf32>, vector<8x16xf32>, vector<36x16xf32> -> vector<36x16xf32>
    %c0_10 = arith.constant 0 : index
    %c0_11 = arith.constant 0 : index
    %c0_12 = arith.constant 0 : index
    %9 = vector.load %arg5[%c0_10, %c0_11, %c0_12] : memref<4x1x16xf32, #tpu.memory_space<vmem>>, vector<1x1x16xf32>
    %10 = vector.shape_cast %9 : vector<1x1x16xf32> to vector<1x16xf32>
    %11 = vector.broadcast %10 : vector<1x16xf32> to vector<36x16xf32>
    %12 = arith.addf %8, %11 : vector<36x16xf32>
    %c0_13 = arith.constant 0 : index
    %c0_14 = arith.constant 0 : index
    %c0_15 = arith.constant 0 : index
    %13 = vector.load %arg3[%c0_13, %c0_14, %c0_15] : memref<4x224x36xf32, #tpu.memory_space<vmem>>, vector<1x224x36xf32>
    %14 = vector.shape_cast %13 : vector<1x224x36xf32> to vector<224x36xf32>
    %cst_16 = arith.constant dense<0.000000e+00> : vector<224x16xf32>
    %15 = tpu.matmul %14, %12, %cst_16 {dimension_numbers = #tpu.dot_dimension_numbers<[1], [0], [0], [1], [0, 0, 1, 1], [], []>} : vector<224x36xf32>, vector<36x16xf32>, vector<224x16xf32> -> vector<224x16xf32>
    %c0_17 = arith.constant 0 : index
    %c0_18 = arith.constant 0 : index
    %16 = vector.load %arg9[%c0_17, %c0_18] : memref<224x72xf32, #tpu.memory_space<vmem>>, vector<224x16xf32>
    tpu.vector_store %arg9[%c0_17, %c0_18], %15 {strides = array<i32>} : memref<224x72xf32, #tpu.memory_space<vmem>>, vector<224x16xf32>,
    %c1 = arith.constant 1 : index
    %c0_19 = arith.constant 0 : index
    %c0_20 = arith.constant 0 : index
    %17 = vector.load %arg2[%c1, %c0_19, %c0_20] : memref<4x36x224xf32, #tpu.memory_space<vmem>>, vector<1x36x224xf32>
    %18 = vector.shape_cast %17 : vector<1x36x224xf32> to vector<36x224xf32>
    %cst_21 = arith.constant dense<0.000000e+00> : vector<36x8xf32>
    %19 = tpu.matmul %18, %1, %cst_21 {dimension_numbers = #tpu.dot_dimension_numbers<[1], [0], [0], [1], [0, 0, 1, 1], [], []>} : vector<36x224xf32>, vector<224x8xf32>, vector<36x8xf32> -> vector<36x8xf32>
    %c1_22 = arith.constant 1 : index
    %c0_23 = arith.constant 0 : index
    %c0_24 = arith.constant 0 : index
    %20 = vector.load %arg4[%c1_22, %c0_23, %c0_24] : memref<4x8x16xf32, #tpu.memory_space<vmem>>, vector<1x8x16xf32>
    %21 = vector.shape_cast %20 : vector<1x8x16xf32> to vector<8x16xf32>
    %cst_25 = arith.constant dense<0.000000e+00> : vector<36x16xf32>
    %22 = tpu.matmul %19, %21, %cst_25 {dimension_numbers = #tpu.dot_dimension_numbers<[1], [0], [0], [1], [0, 0, 1, 1], [], []>} : vector<36x8xf32>, vector<8x16xf32>, vector<36x16xf32> -> vector<36x16xf32>
    %c1_26 = arith.constant 1 : index
    %c0_27 = arith.constant 0 : index
    %c0_28 = arith.constant 0 : index
    %23 = vector.load %arg5[%c1_26, %c0_27, %c0_28] : memref<4x1x16xf32, #tpu.memory_space<vmem>>, vector<1x1x16xf32>
    %24 = vector.shape_cast %23 : vector<1x1x16xf32> to vector<1x16xf32>
    %25 = vector.broadcast %24 : vector<1x16xf32> to vector<36x16xf32>
    %26 = arith.addf %22, %25 : vector<36x16xf32>
    %c1_29 = arith.constant 1 : index
    %c0_30 = arith.constant 0 : index
    %c0_31 = arith.constant 0 : index
    %27 = vector.load %arg3[%c1_29, %c0_30, %c0_31] : memref<4x224x36xf32, #tpu.memory_space<vmem>>, vector<1x224x36xf32>
    %28 = vector.shape_cast %27 : vector<1x224x36xf32> to vector<224x36xf32>
    %cst_32 = arith.constant dense<0.000000e+00> : vector<224x16xf32>
    %29 = tpu.matmul %28, %26, %cst_32 {dimension_numbers = #tpu.dot_dimension_numbers<[1], [0], [0], [1], [0, 0, 1, 1], [], []>} : vector<224x36xf32>, vector<36x16xf32>, vector<224x16xf32> -> vector<224x16xf32>
    %c0_33 = arith.constant 0 : index
    %c16 = arith.constant 16 : index
    %30 = vector.load %arg9[%c0_33, %c16] : memref<224x72xf32, #tpu.memory_space<vmem>>, vector<224x16xf32>
    tpu.vector_store %arg9[%c0_33, %c16], %29 {strides = array<i32>} : memref<224x72xf32, #tpu.memory_space<vmem>>, vector<224x16xf32>,
    %c2 = arith.constant 2 : index
    %c0_34 = arith.constant 0 : index
    %c0_35 = arith.constant 0 : index
    %31 = vector.load %arg2[%c2, %c0_34, %c0_35] : memref<4x36x224xf32, #tpu.memory_space<vmem>>, vector<1x36x224xf32>
    %32 = vector.shape_cast %31 : vector<1x36x224xf32> to vector<36x224xf32>
    %cst_36 = arith.constant dense<0.000000e+00> : vector<36x8xf32>
    %33 = tpu.matmul %32, %1, %cst_36 {dimension_numbers = #tpu.dot_dimension_numbers<[1], [0], [0], [1], [0, 0, 1, 1], [], []>} : vector<36x224xf32>, vector<224x8xf32>, vector<36x8xf32> -> vector<36x8xf32>
    %c2_37 = arith.constant 2 : index
    %c0_38 = arith.constant 0 : index
    %c0_39 = arith.constant 0 : index
    %34 = vector.load %arg4[%c2_37, %c0_38, %c0_39] : memref<4x8x16xf32, #tpu.memory_space<vmem>>, vector<1x8x16xf32>
    %35 = vector.shape_cast %34 : vector<1x8x16xf32> to vector<8x16xf32>
    %cst_40 = arith.constant dense<0.000000e+00> : vector<36x16xf32>
    %36 = tpu.matmul %33, %35, %cst_40 {dimension_numbers = #tpu.dot_dimension_numbers<[1], [0], [0], [1], [0, 0, 1, 1], [], []>} : vector<36x8xf32>, vector<8x16xf32>, vector<36x16xf32> -> vector<36x16xf32>
    %c2_41 = arith.constant 2 : index
    %c0_42 = arith.constant 0 : index
    %c0_43 = arith.constant 0 : index
    %37 = vector.load %arg5[%c2_41, %c0_42, %c0_43] : memref<4x1x16xf32, #tpu.memory_space<vmem>>, vector<1x1x16xf32>
    %38 = vector.shape_cast %37 : vector<1x1x16xf32> to vector<1x16xf32>
    %39 = vector.broadcast %38 : vector<1x16xf32> to vector<36x16xf32>
    %40 = arith.addf %36, %39 : vector<36x16xf32>
    %c2_44 = arith.constant 2 : index
    %c0_45 = arith.constant 0 : index
    %c0_46 = arith.constant 0 : index
    %41 = vector.load %arg3[%c2_44, %c0_45, %c0_46] : memref<4x224x36xf32, #tpu.memory_space<vmem>>, vector<1x224x36xf32>
    %42 = vector.shape_cast %41 : vector<1x224x36xf32> to vector<224x36xf32>
    %cst_47 = arith.constant dense<0.000000e+00> : vector<224x16xf32>
    %43 = tpu.matmul %42, %40, %cst_47 {dimension_numbers = #tpu.dot_dimension_numbers<[1], [0], [0], [1], [0, 0, 1, 1], [], []>} : vector<224x36xf32>, vector<36x16xf32>, vector<224x16xf32> -> vector<224x16xf32>
    %c0_48 = arith.constant 0 : index
    %c32 = arith.constant 32 : index
    %44 = vector.load %arg9[%c0_48, %c32] : memref<224x72xf32, #tpu.memory_space<vmem>>, vector<224x16xf32>
    tpu.vector_store %arg9[%c0_48, %c32], %43 {strides = array<i32>} : memref<224x72xf32, #tpu.memory_space<vmem>>, vector<224x16xf32>,
    %c3 = arith.constant 3 : index
    %c0_49 = arith.constant 0 : index
    %c0_50 = arith.constant 0 : index
    %45 = vector.load %arg2[%c3, %c0_49, %c0_50] : memref<4x36x224xf32, #tpu.memory_space<vmem>>, vector<1x36x224xf32>
    %46 = vector.shape_cast %45 : vector<1x36x224xf32> to vector<36x224xf32>
    %cst_51 = arith.constant dense<0.000000e+00> : vector<36x8xf32>
    %47 = tpu.matmul %46, %1, %cst_51 {dimension_numbers = #tpu.dot_dimension_numbers<[1], [0], [0], [1], [0, 0, 1, 1], [], []>} : vector<36x224xf32>, vector<224x8xf32>, vector<36x8xf32> -> vector<36x8xf32>
    %c3_52 = arith.constant 3 : index
    %c0_53 = arith.constant 0 : index
    %c0_54 = arith.constant 0 : index
    %48 = vector.load %arg4[%c3_52, %c0_53, %c0_54] : memref<4x8x16xf32, #tpu.memory_space<vmem>>, vector<1x8x16xf32>
    %49 = vector.shape_cast %48 : vector<1x8x16xf32> to vector<8x16xf32>
    %cst_55 = arith.constant dense<0.000000e+00> : vector<36x16xf32>
    %50 = tpu.matmul %47, %49, %cst_55 {dimension_numbers = #tpu.dot_dimension_numbers<[1], [0], [0], [1], [0, 0, 1, 1], [], []>} : vector<36x8xf32>, vector<8x16xf32>, vector<36x16xf32> -> vector<36x16xf32>
    %c3_56 = arith.constant 3 : index
    %c0_57 = arith.constant 0 : index
    %c0_58 = arith.constant 0 : index
    %51 = vector.load %arg5[%c3_56, %c0_57, %c0_58] : memref<4x1x16xf32, #tpu.memory_space<vmem>>, vector<1x1x16xf32>
    %52 = vector.shape_cast %51 : vector<1x1x16xf32> to vector<1x16xf32>
    %53 = vector.broadcast %52 : vector<1x16xf32> to vector<36x16xf32>
    %54 = arith.addf %50, %53 : vector<36x16xf32>
    %c3_59 = arith.constant 3 : index
    %c0_60 = arith.constant 0 : index
    %c0_61 = arith.constant 0 : index
    %55 = vector.load %arg3[%c3_59, %c0_60, %c0_61] : memref<4x224x36xf32, #tpu.memory_space<vmem>>, vector<1x224x36xf32>
    %56 = vector.shape_cast %55 : vector<1x224x36xf32> to vector<224x36xf32>
    %cst_62 = arith.constant dense<0.000000e+00> : vector<224x16xf32>
    %57 = tpu.matmul %56, %54, %cst_62 {dimension_numbers = #tpu.dot_dimension_numbers<[1], [0], [0], [1], [0, 0, 1, 1], [], []>} : vector<224x36xf32>, vector<36x16xf32>, vector<224x16xf32> -> vector<224x16xf32>
    %c0_63 = arith.constant 0 : index
    %c48 = arith.constant 48 : index
    %58 = vector.load %arg9[%c0_63, %c48] : memref<224x72xf32, #tpu.memory_space<vmem>>, vector<224x16xf32>
    tpu.vector_store %arg9[%c0_63, %c48], %57 {strides = array<i32>} : memref<224x72xf32, #tpu.memory_space<vmem>>, vector<224x16xf32>,
    %c13 = arith.constant 13 : index
    %c0_64 = arith.constant 0 : index
    %59 = vector.load %arg9[%c13, %c0_64] : memref<224x72xf32, #tpu.memory_space<vmem>>, vector<168x72xf32>
    %c0_65 = arith.constant 0 : index
    %c0_66 = arith.constant 0 : index
    %c0_67 = arith.constant 0 : index
    %60 = vector.load %arg6[%c0_65, %c0_66, %c0_67] : memref<9x72x128xf32, #tpu.memory_space<vmem>>, vector<1x72x128xf32>
    %61 = vector.shape_cast %60 : vector<1x72x128xf32> to vector<72x128xf32>
    %cst_68 = arith.constant dense<0.000000e+00> : vector<168x128xf32>
    %62 = tpu.matmul %59, %61, %cst_68 {dimension_numbers = #tpu.dot_dimension_numbers<[1], [0], [0], [1], [0, 0, 1, 1], [], []>} : vector<168x72xf32>, vector<72x128xf32>, vector<168x128xf32> -> vector<168x128xf32>
    %c14 = arith.constant 14 : index
    %c0_69 = arith.constant 0 : index
    %63 = vector.load %arg9[%c14, %c0_69] : memref<224x72xf32, #tpu.memory_space<vmem>>, vector<168x72xf32>
    %c1_70 = arith.constant 1 : index
    %c0_71 = arith.constant 0 : index
    %c0_72 = arith.constant 0 : index
    %64 = vector.load %arg6[%c1_70, %c0_71, %c0_72] : memref<9x72x128xf32, #tpu.memory_space<vmem>>, vector<1x72x128xf32>
    %65 = vector.shape_cast %64 : vector<1x72x128xf32> to vector<72x128xf32>
    %cst_73 = arith.constant dense<0.000000e+00> : vector<168x128xf32>
    %66 = tpu.matmul %63, %65, %cst_73 {dimension_numbers = #tpu.dot_dimension_numbers<[1], [0], [0], [1], [0, 0, 1, 1], [], []>} : vector<168x72xf32>, vector<72x128xf32>, vector<168x128xf32> -> vector<168x128xf32>
    %67 = arith.addf %62, %66 : vector<168x128xf32>
    %c15 = arith.constant 15 : index
    %c0_74 = arith.constant 0 : index
    %68 = vector.load %arg9[%c15, %c0_74] : memref<224x72xf32, #tpu.memory_space<vmem>>, vector<168x72xf32>
    %c2_75 = arith.constant 2 : index
    %c0_76 = arith.constant 0 : index
    %c0_77 = arith.constant 0 : index
    %69 = vector.load %arg6[%c2_75, %c0_76, %c0_77] : memref<9x72x128xf32, #tpu.memory_space<vmem>>, vector<1x72x128xf32>
    %70 = vector.shape_cast %69 : vector<1x72x128xf32> to vector<72x128xf32>
    %cst_78 = arith.constant dense<0.000000e+00> : vector<168x128xf32>
    %71 = tpu.matmul %68, %70, %cst_78 {dimension_numbers = #tpu.dot_dimension_numbers<[1], [0], [0], [1], [0, 0, 1, 1], [], []>} : vector<168x72xf32>, vector<72x128xf32>, vector<168x128xf32> -> vector<168x128xf32>
    %72 = arith.addf %67, %71 : vector<168x128xf32>
    %c27 = arith.constant 27 : index
    %c0_79 = arith.constant 0 : index
    %73 = vector.load %arg9[%c27, %c0_79] : memref<224x72xf32, #tpu.memory_space<vmem>>, vector<168x72xf32>
    %c3_80 = arith.constant 3 : index
    %c0_81 = arith.constant 0 : index
    %c0_82 = arith.constant 0 : index
    %74 = vector.load %arg6[%c3_80, %c0_81, %c0_82] : memref<9x72x128xf32, #tpu.memory_space<vmem>>, vector<1x72x128xf32>
    %75 = vector.shape_cast %74 : vector<1x72x128xf32> to vector<72x128xf32>
    %cst_83 = arith.constant dense<0.000000e+00> : vector<168x128xf32>
    %76 = tpu.matmul %73, %75, %cst_83 {dimension_numbers = #tpu.dot_dimension_numbers<[1], [0], [0], [1], [0, 0, 1, 1], [], []>} : vector<168x72xf32>, vector<72x128xf32>, vector<168x128xf32> -> vector<168x128xf32>
    %77 = arith.addf %72, %76 : vector<168x128xf32>
    %c28 = arith.constant 28 : index
    %c0_84 = arith.constant 0 : index
    %78 = vector.load %arg9[%c28, %c0_84] : memref<224x72xf32, #tpu.memory_space<vmem>>, vector<168x72xf32>
    %c4 = arith.constant 4 : index
    %c0_85 = arith.constant 0 : index
    %c0_86 = arith.constant 0 : index
    %79 = vector.load %arg6[%c4, %c0_85, %c0_86] : memref<9x72x128xf32, #tpu.memory_space<vmem>>, vector<1x72x128xf32>
    %80 = vector.shape_cast %79 : vector<1x72x128xf32> to vector<72x128xf32>
    %cst_87 = arith.constant dense<0.000000e+00> : vector<168x128xf32>
    %81 = tpu.matmul %78, %80, %cst_87 {dimension_numbers = #tpu.dot_dimension_numbers<[1], [0], [0], [1], [0, 0, 1, 1], [], []>} : vector<168x72xf32>, vector<72x128xf32>, vector<168x128xf32> -> vector<168x128xf32>
    %82 = arith.addf %77, %81 : vector<168x128xf32>
    %c29 = arith.constant 29 : index
    %c0_88 = arith.constant 0 : index
    %83 = vector.load %arg9[%c29, %c0_88] : memref<224x72xf32, #tpu.memory_space<vmem>>, vector<168x72xf32>
    %c5 = arith.constant 5 : index
    %c0_89 = arith.constant 0 : index
    %c0_90 = arith.constant 0 : index
    %84 = vector.load %arg6[%c5, %c0_89, %c0_90] : memref<9x72x128xf32, #tpu.memory_space<vmem>>, vector<1x72x128xf32>
    %85 = vector.shape_cast %84 : vector<1x72x128xf32> to vector<72x128xf32>
    %cst_91 = arith.constant dense<0.000000e+00> : vector<168x128xf32>
    %86 = tpu.matmul %83, %85, %cst_91 {dimension_numbers = #tpu.dot_dimension_numbers<[1], [0], [0], [1], [0, 0, 1, 1], [], []>} : vector<168x72xf32>, vector<72x128xf32>, vector<168x128xf32> -> vector<168x128xf32>
    %87 = arith.addf %82, %86 : vector<168x128xf32>
    %c41 = arith.constant 41 : index
    %c0_92 = arith.constant 0 : index
    %88 = vector.load %arg9[%c41, %c0_92] : memref<224x72xf32, #tpu.memory_space<vmem>>, vector<168x72xf32>
    %c6 = arith.constant 6 : index
    %c0_93 = arith.constant 0 : index
    %c0_94 = arith.constant 0 : index
    %89 = vector.load %arg6[%c6, %c0_93, %c0_94] : memref<9x72x128xf32, #tpu.memory_space<vmem>>, vector<1x72x128xf32>
    %90 = vector.shape_cast %89 : vector<1x72x128xf32> to vector<72x128xf32>
    %cst_95 = arith.constant dense<0.000000e+00> : vector<168x128xf32>
    %91 = tpu.matmul %88, %90, %cst_95 {dimension_numbers = #tpu.dot_dimension_numbers<[1], [0], [0], [1], [0, 0, 1, 1], [], []>} : vector<168x72xf32>, vector<72x128xf32>, vector<168x128xf32> -> vector<168x128xf32>
    %92 = arith.addf %87, %91 : vector<168x128xf32>
    %c42 = arith.constant 42 : index
    %c0_96 = arith.constant 0 : index
    %93 = vector.load %arg9[%c42, %c0_96] : memref<224x72xf32, #tpu.memory_space<vmem>>, vector<168x72xf32>
    %c7 = arith.constant 7 : index
    %c0_97 = arith.constant 0 : index
    %c0_98 = arith.constant 0 : index
    %94 = vector.load %arg6[%c7, %c0_97, %c0_98] : memref<9x72x128xf32, #tpu.memory_space<vmem>>, vector<1x72x128xf32>
    %95 = vector.shape_cast %94 : vector<1x72x128xf32> to vector<72x128xf32>
    %cst_99 = arith.constant dense<0.000000e+00> : vector<168x128xf32>
    %96 = tpu.matmul %93, %95, %cst_99 {dimension_numbers = #tpu.dot_dimension_numbers<[1], [0], [0], [1], [0, 0, 1, 1], [], []>} : vector<168x72xf32>, vector<72x128xf32>, vector<168x128xf32> -> vector<168x128xf32>
    %97 = arith.addf %92, %96 : vector<168x128xf32>
    %c43 = arith.constant 43 : index
    %c0_100 = arith.constant 0 : index
    %98 = vector.load %arg9[%c43, %c0_100] : memref<224x72xf32, #tpu.memory_space<vmem>>, vector<168x72xf32>
    %c8 = arith.constant 8 : index
    %c0_101 = arith.constant 0 : index
    %c0_102 = arith.constant 0 : index
    %99 = vector.load %arg6[%c8, %c0_101, %c0_102] : memref<9x72x128xf32, #tpu.memory_space<vmem>>, vector<1x72x128xf32>
    %100 = vector.shape_cast %99 : vector<1x72x128xf32> to vector<72x128xf32>
    %cst_103 = arith.constant dense<0.000000e+00> : vector<168x128xf32>
    %101 = tpu.matmul %98, %100, %cst_103 {dimension_numbers = #tpu.dot_dimension_numbers<[1], [0], [0], [1], [0, 0, 1, 1], [], []>} : vector<168x72xf32>, vector<72x128xf32>, vector<168x128xf32> -> vector<168x128xf32>
    %102 = arith.addf %97, %101 : vector<168x128xf32>
    %c0_104 = arith.constant 0 : index
    %c0_105 = arith.constant 0 : index
    %103 = vector.load %arg7[%c0_104, %c0_105] : memref<1x128xf32, #tpu.memory_space<vmem>>, vector<1x128xf32>
    %104 = vector.broadcast %103 : vector<1x128xf32> to vector<168x128xf32>
    %105 = arith.addf %102, %104 : vector<168x128xf32>
    %cst_106 = arith.constant 0.000000e+00 : f32
    %106 = vector.broadcast %cst_106 : f32 to vector<168x128xf32>
    %107 = arith.maximumf %105, %106 : vector<168x128xf32>
    %c0_107 = arith.constant 0 : index
    %c0_108 = arith.constant 0 : index
    %c0_109 = arith.constant 0 : index
    %108 = vector.load %arg8[%c0_107, %c0_108, %c0_109] : memref<1x168x128xf32, #tpu.memory_space<vmem>>, vector<1x168x128xf32>
    %109 = vector.shape_cast %108 : vector<1x168x128xf32> to vector<168x128xf32>
    %110 = vector.shape_cast %107 : vector<168x128xf32> to vector<1x168x128xf32>
    tpu.vector_store %arg8[%c0_107, %c0_108, %c0_109], %110 {strides = array<i32>} : memref<1x168x128xf32, #tpu.memory_space<vmem>>, vector<1x168x128xf32>,
    return
  }
  func.func @transform_0(%arg0: i32) -> (i32, i32, i32) {
    %c0_i32 = arith.constant 0 : i32
    %c0_i32_0 = arith.constant 0 : i32
    %c0_i32_1 = arith.constant 0 : i32
    return %arg0, %c0_i32, %c0_i32_0 : i32, i32, i32
  }
  func.func @transform_1(%arg0: i32) -> (i32, i32, i32) {
    %c0_i32 = arith.constant 0 : i32
    %c0_i32_0 = arith.constant 0 : i32
    %c0_i32_1 = arith.constant 0 : i32
    %c0_i32_2 = arith.constant 0 : i32
    return %c0_i32, %c0_i32_0, %c0_i32_1 : i32, i32, i32
  }
  func.func @transform_2(%arg0: i32) -> (i32, i32, i32) {
    %c0_i32 = arith.constant 0 : i32
    %c0_i32_0 = arith.constant 0 : i32
    %c0_i32_1 = arith.constant 0 : i32
    %c0_i32_2 = arith.constant 0 : i32
    return %c0_i32, %c0_i32_0, %c0_i32_1 : i32, i32, i32
  }
  func.func @transform_3(%arg0: i32) -> (i32, i32, i32) {
    %c0_i32 = arith.constant 0 : i32
    %c0_i32_0 = arith.constant 0 : i32
    %c0_i32_1 = arith.constant 0 : i32
    %c0_i32_2 = arith.constant 0 : i32
    return %c0_i32, %c0_i32_0, %c0_i32_1 : i32, i32, i32
  }
  func.func @transform_4(%arg0: i32) -> (i32, i32, i32) {
    %c0_i32 = arith.constant 0 : i32
    %c0_i32_0 = arith.constant 0 : i32
    %c0_i32_1 = arith.constant 0 : i32
    %c0_i32_2 = arith.constant 0 : i32
    return %c0_i32, %c0_i32_0, %c0_i32_1 : i32, i32, i32
  }
  func.func @transform_5(%arg0: i32) -> (i32, i32, i32) {
    %c0_i32 = arith.constant 0 : i32
    %c0_i32_0 = arith.constant 0 : i32
    %c0_i32_1 = arith.constant 0 : i32
    %c0_i32_2 = arith.constant 0 : i32
    return %c0_i32, %c0_i32_0, %c0_i32_1 : i32, i32, i32
  }
  func.func @transform_6(%arg0: i32) -> (i32, i32) {
    %c0_i32 = arith.constant 0 : i32
    %c0_i32_0 = arith.constant 0 : i32
    %c0_i32_1 = arith.constant 0 : i32
    return %c0_i32, %c0_i32_0 : i32, i32
  }
  func.func @transform_7(%arg0: i32) -> (i32, i32, i32) {
    %c0_i32 = arith.constant 0 : i32
    %c0_i32_0 = arith.constant 0 : i32
    %c0_i32_1 = arith.constant 0 : i32
    return %arg0, %c0_i32, %c0_i32_0 : i32, i32, i32
  }
}

</mosaic_0001>

<llo_original>
// kernel: tpu_custom_call.1
$region0: #{tpu_custom_call.1}
  #allocation0 [shape = 'u32[]', space=smem, size = 0x4, offset = 0x4, fixed_abs, tag = 'smem constant byte address 0x4 - core index']
  #allocation1 [shape = 'u32[144,128]{1,0:T(1,128)}', space=vmem, size = 0x12000, scoped, tag = 'internal scratch']
  #allocation2 [shape = 'f32[224,72]{1,0:T(8,128)}', space=vmem, size = 0x1c000, scoped, tag = 'scratch operand']
  %s0 = inlined_call_operand.vmem [shape: f32[2,224,8], index: 0, kind: input, shape index: {}]
  %s1 = inlined_call_operand.vmem [shape: f32[4,36,224], index: 1, kind: input, shape index: {}]
  %s2 = inlined_call_operand.vmem [shape: f32[4,224,36], index: 2, kind: input, shape index: {}]
  %s3 = inlined_call_operand.vmem [shape: f32[4,8,16], index: 3, kind: input, shape index: {}]
  %s4 = inlined_call_operand.vmem [shape: f32[4,1,16], index: 4, kind: input, shape index: {}]
  %s5 = inlined_call_operand.vmem [shape: f32[9,72,128], index: 5, kind: input, shape index: {}]
  %s6 = inlined_call_operand.vmem [shape: f32[1,128], index: 6, kind: input, shape index: {}]
  %s7 = inlined_call_operand.hbm [shape: f32[2,168,128], index: 7, kind: output, shape index: {}]
  %s8 = sld [smem:[#allocation0]]
  $region61: #{tpu_custom_call.1} parent=0
    _
  %s10 = ssub.s32 1, %s8
  %s11 = scalar_select 0, %s10, %s8
  $region1: #{tpu_custom_call.1} parent=0
    #allocation3 [shape = 'u8[172032]{0}', space=vmem, size = 0x2a000, scoped, tag = 'output window, operand 0']
    #allocation4 [shape = 's32[2]{0}', space=sflag, size = 0x8, scoped, tag = 'scoped memory for tpu_custom_call.1']
    %12 = vsyncpa [#allocation4], 0
    %s13 = scalar_lea.sflag [#allocation4], 1
    %14 = vsyncpa %s13, 0
    loop: start=0, step=1, limit=4
    $region2: #{tpu_custom_call.1} parent=1 // loop_pre_header
      _
    $region3: #{tpu_custom_call.1} parent=1 // loop_header
      %s16 = sphi 0, %s20
      %p17 = scmp.ge.s32.totalorder %s16, 4
      %s26 = sphi 0, %s28
      %s29 = sphi 0, %s26
      %s30 = sphi 0, %s29
      %s46 = sphi 0, %s30
      %s50 = sphi 0, %s50
      %s52 = sphi 0, %s50
      %s53 = sphi 0, %s52
      %s67 = sphi 0, %s53
      %s71 = sphi 0, %s71
      %s73 = sphi 0, %s71
      %s74 = sphi 0, %s73
      %s88 = sphi 0, %s74
      %s92 = sphi 0, %s92
      %s94 = sphi 0, %s92
      %s95 = sphi 0, %s94
      %s109 = sphi 0, %s95
      %s113 = sphi 0, %s113
      %s115 = sphi 0, %s113
      %s116 = sphi 0, %s115
      %s130 = sphi 0, %s116
      %s134 = sphi 0, %s134
      %s136 = sphi 0, %s134
      %s137 = sphi 0, %s136
      %s151 = sphi 0, %s137
      %s155 = sphi 0, %s155
      %s157 = sphi 0, %s155
      %s158 = sphi 0, %s157
      %s172 = sphi 0, %s158
      %s178 = sphi 0, %s180
      %s181 = sphi 0, %s178
      %s182 = sphi 0, %s181
      %s198 = sphi 0, %s182
    $region4: #{tpu_custom_call.1} parent=1 // loop_header_branch
      %19 = sbr.rel (%p17) target = $region8
    $region5: #{tpu_custom_call.1} parent=1 // loop_body
      %s21 = ssub.s32 %s16, 1
      %s22 = ssub.s32 %s16, 2
      %s23 = sadd.s32 %s16, 1
      %s24 = ssub.s32 %s16, %s23
      %p25 = scmp.eq.s32.totalorder %s24, 0
      %s27 = sadd.s32 %s26, 1
      %s28 = scalar_select %p25, %s26, %s27
      %p31 = pneg %p25
      %p32 = scmp.eq.s32.totalorder %s16, 1
      %p33 = por %p31, %p32
      %p34 = scmp.ne.s32.totalorder %s26, %s29
      %p35 = scmp.eq.s32.totalorder %s16, 0
      %p36 = por %p34, %p35
      %p37 = scmp.ne.s32.totalorder %s26, %s29
      %p38 = scmp.eq.s32.totalorder %s21, 1
      %p39 = por %p37, %p38
      %p40 = scmp.ne.s32.totalorder %s29, %s30
      %p41 = scmp.eq.s32.totalorder %s21, 0
      %p42 = por %p40, %p41
      %p43 = scmp.ne.s32.totalorder %s29, %s30
      %p44 = scmp.eq.s32.totalorder %s22, 1
      %p45 = por %p43, %p44
      %p47 = scmp.ne.s32.totalorder %s30, %s46
      %p48 = scmp.eq.s32.totalorder %s22, 0
      %p49 = por %p47, %p48
      %s51 = sadd.s32 %s50, 1
      %p54 = scmp.eq.s32.totalorder %s16, 1
      %p55 = scmp.ne.s32.totalorder %s50, %s52
      %p56 = scmp.eq.s32.totalorder %s16, 0
      %p57 = por %p55, %p56
      %p58 = scmp.ne.s32.totalorder %s50, %s52
      %p59 = scmp.eq.s32.totalorder %s21, 1
      %p60 = por %p58, %p59
      %p61 = scmp.ne.s32.totalorder %s52, %s53
      %p62 = scmp.eq.s32.totalorder %s21, 0
      %p63 = por %p61, %p62
      %p64 = scmp.ne.s32.totalorder %s52, %s53
      %p65 = scmp.eq.s32.totalorder %s22, 1
      %p66 = por %p64, %p65
      %p68 = scmp.ne.s32.totalorder %s53, %s67
      %p69 = scmp.eq.s32.totalorder %s22, 0
      %p70 = por %p68, %p69
      %s72 = sadd.s32 %s71, 1
      %p75 = scmp.eq.s32.totalorder %s16, 1
      %p76 = scmp.ne.s32.totalorder %s71, %s73
      %p77 = scmp.eq.s32.totalorder %s16, 0
      %p78 = por %p76, %p77
      %p79 = scmp.ne.s32.totalorder %s71, %s73
      %p80 = scmp.eq.s32.totalorder %s21, 1
      %p81 = por %p79, %p80
      %p82 = scmp.ne.s32.totalorder %s73, %s74
      %p83 = scmp.eq.s32.totalorder %s21, 0
      %p84 = por %p82, %p83
      %p85 = scmp.ne.s32.totalorder %s73, %s74
      %p86 = scmp.eq.s32.totalorder %s22, 1
      %p87 = por %p85, %p86
      %p89 = scmp.ne.s32.totalorder %s74, %s88
      %p90 = scmp.eq.s32.totalorder %s22, 0
      %p91 = por %p89, %p90
      %s93 = sadd.s32 %s92, 1
      %p96 = scmp.eq.s32.totalorder %s16, 1
      %p97 = scmp.ne.s32.totalorder %s92, %s94
      %p98 = scmp.eq.s32.totalorder %s16, 0
      %p99 = por %p97, %p98
      %p100 = scmp.ne.s32.totalorder %s92, %s94
      %p101 = scmp.eq.s32.totalorder %s21, 1
      %p102 = por %p100, %p101
      %p103 = scmp.ne.s32.totalorder %s94, %s95
      %p104 = scmp.eq.s32.totalorder %s21, 0
      %p105 = por %p103, %p104
      %p106 = scmp.ne.s32.totalorder %s94, %s95
      %p107 = scmp.eq.s32.totalorder %s22, 1
      %p108 = por %p106, %p107
      %p110 = scmp.ne.s32.totalorder %s95, %s109
      %p111 = scmp.eq.s32.totalorder %s22, 0
      %p112 = por %p110, %p111
      %s114 = sadd.s32 %s113, 1
      %p117 = scmp.eq.s32.totalorder %s16, 1
      %p118 = scmp.ne.s32.totalorder %s113, %s115
      %p119 = scmp.eq.s32.totalorder %s16, 0
      %p120 = por %p118, %p119
      %p121 = scmp.ne.s32.totalorder %s113, %s115
      %p122 = scmp.eq.s32.totalorder %s21, 1
      %p123 = por %p121, %p122
      %p124 = scmp.ne.s32.totalorder %s115, %s116
      %p125 = scmp.eq.s32.totalorder %s21, 0
      %p126 = por %p124, %p125
      %p127 = scmp.ne.s32.totalorder %s115, %s116
      %p128 = scmp.eq.s32.totalorder %s22, 1
      %p129 = por %p127, %p128
      %p131 = scmp.ne.s32.totalorder %s116, %s130
      %p132 = scmp.eq.s32.totalorder %s22, 0
      %p133 = por %p131, %p132
      %s135 = sadd.s32 %s134, 1
      %p138 = scmp.eq.s32.totalorder %s16, 1
      %p139 = scmp.ne.s32.totalorder %s134, %s136
      %p140 = scmp.eq.s32.totalorder %s16, 0
      %p141 = por %p139, %p140
      %p142 = scmp.ne.s32.totalorder %s134, %s136
      %p143 = scmp.eq.s32.totalorder %s21, 1
      %p144 = por %p142, %p143
      %p145 = scmp.ne.s32.totalorder %s136, %s137
      %p146 = scmp.eq.s32.totalorder %s21, 0
      %p147 = por %p145, %p146
      %p148 = scmp.ne.s32.totalorder %s136, %s137
      %p149 = scmp.eq.s32.totalorder %s22, 1
      %p150 = por %p148, %p149
      %p152 = scmp.ne.s32.totalorder %s137, %s151
      %p153 = scmp.eq.s32.totalorder %s22, 0
      %p154 = por %p152, %p153
      %s156 = sadd.s32 %s155, 1
      %p159 = scmp.eq.s32.totalorder %s16, 1
      %p160 = scmp.ne.s32.totalorder %s155, %s157
      %p161 = scmp.eq.s32.totalorder %s16, 0
      %p162 = por %p160, %p161
      %p163 = scmp.ne.s32.totalorder %s155, %s157
      %p164 = scmp.eq.s32.totalorder %s21, 1
      %p165 = por %p163, %p164
      %p166 = scmp.ne.s32.totalorder %s157, %s158
      %p167 = scmp.eq.s32.totalorder %s21, 0
      %p168 = por %p166, %p167
      %p169 = scmp.ne.s32.totalorder %s157, %s158
      %p170 = scmp.eq.s32.totalorder %s22, 1
      %p171 = por %p169, %p170
      %p173 = scmp.ne.s32.totalorder %s158, %s172
      %p174 = scmp.eq.s32.totalorder %s22, 0
      %p175 = por %p173, %p174
      %s176 = ssub.s32 %s16, %s23
      %p177 = scmp.eq.s32.totalorder %s176, 0
      %s179 = sadd.s32 %s178, 1
      %s180 = scalar_select %p177, %s178, %s179
      %p183 = pneg %p177
      %p184 = scmp.eq.s32.totalorder %s16, 1
      %p185 = por %p183, %p184
      %p186 = scmp.ne.s32.totalorder %s178, %s181
      %p187 = scmp.eq.s32.totalorder %s16, 0
      %p188 = por %p186, %p187
      %p189 = scmp.ne.s32.totalorder %s178, %s181
      %p190 = scmp.eq.s32.totalorder %s21, 1
      %p191 = por %p189, %p190
      %p192 = scmp.ne.s32.totalorder %s181, %s182
      %p193 = scmp.eq.s32.totalorder %s21, 0
      %p194 = por %p192, %p193
      %p195 = scmp.ne.s32.totalorder %s181, %s182
      %p196 = scmp.eq.s32.totalorder %s22, 1
      %p197 = por %p195, %p196
      %p199 = scmp.ne.s32.totalorder %s182, %s198
      %p200 = scmp.eq.s32.totalorder %s22, 0
      %p201 = por %p199, %p200
      %p202 = scmp.le.s32.totalorder 1, %s16
      %p203 = scmp.lt.s32.totalorder %s16, 3
      %p204 = pnand %p202, %p203
      %p205 = pneg %p204
      // Predicated region
      $region9: #{tpu_custom_call.1} parent=5 // pred_check
        _
      $region10: #{tpu_custom_call.1} parent=5 // pred_check_branch
        %207 = sbr.rel (%p204) target = $region12
      $region11: #{tpu_custom_call.1} parent=5 // pred_region
        %s208 = ssub.s32 %s16, 1
        // Predicated region
        $region13: #{tpu_custom_call.1} parent=11 // pred_check
          %p209 = pneg %p63
        $region14: #{tpu_custom_call.1} parent=11 // pred_check_branch
          %211 = sbr.rel (%p209) target = $region16
        $region15: #{tpu_custom_call.1} parent=11 // pred_region
          _
        $region16: #{tpu_custom_call.1} parent=11 // pred_fallthru
          _
        // Predicated region
        $region17: #{tpu_custom_call.1} parent=11 // pred_check
          %p212 = pneg %p84
        $region18: #{tpu_custom_call.1} parent=11 // pred_check_branch
          %214 = sbr.rel (%p212) target = $region20
        $region19: #{tpu_custom_call.1} parent=11 // pred_region
          _
        $region20: #{tpu_custom_call.1} parent=11 // pred_fallthru
          _
        // Predicated region
        $region21: #{tpu_custom_call.1} parent=11 // pred_check
          %p215 = pneg %p105
        $region22: #{tpu_custom_call.1} parent=11 // pred_check_branch
          %217 = sbr.rel (%p215) target = $region24
        $region23: #{tpu_custom_call.1} parent=11 // pred_region
          _
        $region24: #{tpu_custom_call.1} parent=11 // pred_fallthru
          _
        // Predicated region
        $region25: #{tpu_custom_call.1} parent=11 // pred_check
          %p218 = pneg %p126
        $region26: #{tpu_custom_call.1} parent=11 // pred_check_branch
          %220 = sbr.rel (%p218) target = $region28
        $region27: #{tpu_custom_call.1} parent=11 // pred_region
          _
        $region28: #{tpu_custom_call.1} parent=11 // pred_fallthru
          _
        // Predicated region
        $region29: #{tpu_custom_call.1} parent=11 // pred_check
          %p221 = pneg %p147
        $region30: #{tpu_custom_call.1} parent=11 // pred_check_branch
          %223 = sbr.rel (%p221) target = $region32
        $region31: #{tpu_custom_call.1} parent=11 // pred_region
          _
        $region32: #{tpu_custom_call.1} parent=11 // pred_fallthru
          _
        // Predicated region
        $region33: #{tpu_custom_call.1} parent=11 // pred_check
          %p224 = pneg %p168
        $region34: #{tpu_custom_call.1} parent=11 // pred_check_branch
          %226 = sbr.rel (%p224) target = $region36
        $region35: #{tpu_custom_call.1} parent=11 // pred_region
          _
        $region36: #{tpu_custom_call.1} parent=11 // pred_fallthru
          _
      $region12: #{tpu_custom_call.1} parent=5 // pred_fallthru
        _
      %p227 = scmp.lt.s32.totalorder %s16, 2
      // Predicated region
      $region37: #{tpu_custom_call.1} parent=5 // pred_check
        %p228 = pneg %p227
      $region38: #{tpu_custom_call.1} parent=5 // pred_check_branch
        %230 = sbr.rel (%p228) target = $region40
      $region39: #{tpu_custom_call.1} parent=5 // pred_region
        // Predicated region
        $region41: #{tpu_custom_call.1} parent=39 // pred_check
          %p231 = pneg %p36
        $region42: #{tpu_custom_call.1} parent=39 // pred_check_branch
          %233 = sbr.rel (%p231) target = $region44
        $region43: #{tpu_custom_call.1} parent=39 // pred_region
          %p234 = scmp.lt.s32.totalorder %s16, 1
          %s235 = scalar_select %p234, %s16, 1
          %s236 = smul.addr %s235, 28
          %s237 = smul.addr %s236, 8
          %s238 = scalar_lea.vmem %s0, %s237
        $region44: #{tpu_custom_call.1} parent=39 // pred_fallthru
          _
      $region40: #{tpu_custom_call.1} parent=5 // pred_fallthru
        _
      %p239 = scmp.le.s32.totalorder 1, %s16
      %p240 = scmp.lt.s32.totalorder %s16, 3
      %p241 = pnand %p239, %p240
      %p242 = pneg %p241
      // Predicated region
      $region45: #{tpu_custom_call.1} parent=5 // pred_check
        _
      $region46: #{tpu_custom_call.1} parent=5 // pred_check_branch
        %244 = sbr.rel (%p241) target = $region48
      $region47: #{tpu_custom_call.1} parent=5 // pred_region
        %s245 = ssub.s32 %s16, 1
        %p246 = scmp.lt.s32.totalorder %s21, 1
        %s247 = scalar_select %p246, %s21, 1
        %s248 = smul.addr %s247, 28
        %s249 = smul.addr %s248, 8
        %s250 = scalar_lea.vmem %s0, %s249
        %p251 = pneg %p42
        %p252 = pneg %p39
        %p253 = pneg %p63
        %p254 = pneg %p60
        %p255 = pneg %p84
        %p256 = pneg %p81
        %p257 = pneg %p105
        %p258 = pneg %p102
        %p259 = pneg %p126
        %p260 = pneg %p123
        %p261 = pneg %p147
        %p262 = pneg %p144
        %p263 = pneg %p168
        %p264 = pneg %p165
        %p265 = pneg %p194
        %p266 = pneg %p191
        %s267 = sand.u32 %s181, 1
        %s268 = scalar_lea.sflag [#allocation4], %s267
        %s269 = sand.u32 %s181, 1
        %s270 = smul.addr %s269, 168
        %s271 = scalar_lea.vmem [#allocation3], %s270
        %p272 = scmp.lt.s32.totalorder %s21, 1
        %s273 = scalar_select %p272, %s21, 1
        %s274 = smul.addr %s273, 28
        %s275 = smul.addr %s274, 8
        %s276 = scalar_lea.vmem %s0, %s275
        %v277 = vld [vmem:[%s276] sm:$0xff]
        %v278 = vld [vmem:[%s276 + $0x8] sm:$0xff]
        %v279 = vld [vmem:[%s276 + $0x10] sm:$0xff]
        %v280 = vld [vmem:[%s276 + $0x18] sm:$0xff]
        %v281 = vld [vmem:[%s276 + $0x20] sm:$0xff]
        %v282 = vld [vmem:[%s276 + $0x28] sm:$0xff]
        %v283 = vld [vmem:[%s276 + $0x30] sm:$0xff]
        %v284 = vld [vmem:[%s276 + $0x38] sm:$0xff]
        %v285 = vld [vmem:[%s276 + $0x40] sm:$0xff]
        %v286 = vld [vmem:[%s276 + $0x48] sm:$0xff]
        %v287 = vld [vmem:[%s276 + $0x50] sm:$0xff]
        %v288 = vld [vmem:[%s276 + $0x58] sm:$0xff]
        %v289 = vld [vmem:[%s276 + $0x60] sm:$0xff]
        %v290 = vld [vmem:[%s276 + $0x68] sm:$0xff]
        %v291 = vld [vmem:[%s276 + $0x70] sm:$0xff]
        %v292 = vld [vmem:[%s276 + $0x78] sm:$0xff]
        %v293 = vld [vmem:[%s276 + $0x80] sm:$0xff]
        %v294 = vld [vmem:[%s276 + $0x88] sm:$0xff]
        %v295 = vld [vmem:[%s276 + $0x90] sm:$0xff]
        %v296 = vld [vmem:[%s276 + $0x98] sm:$0xff]
        %v297 = vld [vmem:[%s276 + $0xa0] sm:$0xff]
        %v298 = vld [vmem:[%s276 + $0xa8] sm:$0xff]
        %v299 = vld [vmem:[%s276 + $0xb0] sm:$0xff]
        %v300 = vld [vmem:[%s276 + $0xb8] sm:$0xff]
        %v301 = vld [vmem:[%s276 + $0xc0] sm:$0xff]
        %v302 = vld [vmem:[%s276 + $0xc8] sm:$0xff]
        %v303 = vld [vmem:[%s276 + $0xd0] sm:$0xff]
        %v304 = vld [vmem:[%s276 + $0xd8] sm:$0xff]
        %333 = vrot.lane.b32.xlu0 %v277, 64
        %v334 = vpop.permute.xlu0 %333
        %335 = vrot.lane.b32.xlu0 %v278, 64
        %v336 = vpop.permute.xlu0 %335
        %337 = vrot.lane.b32.xlu0 %v279, 64
        %v338 = vpop.permute.xlu0 %337
        %339 = vrot.lane.b32.xlu0 %v280, 64
        %v340 = vpop.permute.xlu0 %339
        %341 = vrot.lane.b32.xlu0 %v281, 64
        %v342 = vpop.permute.xlu0 %341
        %343 = vrot.lane.b32.xlu0 %v282, 64
        %v344 = vpop.permute.xlu0 %343
        %345 = vrot.lane.b32.xlu0 %v283, 64
        %v346 = vpop.permute.xlu0 %345
        %347 = vrot.lane.b32.xlu0 %v284, 64
        %v348 = vpop.permute.xlu0 %347
        %349 = vrot.lane.b32.xlu0 %v285, 64
        %v350 = vpop.permute.xlu0 %349
        %351 = vrot.lane.b32.xlu0 %v286, 64
        %v352 = vpop.permute.xlu0 %351
        %353 = vrot.lane.b32.xlu0 %v287, 64
        %v354 = vpop.permute.xlu0 %353
        %355 = vrot.lane.b32.xlu0 %v288, 64
        %v356 = vpop.permute.xlu0 %355
        %357 = vrot.lane.b32.xlu0 %v289, 64
        %v358 = vpop.permute.xlu0 %357
        %359 = vrot.lane.b32.xlu0 %v290, 64
        %v360 = vpop.permute.xlu0 %359
        %361 = vrot.lane.b32.xlu0 %v291, 64
        %v362 = vpop.permute.xlu0 %361
        %363 = vrot.lane.b32.xlu0 %v292, 64
        %v364 = vpop.permute.xlu0 %363
        %365 = vrot.lane.b32.xlu0 %v293, 64
        %v366 = vpop.permute.xlu0 %365
        %367 = vrot.lane.b32.xlu0 %v294, 64
        %v368 = vpop.permute.xlu0 %367
        %369 = vrot.lane.b32.xlu0 %v295, 64
        %v370 = vpop.permute.xlu0 %369
        %371 = vrot.lane.b32.xlu0 %v296, 64
        %v372 = vpop.permute.xlu0 %371
        %373 = vrot.lane.b32.xlu0 %v297, 64
        %v374 = vpop.permute.xlu0 %373
        %375 = vrot.lane.b32.xlu0 %v298, 64
        %v376 = vpop.permute.xlu0 %375
        %377 = vrot.lane.b32.xlu0 %v299, 64
        %v378 = vpop.permute.xlu0 %377
        %379 = vrot.lane.b32.xlu0 %v300, 64
        %v380 = vpop.permute.xlu0 %379
        %381 = vrot.lane.b32.xlu0 %v301, 64
        %v382 = vpop.permute.xlu0 %381
        %383 = vrot.lane.b32.xlu0 %v302, 64
        %v384 = vpop.permute.xlu0 %383
        %385 = vrot.lane.b32.xlu0 %v303, 64
        %v386 = vpop.permute.xlu0 %385
        %387 = vrot.lane.b32.xlu0 %v304, 64
        %v388 = vpop.permute.xlu0 %387
        %vm417 = vcmask 589312
        %418 = vst.msk [vmem:[#allocation2] sm:$0xff] %vm417, %v334
        %419 = vst.msk [vmem:[#allocation2 + $0x8] sm:$0xff] %vm417, %v336
        %420 = vst.msk [vmem:[#allocation2 + $0x10] sm:$0xff] %vm417, %v338
        %421 = vst.msk [vmem:[#allocation2 + $0x18] sm:$0xff] %vm417, %v340
        %422 = vst.msk [vmem:[#allocation2 + $0x20] sm:$0xff] %vm417, %v342
        %423 = vst.msk [vmem:[#allocation2 + $0x28] sm:$0xff] %vm417, %v344
        %424 = vst.msk [vmem:[#allocation2 + $0x30] sm:$0xff] %vm417, %v346
        %425 = vst.msk [vmem:[#allocation2 + $0x38] sm:$0xff] %vm417, %v348
        %426 = vst.msk [vmem:[#allocation2 + $0x40] sm:$0xff] %vm417, %v350
        %427 = vst.msk [vmem:[#allocation2 + $0x48] sm:$0xff] %vm417, %v352
        %428 = vst.msk [vmem:[#allocation2 + $0x50] sm:$0xff] %vm417, %v354
        %429 = vst.msk [vmem:[#allocation2 + $0x58] sm:$0xff] %vm417, %v356
        %430 = vst.msk [vmem:[#allocation2 + $0x60] sm:$0xff] %vm417, %v358
        %431 = vst.msk [vmem:[#allocation2 + $0x68] sm:$0xff] %vm417, %v360
        %432 = vst.msk [vmem:[#allocation2 + $0x70] sm:$0xff] %vm417, %v362
        %433 = vst.msk [vmem:[#allocation2 + $0x78] sm:$0xff] %vm417, %v364
        %434 = vst.msk [vmem:[#allocation2 + $0x80] sm:$0xff] %vm417, %v366
        %435 = vst.msk [vmem:[#allocation2 + $0x88] sm:$0xff] %vm417, %v368
        %436 = vst.msk [vmem:[#allocation2 + $0x90] sm:$0xff] %vm417, %v370
        %437 = vst.msk [vmem:[#allocation2 + $0x98] sm:$0xff] %vm417, %v372
        %438 = vst.msk [vmem:[#allocation2 + $0xa0] sm:$0xff] %vm417, %v374
        %439 = vst.msk [vmem:[#allocation2 + $0xa8] sm:$0xff] %vm417, %v376
        %440 = vst.msk [vmem:[#allocation2 + $0xb0] sm:$0xff] %vm417, %v378
        %441 = vst.msk [vmem:[#allocation2 + $0xb8] sm:$0xff] %vm417, %v380
        %442 = vst.msk [vmem:[#allocation2 + $0xc0] sm:$0xff] %vm417, %v382
        %443 = vst.msk [vmem:[#allocation2 + $0xc8] sm:$0xff] %vm417, %v384
        %444 = vst.msk [vmem:[#allocation2 + $0xd0] sm:$0xff] %vm417, %v386
        %445 = vst.msk [vmem:[#allocation2 + $0xd8] sm:$0xff] %vm417, %v388
        %v446 = vld [vmem:[%s1] sm:$0xff]
        %v447 = vld [vmem:[%s1 + $0x8] sm:$0xff]
        %v448 = vld [vmem:[%s1 + $0x10] sm:$0xff]
        %v449 = vld [vmem:[%s1 + $0x18] sm:$0xff]
        %v450 = vld [vmem:[%s1 + $0x20] sm:$0xff]
        %v451 = vld [vmem:[%s1 + $0x28] sm:$0xff]
        %v452 = vld [vmem:[%s1 + $0x30] sm:$0xff]
        %v453 = vld [vmem:[%s1 + $0x38] sm:$0xff]
        %v454 = vld [vmem:[%s1 + $0x40] sm:$0xf]
        %v455 = vld [vmem:[%s1 + $0x48] sm:$0xf]
        %vm456 = vcmask 785408
        %v458 = vsel %vm456, %v447, 0
        %v461 = vsel %vm456, %v449, 0
        %v464 = vsel %vm456, %v451, 0
        %v467 = vsel %vm456, %v453, 0
        %v470 = vsel %vm456, %v455, 0
        %472 = vmatprep.subr.mxu0 0.0
        %473 = vmatpush1.msra.mxu0 %v277
        %474 = vmatprep.subr.mxu0 0.0
        %475 = vmatpush1.msra.mxu0 %v278
        %476 = vmatprep.subr.mxu0 0.0
        %477 = vmatpush1.msra.mxu0 %v279
        %478 = vmatprep.subr.mxu0 0.0
        %479 = vmatpush1.msra.mxu0 %v280
        %480 = vmatprep.subr.mxu0 0.0
        %481 = vmatpush1.msra.mxu0 %v281
        %482 = vmatprep.subr.mxu0 0.0
        %483 = vmatpush1.msra.mxu0 %v282
        %484 = vmatprep.subr.mxu0 0.0
        %485 = vmatpush1.msra.mxu0 %v283
        %486 = vmatprep.subr.mxu0 0.0
        %487 = vmatpush1.msra.mxu0 %v284
        %488 = vmatprep.subr.mxu0 0.0
        %489 = vmatpush1.msra.mxu0 %v285
        %490 = vmatprep.subr.mxu0 0.0
        %491 = vmatpush1.msra.mxu0 %v286
        %492 = vmatprep.subr.mxu0 0.0
        %493 = vmatpush1.msra.mxu0 %v287
        %494 = vmatprep.subr.mxu0 0.0
        %495 = vmatpush1.msra.mxu0 %v288
        %496 = vmatprep.subr.mxu0 0.0
        %497 = vmatpush1.msra.mxu0 %v289
        %498 = vmatprep.subr.mxu0 0.0
        %499 = vmatpush1.msra.mxu0 %v290
        %500 = vmatprep.subr.mxu0 0.0
        %501 = vmatpush1.msra.mxu0 %v291
        %502 = vmatprep.subr.mxu0 0.0
        %503 = vmatpush1.msra.mxu0 %v292
        %504 = vmatprep.subr.mxu0 0.0
        %505 = vmatpush1.msra.mxu0 %v293
        %506 = vmatprep.subr.mxu0 0.0
        %507 = vmatpush1.msra.mxu0 %v294
        %508 = vmatprep.subr.mxu0 0.0
        %509 = vmatpush1.msra.mxu0 %v295
        %510 = vmatprep.subr.mxu0 0.0
        %511 = vmatpush1.msra.mxu0 %v296
        %512 = vmatprep.subr.mxu0 0.0
        %513 = vmatpush1.msra.mxu0 %v297
        %514 = vmatprep.subr.mxu0 0.0
        %515 = vmatpush1.msra.mxu0 %v298
        %516 = vmatprep.subr.mxu0 0.0
        %517 = vmatpush1.msra.mxu0 %v299
        %518 = vmatprep.subr.mxu0 0.0
        %519 = vmatpush1.msra.mxu0 %v300
        %520 = vmatprep.subr.mxu0 0.0
        %521 = vmatpush1.msra.mxu0 %v301
        %522 = vmatprep.subr.mxu0 0.0
        %523 = vmatpush1.msra.mxu0 %v302
        %524 = vmatprep.subr.mxu0 0.0
        %525 = vmatpush1.msra.mxu0 %v303
        %526 = vmatprep.subr.mxu0 0.0
        %527 = vmatpush1.msra.mxu0 %v304
        %528 = vmatprep.subr.mxu0 0.0
        %529 = vmatpush1.msra.mxu0 0.0
        %530 = vmatprep.subr.mxu0 0.0
        %531 = vmatpush1.msra.mxu0 0.0
        %532 = vmatprep.subr.mxu0 0.0
        %533 = vmatpush1.msra.mxu0 0.0
        %534 = vmatprep.subr.mxu0 0.0
        %535 = vmatpush1.msra.mxu0 0.0
        %536 = vmatprep.mubr.f32.mxu0 %v458
        %537 = vmatmul.mubr.f32.gmra.mrb[0].mxu0 %v446
        %v538 = vpop.f32.mrb[0].mxu0
        %v539 = vadd.f32 0.0, %v538
        %v540 = vpop.f32.mrb[0].mxu0
        %541 = vmatprep.mubr.f32.mxu0 %v461
        %542 = vmatmul.mubr.f32.gmra.mrb[0].mxu0 %v448
        %v543 = vpop.f32.mrb[0].mxu0
        %v544 = vadd.f32 0.0, %v543
        %v545 = vpop.f32.mrb[0].mxu0
        %546 = vmatprep.mubr.f32.mxu0 %v464
        %547 = vmatmul.mubr.f32.gmra.mrb[0].mxu0 %v450
        %v548 = vpop.f32.mrb[0].mxu0
        %v549 = vadd.f32 0.0, %v548
        %v550 = vpop.f32.mrb[0].mxu0
        %551 = vmatprep.mubr.f32.mxu0 %v467
        %552 = vmatmul.mubr.f32.gmra.mrb[0].mxu0 %v452
        %v553 = vpop.f32.mrb[0].mxu0
        %v554 = vadd.f32 0.0, %v553
        %v555 = vpop.f32.mrb[0].mxu0
        %556 = vmatprep.mubr.f32.mxu0 %v470
        %557 = vmatmul.mubr.f32.gmra.mrb[0].mxu0 %v454
        %v558 = vpop.f32.mrb[0].mxu0
        %v559 = vadd.f32 0.0, %v558
        %v560 = vpop.f32.mrb[0].mxu0
        %561 = vdwg.mxu0
        %v562 = vld [vmem:[%s3] sm:$0xff]
        %v563 = vld [vmem:[%s4] sm:$0x1]
        %v565 = vlaneseq
        %v566 = vshrl.u32 %v565, 7
        %v567 = vsub.s32 0, %v566
        %v568 = vrot.slane %v563, %v567
        %vm570 = vcmask 64512
        %v572 = vsel %vm570, %v539, 0
        %v575 = vsel %vm570, %v544, 0
        %v578 = vsel %vm570, %v549, 0
        %v581 = vsel %vm570, %v554, 0
        %v584 = vsel %vm570, %v559, 0
        %586 = vmatprep.subr.mxu0 0.0
        %587 = vmatpush1.msra.mxu0 %v562
        %588 = vmatprep.subr.mxu0 0.0
        %589 = vmatpush1.msra.mxu0 0.0
        %590 = vmatprep.subr.mxu0 0.0
        %591 = vmatpush1.msra.mxu0 0.0
        %592 = vmatprep.subr.mxu0 0.0
        %593 = vmatpush1.msra.mxu0 0.0
        %594 = vmatprep.subr.mxu0 0.0
        %595 = vmatpush1.msra.mxu0 0.0
        %596 = vmatprep.subr.mxu0 0.0
        %597 = vmatpush1.msra.mxu0 0.0
        %598 = vmatprep.subr.mxu0 0.0
        %599 = vmatpush1.msra.mxu0 0.0
        %600 = vmatprep.subr.mxu0 0.0
        %601 = vmatpush1.msra.mxu0 0.0
        %602 = vmatprep.subr.mxu0 0.0
        %603 = vmatpush1.msra.mxu0 0.0
        %604 = vmatprep.subr.mxu0 0.0
        %605 = vmatpush1.msra.mxu0 0.0
        %606 = vmatprep.subr.mxu0 0.0
        %607 = vmatpush1.msra.mxu0 0.0
        %608 = vmatprep.subr.mxu0 0.0
        %609 = vmatpush1.msra.mxu0 0.0
        %610 = vmatprep.subr.mxu0 0.0
        %611 = vmatpush1.msra.mxu0 0.0
        %612 = vmatprep.subr.mxu0 0.0
        %613 = vmatpush1.msra.mxu0 0.0
        %614 = vmatprep.subr.mxu0 0.0
        %615 = vmatpush1.msra.mxu0 0.0
        %616 = vmatprep.subr.mxu0 0.0
        %617 = vmatpush1.msra.mxu0 0.0
        %618 = vmatprep.subr.mxu0 0.0
        %619 = vmatpush1.msra.mxu0 0.0
        %620 = vmatprep.subr.mxu0 0.0
        %621 = vmatpush1.msra.mxu0 0.0
        %622 = vmatprep.subr.mxu0 0.0
        %623 = vmatpush1.msra.mxu0 0.0
        %624 = vmatprep.subr.mxu0 0.0
        %625 = vmatpush1.msra.mxu0 0.0
        %626 = vmatprep.subr.mxu0 0.0
        %627 = vmatpush1.msra.mxu0 0.0
        %628 = vmatprep.subr.mxu0 0.0
        %629 = vmatpush1.msra.mxu0 0.0
        %630 = vmatprep.subr.mxu0 0.0
        %631 = vmatpush1.msra.mxu0 0.0
        %632 = vmatprep.subr.mxu0 0.0
        %633 = vmatpush1.msra.mxu0 0.0
        %634 = vmatprep.subr.mxu0 0.0
        %635 = vmatpush1.msra.mxu0 0.0
        %636 = vmatprep.subr.mxu0 0.0
        %637 = vmatpush1.msra.mxu0 0.0
        %638 = vmatprep.subr.mxu0 0.0
        %639 = vmatpush1.msra.mxu0 0.0
        %640 = vmatprep.subr.mxu0 0.0
        %641 = vmatpush1.msra.mxu0 0.0
        %642 = vmatprep.subr.mxu0 0.0
        %643 = vmatpush1.msra.mxu0 0.0
        %644 = vmatprep.subr.mxu0 0.0
        %645 = vmatpush1.msra.mxu0 0.0
        %646 = vmatprep.subr.mxu0 0.0
        %647 = vmatpush1.msra.mxu0 0.0
        %648 = vmatprep.subr.mxu0 0.0
        %649 = vmatpush1.msra.mxu0 0.0
        %650 = vmatprep.mubr.f32.mxu0 0.0
        %651 = vmatmul.mubr.f32.gmra.mrb[0].mxu0 %v572
        %v652 = vpop.f32.mrb[0].mxu0
        %v653 = vadd.f32 %v568, %v652
        %v654 = vpop.f32.mrb[0].mxu0
        %655 = vmatprep.mubr.f32.mxu0 0.0
        %656 = vmatmul.mubr.f32.gmra.mrb[0].mxu0 %v575
        %v657 = vpop.f32.mrb[0].mxu0
        %v658 = vadd.f32 %v568, %v657
        %v659 = vpop.f32.mrb[0].mxu0
        %660 = vmatprep.mubr.f32.mxu0 0.0
        %661 = vmatmul.mubr.f32.gmra.mrb[0].mxu0 %v578
        %v662 = vpop.f32.mrb[0].mxu0
        %v663 = vadd.f32 %v568, %v662
        %v664 = vpop.f32.mrb[0].mxu0
        %665 = vmatprep.mubr.f32.mxu0 0.0
        %666 = vmatmul.mubr.f32.gmra.mrb[0].mxu0 %v581
        %v667 = vpop.f32.mrb[0].mxu0
        %v668 = vadd.f32 %v568, %v667
        %v669 = vpop.f32.mrb[0].mxu0
        %670 = vmatprep.mubr.f32.mxu0 0.0
        %671 = vmatmul.mubr.f32.gmra.mrb[0].mxu0 %v584
        %v672 = vpop.f32.mrb[0].mxu0
        %v673 = vadd.f32 %v568, %v672
        %v674 = vpop.f32.mrb[0].mxu0
        %675 = vdwg.mxu0
        %v676 = vld [vmem:[%s2] sm:$0xff]
        %v677 = vld [vmem:[%s2 + $0x8] sm:$0xff]
        %v678 = vld [vmem:[%s2 + $0x10] sm:$0xff]
        %v679 = vld [vmem:[%s2 + $0x18] sm:$0xff]
        %v680 = vld [vmem:[%s2 + $0x20] sm:$0xff]
        %v681 = vld [vmem:[%s2 + $0x28] sm:$0xff]
        %v682 = vld [vmem:[%s2 + $0x30] sm:$0xff]
        %v683 = vld [vmem:[%s2 + $0x38] sm:$0xff]
        %v684 = vld [vmem:[%s2 + $0x40] sm:$0xff]
        %v685 = vld [vmem:[%s2 + $0x48] sm:$0xff]
        %v686 = vld [vmem:[%s2 + $0x50] sm:$0xff]
        %v687 = vld [vmem:[%s2 + $0x58] sm:$0xff]
        %v688 = vld [vmem:[%s2 + $0x60] sm:$0xff]
        %v689 = vld [vmem:[%s2 + $0x68] sm:$0xff]
        %v690 = vld [vmem:[%s2 + $0x70] sm:$0xff]
        %v691 = vld [vmem:[%s2 + $0x78] sm:$0xff]
        %v692 = vld [vmem:[%s2 + $0x80] sm:$0xff]
        %v693 = vld [vmem:[%s2 + $0x88] sm:$0xff]
        %v694 = vld [vmem:[%s2 + $0x90] sm:$0xff]
        %v695 = vld [vmem:[%s2 + $0x98] sm:$0xff]
        %v696 = vld [vmem:[%s2 + $0xa0] sm:$0xff]
        %v697 = vld [vmem:[%s2 + $0xa8] sm:$0xff]
        %v698 = vld [vmem:[%s2 + $0xb0] sm:$0xff]
        %v699 = vld [vmem:[%s2 + $0xb8] sm:$0xff]
        %v700 = vld [vmem:[%s2 + $0xc0] sm:$0xff]
        %v701 = vld [vmem:[%s2 + $0xc8] sm:$0xff]
        %v702 = vld [vmem:[%s2 + $0xd0] sm:$0xff]
        %v703 = vld [vmem:[%s2 + $0xd8] sm:$0xff]
        %vm704 = vcmask 293888
        %v706 = vsel %vm704, %v676, 0
        %v709 = vsel %vm704, %v677, 0
        %v712 = vsel %vm704, %v678, 0
        %v715 = vsel %vm704, %v679, 0
        %v718 = vsel %vm704, %v680, 0
        %v721 = vsel %vm704, %v681, 0
        %v724 = vsel %vm704, %v682, 0
        %v727 = vsel %vm704, %v683, 0
        %v730 = vsel %vm704, %v684, 0
        %v733 = vsel %vm704, %v685, 0
        %v736 = vsel %vm704, %v686, 0
        %v739 = vsel %vm704, %v687, 0
        %v742 = vsel %vm704, %v688, 0
        %v745 = vsel %vm704, %v689, 0
        %v748 = vsel %vm704, %v690, 0
        %v751 = vsel %vm704, %v691, 0
        %v754 = vsel %vm704, %v692, 0
        %v757 = vsel %vm704, %v693, 0
        %v760 = vsel %vm704, %v694, 0
        %v763 = vsel %vm704, %v695, 0
        %v766 = vsel %vm704, %v696, 0
        %v769 = vsel %vm704, %v697, 0
        %v772 = vsel %vm704, %v698, 0
        %v775 = vsel %vm704, %v699, 0
        %v778 = vsel %vm704, %v700, 0
        %v781 = vsel %vm704, %v701, 0
        %v784 = vsel %vm704, %v702, 0
        %v787 = vsel %vm704, %v703, 0
        %vm789 = vcmask 1043456
        %v791 = vsel %vm789, %v673, 0
        %793 = vmatprep.subr.mxu0 0.0
        %794 = vmatpush1.msra.mxu0 %v653
        %795 = vmatprep.subr.mxu0 0.0
        %796 = vmatpush1.msra.mxu0 %v658
        %797 = vmatprep.subr.mxu0 0.0
        %798 = vmatpush1.msra.mxu0 %v663
        %799 = vmatprep.subr.mxu0 0.0
        %800 = vmatpush1.msra.mxu0 %v668
        %801 = vmatprep.subr.mxu0 0.0
        %802 = vmatpush1.msra.mxu0 %v791
        %803 = vmatprep.subr.mxu0 0.0
        %804 = vmatpush1.msra.mxu0 0.0
        %805 = vmatprep.subr.mxu0 0.0
        %806 = vmatpush1.msra.mxu0 0.0
        %807 = vmatprep.subr.mxu0 0.0
        %808 = vmatpush1.msra.mxu0 0.0
        %809 = vmatprep.subr.mxu0 0.0
        %810 = vmatpush1.msra.mxu0 0.0
        %811 = vmatprep.subr.mxu0 0.0
        %812 = vmatpush1.msra.mxu0 0.0
        %813 = vmatprep.subr.mxu0 0.0
        %814 = vmatpush1.msra.mxu0 0.0
        %815 = vmatprep.subr.mxu0 0.0
        %816 = vmatpush1.msra.mxu0 0.0
        %817 = vmatprep.subr.mxu0 0.0
        %818 = vmatpush1.msra.mxu0 0.0
        %819 = vmatprep.subr.mxu0 0.0
        %820 = vmatpush1.msra.mxu0 0.0
        %821 = vmatprep.subr.mxu0 0.0
        %822 = vmatpush1.msra.mxu0 0.0
        %823 = vmatprep.subr.mxu0 0.0
        %824 = vmatpush1.msra.mxu0 0.0
        %825 = vmatprep.subr.mxu0 0.0
        %826 = vmatpush1.msra.mxu0 0.0
        %827 = vmatprep.subr.mxu0 0.0
        %828 = vmatpush1.msra.mxu0 0.0
        %829 = vmatprep.subr.mxu0 0.0
        %830 = vmatpush1.msra.mxu0 0.0
        %831 = vmatprep.subr.mxu0 0.0
        %832 = vmatpush1.msra.mxu0 0.0
        %833 = vmatprep.subr.mxu0 0.0
        %834 = vmatpush1.msra.mxu0 0.0
        %835 = vmatprep.subr.mxu0 0.0
        %836 = vmatpush1.msra.mxu0 0.0
        %837 = vmatprep.subr.mxu0 0.0
        %838 = vmatpush1.msra.mxu0 0.0
        %839 = vmatprep.subr.mxu0 0.0
        %840 = vmatpush1.msra.mxu0 0.0
        %841 = vmatprep.subr.mxu0 0.0
        %842 = vmatpush1.msra.mxu0 0.0
        %843 = vmatprep.subr.mxu0 0.0
        %844 = vmatpush1.msra.mxu0 0.0
        %845 = vmatprep.subr.mxu0 0.0
        %846 = vmatpush1.msra.mxu0 0.0
        %847 = vmatprep.subr.mxu0 0.0
        %848 = vmatpush1.msra.mxu0 0.0
        %849 = vmatprep.subr.mxu0 0.0
        %850 = vmatpush1.msra.mxu0 0.0
        %851 = vmatprep.subr.mxu0 0.0
        %852 = vmatpush1.msra.mxu0 0.0
        %853 = vmatprep.subr.mxu0 0.0
        %854 = vmatpush1.msra.mxu0 0.0
        %855 = vmatprep.subr.mxu0 0.0
        %856 = vmatpush1.msra.mxu0 0.0
        %857 = vmatprep.mubr.f32.mxu0 0.0
        %858 = vmatmul.mubr.f32.gmra.mrb[0].mxu0 %v706
        %v859 = vpop.f32.mrb[0].mxu0
        %v860 = vadd.f32 0.0, %v859
        %v861 = vpop.f32.mrb[0].mxu0
        %862 = vmatprep.mubr.f32.mxu0 0.0
        %863 = vmatmul.mubr.f32.gmra.mrb[0].mxu0 %v709
        %v864 = vpop.f32.mrb[0].mxu0
        %v865 = vadd.f32 0.0, %v864
        %v866 = vpop.f32.mrb[0].mxu0
        %867 = vmatprep.mubr.f32.mxu0 0.0
        %868 = vmatmul.mubr.f32.gmra.mrb[0].mxu0 %v712
        %v869 = vpop.f32.mrb[0].mxu0
        %v870 = vadd.f32 0.0, %v869
        %v871 = vpop.f32.mrb[0].mxu0
        %872 = vmatprep.mubr.f32.mxu0 0.0
        %873 = vmatmul.mubr.f32.gmra.mrb[0].mxu0 %v715
        %v874 = vpop.f32.mrb[0].mxu0
        %v875 = vadd.f32 0.0, %v874
        %v876 = vpop.f32.mrb[0].mxu0
        %877 = vmatprep.mubr.f32.mxu0 0.0
        %878 = vmatmul.mubr.f32.gmra.mrb[0].mxu0 %v718
        %v879 = vpop.f32.mrb[0].mxu0
        %v880 = vadd.f32 0.0, %v879
        %v881 = vpop.f32.mrb[0].mxu0
        %882 = vmatprep.mubr.f32.mxu0 0.0
        %883 = vmatmul.mubr.f32.gmra.mrb[0].mxu0 %v721
        %v884 = vpop.f32.mrb[0].mxu0
        %v885 = vadd.f32 0.0, %v884
        %v886 = vpop.f32.mrb[0].mxu0
        %887 = vmatprep.mubr.f32.mxu0 0.0
        %888 = vmatmul.mubr.f32.gmra.mrb[0].mxu0 %v724
        %v889 = vpop.f32.mrb[0].mxu0
        %v890 = vadd.f32 0.0, %v889
        %v891 = vpop.f32.mrb[0].mxu0
        %892 = vmatprep.mubr.f32.mxu0 0.0
        %893 = vmatmul.mubr.f32.gmra.mrb[0].mxu0 %v727
        %v894 = vpop.f32.mrb[0].mxu0
        %v895 = vadd.f32 0.0, %v894
        %v896 = vpop.f32.mrb[0].mxu0
        %897 = vmatprep.mubr.f32.mxu0 0.0
        %898 = vmatmul.mubr.f32.gmra.mrb[0].mxu0 %v730
        %v899 = vpop.f32.mrb[0].mxu0
        %v900 = vadd.f32 0.0, %v899
        %v901 = vpop.f32.mrb[0].mxu0
        %902 = vmatprep.mubr.f32.mxu0 0.0
        %903 = vmatmul.mubr.f32.gmra.mrb[0].mxu0 %v733
        %v904 = vpop.f32.mrb[0].mxu0
        %v905 = vadd.f32 0.0, %v904
        %v906 = vpop.f32.mrb[0].mxu0
        %907 = vmatprep.mubr.f32.mxu0 0.0
        %908 = vmatmul.mubr.f32.gmra.mrb[0].mxu0 %v736
        %v909 = vpop.f32.mrb[0].mxu0
        %v910 = vadd.f32 0.0, %v909
        %v911 = vpop.f32.mrb[0].mxu0
        %912 = vmatprep.mubr.f32.mxu0 0.0
        %913 = vmatmul.mubr.f32.gmra.mrb[0].mxu0 %v739
        %v914 = vpop.f32.mrb[0].mxu0
        %v915 = vadd.f32 0.0, %v914
        %v916 = vpop.f32.mrb[0].mxu0
        %917 = vmatprep.mubr.f32.mxu0 0.0
        %918 = vmatmul.mubr.f32.gmra.mrb[0].mxu0 %v742
        %v919 = vpop.f32.mrb[0].mxu0
        %v920 = vadd.f32 0.0, %v919
        %v921 = vpop.f32.mrb[0].mxu0
        %922 = vmatprep.mubr.f32.mxu0 0.0
        %923 = vmatmul.mubr.f32.gmra.mrb[0].mxu0 %v745
        %v924 = vpop.f32.mrb[0].mxu0
        %v925 = vadd.f32 0.0, %v924
        %v926 = vpop.f32.mrb[0].mxu0
        %927 = vmatprep.mubr.f32.mxu0 0.0
        %928 = vmatmul.mubr.f32.gmra.mrb[0].mxu0 %v748
        %v929 = vpop.f32.mrb[0].mxu0
        %v930 = vadd.f32 0.0, %v929
        %v931 = vpop.f32.mrb[0].mxu0
        %932 = vmatprep.mubr.f32.mxu0 0.0
        %933 = vmatmul.mubr.f32.gmra.mrb[0].mxu0 %v751
        %v934 = vpop.f32.mrb[0].mxu0
        %v935 = vadd.f32 0.0, %v934
        %v936 = vpop.f32.mrb[0].mxu0
        %937 = vmatprep.mubr.f32.mxu0 0.0
        %938 = vmatmul.mubr.f32.gmra.mrb[0].mxu0 %v754
        %v939 = vpop.f32.mrb[0].mxu0
        %v940 = vadd.f32 0.0, %v939
        %v941 = vpop.f32.mrb[0].mxu0
        %942 = vmatprep.mubr.f32.mxu0 0.0
        %943 = vmatmul.mubr.f32.gmra.mrb[0].mxu0 %v757
        %v944 = vpop.f32.mrb[0].mxu0
        %v945 = vadd.f32 0.0, %v944
        %v946 = vpop.f32.mrb[0].mxu0
        %947 = vmatprep.mubr.f32.mxu0 0.0
        %948 = vmatmul.mubr.f32.gmra.mrb[0].mxu0 %v760
        %v949 = vpop.f32.mrb[0].mxu0
        %v950 = vadd.f32 0.0, %v949
        %v951 = vpop.f32.mrb[0].mxu0
        %952 = vmatprep.mubr.f32.mxu0 0.0
        %953 = vmatmul.mubr.f32.gmra.mrb[0].mxu0 %v763
        %v954 = vpop.f32.mrb[0].mxu0
        %v955 = vadd.f32 0.0, %v954
        %v956 = vpop.f32.mrb[0].mxu0
        %957 = vmatprep.mubr.f32.mxu0 0.0
        %958 = vmatmul.mubr.f32.gmra.mrb[0].mxu0 %v766
        %v959 = vpop.f32.mrb[0].mxu0
        %v960 = vadd.f32 0.0, %v959
        %v961 = vpop.f32.mrb[0].mxu0
        %962 = vmatprep.mubr.f32.mxu0 0.0
        %963 = vmatmul.mubr.f32.gmra.mrb[0].mxu0 %v769
        %v964 = vpop.f32.mrb[0].mxu0
        %v965 = vadd.f32 0.0, %v964
        %v966 = vpop.f32.mrb[0].mxu0
        %967 = vmatprep.mubr.f32.mxu0 0.0
        %968 = vmatmul.mubr.f32.gmra.mrb[0].mxu0 %v772
        %v969 = vpop.f32.mrb[0].mxu0
        %v970 = vadd.f32 0.0, %v969
        %v971 = vpop.f32.mrb[0].mxu0
        %972 = vmatprep.mubr.f32.mxu0 0.0
        %973 = vmatmul.mubr.f32.gmra.mrb[0].mxu0 %v775
        %v974 = vpop.f32.mrb[0].mxu0
        %v975 = vadd.f32 0.0, %v974
        %v976 = vpop.f32.mrb[0].mxu0
        %977 = vmatprep.mubr.f32.mxu0 0.0
        %978 = vmatmul.mubr.f32.gmra.mrb[0].mxu0 %v778
        %v979 = vpop.f32.mrb[0].mxu0
        %v980 = vadd.f32 0.0, %v979
        %v981 = vpop.f32.mrb[0].mxu0
        %982 = vmatprep.mubr.f32.mxu0 0.0
        %983 = vmatmul.mubr.f32.gmra.mrb[0].mxu0 %v781
        %v984 = vpop.f32.mrb[0].mxu0
        %v985 = vadd.f32 0.0, %v984
        %v986 = vpop.f32.mrb[0].mxu0
        %987 = vmatprep.mubr.f32.mxu0 0.0
        %988 = vmatmul.mubr.f32.gmra.mrb[0].mxu0 %v784
        %v989 = vpop.f32.mrb[0].mxu0
        %v990 = vadd.f32 0.0, %v989
        %v991 = vpop.f32.mrb[0].mxu0
        %992 = vmatprep.mubr.f32.mxu0 0.0
        %993 = vmatmul.mubr.f32.gmra.mrb[0].mxu0 %v787
        %v994 = vpop.f32.mrb[0].mxu0
        %v995 = vadd.f32 0.0, %v994
        %v996 = vpop.f32.mrb[0].mxu0
        %997 = vdwg.mxu0
        %vm998 = vcmask 130048
        %999 = vst.msk [vmem:[#allocation2] sm:$0xff] %vm998, %v860
        %1000 = vst.msk [vmem:[#allocation2 + $0x8] sm:$0xff] %vm998, %v865
        %1001 = vst.msk [vmem:[#allocation2 + $0x10] sm:$0xff] %vm998, %v870
        %1002 = vst.msk [vmem:[#allocation2 + $0x18] sm:$0xff] %vm998, %v875
        %1003 = vst.msk [vmem:[#allocation2 + $0x20] sm:$0xff] %vm998, %v880
        %1004 = vst.msk [vmem:[#allocation2 + $0x28] sm:$0xff] %vm998, %v885
        %1005 = vst.msk [vmem:[#allocation2 + $0x30] sm:$0xff] %vm998, %v890
        %1006 = vst.msk [vmem:[#allocation2 + $0x38] sm:$0xff] %vm998, %v895
        %1007 = vst.msk [vmem:[#allocation2 + $0x40] sm:$0xff] %vm998, %v900
        %1008 = vst.msk [vmem:[#allocation2 + $0x48] sm:$0xff] %vm998, %v905
        %1009 = vst.msk [vmem:[#allocation2 + $0x50] sm:$0xff] %vm998, %v910
        %1010 = vst.msk [vmem:[#allocation2 + $0x58] sm:$0xff] %vm998, %v915
        %1011 = vst.msk [vmem:[#allocation2 + $0x60] sm:$0xff] %vm998, %v920
        %1012 = vst.msk [vmem:[#allocation2 + $0x68] sm:$0xff] %vm998, %v925
        %1013 = vst.msk [vmem:[#allocation2 + $0x70] sm:$0xff] %vm998, %v930
        %1014 = vst.msk [vmem:[#allocation2 + $0x78] sm:$0xff] %vm998, %v935
        %1015 = vst.msk [vmem:[#allocation2 + $0x80] sm:$0xff] %vm998, %v940
        %1016 = vst.msk [vmem:[#allocation2 + $0x88] sm:$0xff] %vm998, %v945
        %1017 = vst.msk [vmem:[#allocation2 + $0x90] sm:$0xff] %vm998, %v950
        %1018 = vst.msk [vmem:[#allocation2 + $0x98] sm:$0xff] %vm998, %v955
        %1019 = vst.msk [vmem:[#allocation2 + $0xa0] sm:$0xff] %vm998, %v960
        %1020 = vst.msk [vmem:[#allocation2 + $0xa8] sm:$0xff] %vm998, %v965
        %1021 = vst.msk [vmem:[#allocation2 + $0xb0] sm:$0xff] %vm998, %v970
        %1022 = vst.msk [vmem:[#allocation2 + $0xb8] sm:$0xff] %vm998, %v975
        %1023 = vst.msk [vmem:[#allocation2 + $0xc0] sm:$0xff] %vm998, %v980
        %1024 = vst.msk [vmem:[#allocation2 + $0xc8] sm:$0xff] %vm998, %v985
        %1025 = vst.msk [vmem:[#allocation2 + $0xd0] sm:$0xff] %vm998, %v990
        %1026 = vst.msk [vmem:[#allocation2 + $0xd8] sm:$0xff] %vm998, %v995
        %s1027 = scalar_lea.vmem %s1, 80
        %v1028 = vld [vmem:[%s1027] sm:$0xff]
        %v1029 = vld [vmem:[%s1027 + $0x8] sm:$0xff]
        %v1030 = vld [vmem:[%s1027 + $0x10] sm:$0xff]
        %v1031 = vld [vmem:[%s1027 + $0x18] sm:$0xff]
        %v1032 = vld [vmem:[%s1027 + $0x20] sm:$0xff]
        %v1033 = vld [vmem:[%s1027 + $0x28] sm:$0xff]
        %v1034 = vld [vmem:[%s1027 + $0x30] sm:$0xff]
        %v1035 = vld [vmem:[%s1027 + $0x38] sm:$0xff]
        %v1036 = vld [vmem:[%s1027 + $0x40] sm:$0xf]
        %v1037 = vld [vmem:[%s1027 + $0x48] sm:$0xf]
        %v1039 = vsel %vm456, %v1029, 0
        %v1042 = vsel %vm456, %v1031, 0
        %v1045 = vsel %vm456, %v1033, 0
        %v1048 = vsel %vm456, %v1035, 0
        %v1051 = vsel %vm456, %v1037, 0
        %1053 = vmatprep.subr.mxu0 0.0
        %1054 = vmatpush1.msra.mxu0 %v277
        %1055 = vmatprep.subr.mxu0 0.0
        %1056 = vmatpush1.msra.mxu0 %v278
        %1057 = vmatprep.subr.mxu0 0.0
        %1058 = vmatpush1.msra.mxu0 %v279
        %1059 = vmatprep.subr.mxu0 0.0
        %1060 = vmatpush1.msra.mxu0 %v280
        %1061 = vmatprep.subr.mxu0 0.0
        %1062 = vmatpush1.msra.mxu0 %v281
        %1063 = vmatprep.subr.mxu0 0.0
        %1064 = vmatpush1.msra.mxu0 %v282
        %1065 = vmatprep.subr.mxu0 0.0
        %1066 = vmatpush1.msra.mxu0 %v283
        %1067 = vmatprep.subr.mxu0 0.0
        %1068 = vmatpush1.msra.mxu0 %v284
        %1069 = vmatprep.subr.mxu0 0.0
        %1070 = vmatpush1.msra.mxu0 %v285
        %1071 = vmatprep.subr.mxu0 0.0
        %1072 = vmatpush1.msra.mxu0 %v286
        %1073 = vmatprep.subr.mxu0 0.0
        %1074 = vmatpush1.msra.mxu0 %v287
        %1075 = vmatprep.subr.mxu0 0.0
        %1076 = vmatpush1.msra.mxu0 %v288
        %1077 = vmatprep.subr.mxu0 0.0
        %1078 = vmatpush1.msra.mxu0 %v289
        %1079 = vmatprep.subr.mxu0 0.0
        %1080 = vmatpush1.msra.mxu0 %v290
        %1081 = vmatprep.subr.mxu0 0.0
        %1082 = vmatpush1.msra.mxu0 %v291
        %1083 = vmatprep.subr.mxu0 0.0
        %1084 = vmatpush1.msra.mxu0 %v292
        %1085 = vmatprep.subr.mxu0 0.0
        %1086 = vmatpush1.msra.mxu0 %v293
        %1087 = vmatprep.subr.mxu0 0.0
        %1088 = vmatpush1.msra.mxu0 %v294
        %1089 = vmatprep.subr.mxu0 0.0
        %1090 = vmatpush1.msra.mxu0 %v295
        %1091 = vmatprep.subr.mxu0 0.0
        %1092 = vmatpush1.msra.mxu0 %v296
        %1093 = vmatprep.subr.mxu0 0.0
        %1094 = vmatpush1.msra.mxu0 %v297
        %1095 = vmatprep.subr.mxu0 0.0
        %1096 = vmatpush1.msra.mxu0 %v298
        %1097 = vmatprep.subr.mxu0 0.0
        %1098 = vmatpush1.msra.mxu0 %v299
        %1099 = vmatprep.subr.mxu0 0.0
        %1100 = vmatpush1.msra.mxu0 %v300
        %1101 = vmatprep.subr.mxu0 0.0
        %1102 = vmatpush1.msra.mxu0 %v301
        %1103 = vmatprep.subr.mxu0 0.0
        %1104 = vmatpush1.msra.mxu0 %v302
        %1105 = vmatprep.subr.mxu0 0.0
        %1106 = vmatpush1.msra.mxu0 %v303
        %1107 = vmatprep.subr.mxu0 0.0
        %1108 = vmatpush1.msra.mxu0 %v304
        %1109 = vmatprep.subr.mxu0 0.0
        %1110 = vmatpush1.msra.mxu0 0.0
        %1111 = vmatprep.subr.mxu0 0.0
        %1112 = vmatpush1.msra.mxu0 0.0
        %1113 = vmatprep.subr.mxu0 0.0
        %1114 = vmatpush1.msra.mxu0 0.0
        %1115 = vmatprep.subr.mxu0 0.0
        %1116 = vmatpush1.msra.mxu0 0.0
        %1117 = vmatprep.mubr.f32.mxu0 %v1039
        %1118 = vmatmul.mubr.f32.gmra.mrb[0].mxu0 %v1028
        %v1119 = vpop.f32.mrb[0].mxu0
        %v1120 = vadd.f32 0.0, %v1119
        %v1121 = vpop.f32.mrb[0].mxu0
        %1122 = vmatprep.mubr.f32.mxu0 %v1042
        %1123 = vmatmul.mubr.f32.gmra.mrb[0].mxu0 %v1030
        %v1124 = vpop.f32.mrb[0].mxu0
        %v1125 = vadd.f32 0.0, %v1124
        %v1126 = vpop.f32.mrb[0].mxu0
        %1127 = vmatprep.mubr.f32.mxu0 %v1045
        %1128 = vmatmul.mubr.f32.gmra.mrb[0].mxu0 %v1032
        %v1129 = vpop.f32.mrb[0].mxu0
        %v1130 = vadd.f32 0.0, %v1129
        %v1131 = vpop.f32.mrb[0].mxu0
        %1132 = vmatprep.mubr.f32.mxu0 %v1048
        %1133 = vmatmul.mubr.f32.gmra.mrb[0].mxu0 %v1034
        %v1134 = vpop.f32.mrb[0].mxu0
        %v1135 = vadd.f32 0.0, %v1134
        %v1136 = vpop.f32.mrb[0].mxu0
        %1137 = vmatprep.mubr.f32.mxu0 %v1051
        %1138 = vmatmul.mubr.f32.gmra.mrb[0].mxu0 %v1036
        %v1139 = vpop.f32.mrb[0].mxu0
        %v1140 = vadd.f32 0.0, %v1139
        %v1141 = vpop.f32.mrb[0].mxu0
        %1142 = vdwg.mxu0
        %s1143 = scalar_lea.vmem %s3, 8
        %v1144 = vld [vmem:[%s1143] sm:$0xff]
        %s1145 = scalar_lea.vmem %s4, 1
        %v1146 = vld [vmem:[%s1145] sm:$0x1]
        %v1148 = vlaneseq
        %v1149 = vshrl.u32 %v1148, 7
        %v1150 = vsub.s32 0, %v1149
        %v1151 = vrot.slane %v1146, %v1150
        %v1154 = vsel %vm570, %v1120, 0
        %v1157 = vsel %vm570, %v1125, 0
        %v1160 = vsel %vm570, %v1130, 0
        %v1163 = vsel %vm570, %v1135, 0
        %v1166 = vsel %vm570, %v1140, 0
        %1168 = vmatprep.subr.mxu0 0.0
        %1169 = vmatpush1.msra.mxu0 %v1144
        %1170 = vmatprep.subr.mxu0 0.0
        %1171 = vmatpush1.msra.mxu0 0.0
        %1172 = vmatprep.subr.mxu0 0.0
        %1173 = vmatpush1.msra.mxu0 0.0
        %1174 = vmatprep.subr.mxu0 0.0
        %1175 = vmatpush1.msra.mxu0 0.0
        %1176 = vmatprep.subr.mxu0 0.0
        %1177 = vmatpush1.msra.mxu0 0.0
        %1178 = vmatprep.subr.mxu0 0.0
        %1179 = vmatpush1.msra.mxu0 0.0
        %1180 = vmatprep.subr.mxu0 0.0
        %1181 = vmatpush1.msra.mxu0 0.0
        %1182 = vmatprep.subr.mxu0 0.0
        %1183 = vmatpush1.msra.mxu0 0.0
        %1184 = vmatprep.subr.mxu0 0.0
        %1185 = vmatpush1.msra.mxu0 0.0
        %1186 = vmatprep.subr.mxu0 0.0
        %1187 = vmatpush1.msra.mxu0 0.0
        %1188 = vmatprep.subr.mxu0 0.0
        %1189 = vmatpush1.msra.mxu0 0.0
        %1190 = vmatprep.subr.mxu0 0.0
        %1191 = vmatpush1.msra.mxu0 0.0
        %1192 = vmatprep.subr.mxu0 0.0
        %1193 = vmatpush1.msra.mxu0 0.0
        %1194 = vmatprep.subr.mxu0 0.0
        %1195 = vmatpush1.msra.mxu0 0.0
        %1196 = vmatprep.subr.mxu0 0.0
        %1197 = vmatpush1.msra.mxu0 0.0
        %1198 = vmatprep.subr.mxu0 0.0
        %1199 = vmatpush1.msra.mxu0 0.0
        %1200 = vmatprep.subr.mxu0 0.0
        %1201 = vmatpush1.msra.mxu0 0.0
        %1202 = vmatprep.subr.mxu0 0.0
        %1203 = vmatpush1.msra.mxu0 0.0
        %1204 = vmatprep.subr.mxu0 0.0
        %1205 = vmatpush1.msra.mxu0 0.0
        %1206 = vmatprep.subr.mxu0 0.0
        %1207 = vmatpush1.msra.mxu0 0.0
        %1208 = vmatprep.subr.mxu0 0.0
        %1209 = vmatpush1.msra.mxu0 0.0
        %1210 = vmatprep.subr.mxu0 0.0
        %1211 = vmatpush1.msra.mxu0 0.0
        %1212 = vmatprep.subr.mxu0 0.0
        %1213 = vmatpush1.msra.mxu0 0.0
        %1214 = vmatprep.subr.mxu0 0.0
        %1215 = vmatpush1.msra.mxu0 0.0
        %1216 = vmatprep.subr.mxu0 0.0
        %1217 = vmatpush1.msra.mxu0 0.0
        %1218 = vmatprep.subr.mxu0 0.0
        %1219 = vmatpush1.msra.mxu0 0.0
        %1220 = vmatprep.subr.mxu0 0.0
        %1221 = vmatpush1.msra.mxu0 0.0
        %1222 = vmatprep.subr.mxu0 0.0
        %1223 = vmatpush1.msra.mxu0 0.0
        %1224 = vmatprep.subr.mxu0 0.0
        %1225 = vmatpush1.msra.mxu0 0.0
        %1226 = vmatprep.subr.mxu0 0.0
        %1227 = vmatpush1.msra.mxu0 0.0
        %1228 = vmatprep.subr.mxu0 0.0
        %1229 = vmatpush1.msra.mxu0 0.0
        %1230 = vmatprep.subr.mxu0 0.0
        %1231 = vmatpush1.msra.mxu0 0.0
        %1232 = vmatprep.mubr.f32.mxu0 0.0
        %1233 = vmatmul.mubr.f32.gmra.mrb[0].mxu0 %v1154
        %v1234 = vpop.f32.mrb[0].mxu0
        %v1235 = vadd.f32 %v1151, %v1234
        %v1236 = vpop.f32.mrb[0].mxu0
        %1237 = vmatprep.mubr.f32.mxu0 0.0
        %1238 = vmatmul.mubr.f32.gmra.mrb[0].mxu0 %v1157
        %v1239 = vpop.f32.mrb[0].mxu0
        %v1240 = vadd.f32 %v1151, %v1239
        %v1241 = vpop.f32.mrb[0].mxu0
        %1242 = vmatprep.mubr.f32.mxu0 0.0
        %1243 = vmatmul.mubr.f32.gmra.mrb[0].mxu0 %v1160
        %v1244 = vpop.f32.mrb[0].mxu0
        %v1245 = vadd.f32 %v1151, %v1244
        %v1246 = vpop.f32.mrb[0].mxu0
        %1247 = vmatprep.mubr.f32.mxu0 0.0
        %1248 = vmatmul.mubr.f32.gmra.mrb[0].mxu0 %v1163
        %v1249 = vpop.f32.mrb[0].mxu0
        %v1250 = vadd.f32 %v1151, %v1249
        %v1251 = vpop.f32.mrb[0].mxu0
        %1252 = vmatprep.mubr.f32.mxu0 0.0
        %1253 = vmatmul.mubr.f32.gmra.mrb[0].mxu0 %v1166
        %v1254 = vpop.f32.mrb[0].mxu0
        %v1255 = vadd.f32 %v1151, %v1254
        %v1256 = vpop.f32.mrb[0].mxu0
        %1257 = vdwg.mxu0
        %s1258 = scalar_lea.vmem %s2, 224
        %v1259 = vld [vmem:[%s1258] sm:$0xff]
        %v1260 = vld [vmem:[%s1258 + $0x8] sm:$0xff]
        %v1261 = vld [vmem:[%s1258 + $0x10] sm:$0xff]
        %v1262 = vld [vmem:[%s1258 + $0x18] sm:$0xff]
        %v1263 = vld [vmem:[%s1258 + $0x20] sm:$0xff]
        %v1264 = vld [vmem:[%s1258 + $0x28] sm:$0xff]
        %v1265 = vld [vmem:[%s1258 + $0x30] sm:$0xff]
        %v1266 = vld [vmem:[%s1258 + $0x38] sm:$0xff]
        %v1267 = vld [vmem:[%s1258 + $0x40] sm:$0xff]
        %v1268 = vld [vmem:[%s1258 + $0x48] sm:$0xff]
        %v1269 = vld [vmem:[%s1258 + $0x50] sm:$0xff]
        %v1270 = vld [vmem:[%s1258 + $0x58] sm:$0xff]
        %v1271 = vld [vmem:[%s1258 + $0x60] sm:$0xff]
        %v1272 = vld [vmem:[%s1258 + $0x68] sm:$0xff]
        %v1273 = vld [vmem:[%s1258 + $0x70] sm:$0xff]
        %v1274 = vld [vmem:[%s1258 + $0x78] sm:$0xff]
        %v1275 = vld [vmem:[%s1258 + $0x80] sm:$0xff]
        %v1276 = vld [vmem:[%s1258 + $0x88] sm:$0xff]
        %v1277 = vld [vmem:[%s1258 + $0x90] sm:$0xff]
        %v1278 = vld [vmem:[%s1258 + $0x98] sm:$0xff]
        %v1279 = vld [vmem:[%s1258 + $0xa0] sm:$0xff]
        %v1280 = vld [vmem:[%s1258 + $0xa8] sm:$0xff]
        %v1281 = vld [vmem:[%s1258 + $0xb0] sm:$0xff]
        %v1282 = vld [vmem:[%s1258 + $0xb8] sm:$0xff]
        %v1283 = vld [vmem:[%s1258 + $0xc0] sm:$0xff]
        %v1284 = vld [vmem:[%s1258 + $0xc8] sm:$0xff]
        %v1285 = vld [vmem:[%s1258 + $0xd0] sm:$0xff]
        %v1286 = vld [vmem:[%s1258 + $0xd8] sm:$0xff]
        %v1288 = vsel %vm704, %v1259, 0
        %v1291 = vsel %vm704, %v1260, 0
        %v1294 = vsel %vm704, %v1261, 0
        %v1297 = vsel %vm704, %v1262, 0
        %v1300 = vsel %vm704, %v1263, 0
        %v1303 = vsel %vm704, %v1264, 0
        %v1306 = vsel %vm704, %v1265, 0
        %v1309 = vsel %vm704, %v1266, 0
        %v1312 = vsel %vm704, %v1267, 0
        %v1315 = vsel %vm704, %v1268, 0
        %v1318 = vsel %vm704, %v1269, 0
        %v1321 = vsel %vm704, %v1270, 0
        %v1324 = vsel %vm704, %v1271, 0
        %v1327 = vsel %vm704, %v1272, 0
        %v1330 = vsel %vm704, %v1273, 0
        %v1333 = vsel %vm704, %v1274, 0
        %v1336 = vsel %vm704, %v1275, 0
        %v1339 = vsel %vm704, %v1276, 0
        %v1342 = vsel %vm704, %v1277, 0
        %v1345 = vsel %vm704, %v1278, 0
        %v1348 = vsel %vm704, %v1279, 0
        %v1351 = vsel %vm704, %v1280, 0
        %v1354 = vsel %vm704, %v1281, 0
        %v1357 = vsel %vm704, %v1282, 0
        %v1360 = vsel %vm704, %v1283, 0
        %v1363 = vsel %vm704, %v1284, 0
        %v1366 = vsel %vm704, %v1285, 0
        %v1369 = vsel %vm704, %v1286, 0
        %v1372 = vsel %vm789, %v1255, 0
        %1374 = vmatprep.subr.mxu0 0.0
        %1375 = vmatpush1.msra.mxu0 %v1235
        %1376 = vmatprep.subr.mxu0 0.0
        %1377 = vmatpush1.msra.mxu0 %v1240
        %1378 = vmatprep.subr.mxu0 0.0
        %1379 = vmatpush1.msra.mxu0 %v1245
        %1380 = vmatprep.subr.mxu0 0.0
        %1381 = vmatpush1.msra.mxu0 %v1250
        %1382 = vmatprep.subr.mxu0 0.0
        %1383 = vmatpush1.msra.mxu0 %v1372
        %1384 = vmatprep.subr.mxu0 0.0
        %1385 = vmatpush1.msra.mxu0 0.0
        %1386 = vmatprep.subr.mxu0 0.0
        %1387 = vmatpush1.msra.mxu0 0.0
        %1388 = vmatprep.subr.mxu0 0.0
        %1389 = vmatpush1.msra.mxu0 0.0
        %1390 = vmatprep.subr.mxu0 0.0
        %1391 = vmatpush1.msra.mxu0 0.0
        %1392 = vmatprep.subr.mxu0 0.0
        %1393 = vmatpush1.msra.mxu0 0.0
        %1394 = vmatprep.subr.mxu0 0.0
        %1395 = vmatpush1.msra.mxu0 0.0
        %1396 = vmatprep.subr.mxu0 0.0
        %1397 = vmatpush1.msra.mxu0 0.0
        %1398 = vmatprep.subr.mxu0 0.0
        %1399 = vmatpush1.msra.mxu0 0.0
        %1400 = vmatprep.subr.mxu0 0.0
        %1401 = vmatpush1.msra.mxu0 0.0
        %1402 = vmatprep.subr.mxu0 0.0
        %1403 = vmatpush1.msra.mxu0 0.0
        %1404 = vmatprep.subr.mxu0 0.0
        %1405 = vmatpush1.msra.mxu0 0.0
        %1406 = vmatprep.subr.mxu0 0.0
        %1407 = vmatpush1.msra.mxu0 0.0
        %1408 = vmatprep.subr.mxu0 0.0
        %1409 = vmatpush1.msra.mxu0 0.0
        %1410 = vmatprep.subr.mxu0 0.0
        %1411 = vmatpush1.msra.mxu0 0.0
        %1412 = vmatprep.subr.mxu0 0.0
        %1413 = vmatpush1.msra.mxu0 0.0
        %1414 = vmatprep.subr.mxu0 0.0
        %1415 = vmatpush1.msra.mxu0 0.0
        %1416 = vmatprep.subr.mxu0 0.0
        %1417 = vmatpush1.msra.mxu0 0.0
        %1418 = vmatprep.subr.mxu0 0.0
        %1419 = vmatpush1.msra.mxu0 0.0
        %1420 = vmatprep.subr.mxu0 0.0
        %1421 = vmatpush1.msra.mxu0 0.0
        %1422 = vmatprep.subr.mxu0 0.0
        %1423 = vmatpush1.msra.mxu0 0.0
        %1424 = vmatprep.subr.mxu0 0.0
        %1425 = vmatpush1.msra.mxu0 0.0
        %1426 = vmatprep.subr.mxu0 0.0
        %1427 = vmatpush1.msra.mxu0 0.0
        %1428 = vmatprep.subr.mxu0 0.0
        %1429 = vmatpush1.msra.mxu0 0.0
        %1430 = vmatprep.subr.mxu0 0.0
        %1431 = vmatpush1.msra.mxu0 0.0
        %1432 = vmatprep.subr.mxu0 0.0
        %1433 = vmatpush1.msra.mxu0 0.0
        %1434 = vmatprep.subr.mxu0 0.0
        %1435 = vmatpush1.msra.mxu0 0.0
        %1436 = vmatprep.subr.mxu0 0.0
        %1437 = vmatpush1.msra.mxu0 0.0
        %1438 = vmatprep.mubr.f32.mxu0 0.0
        %1439 = vmatmul.mubr.f32.gmra.mrb[0].mxu0 %v1288
        %v1440 = vpop.f32.mrb[0].mxu0
        %v1441 = vadd.f32 0.0, %v1440
        %v1442 = vpop.f32.mrb[0].mxu0
        %1443 = vmatprep.mubr.f32.mxu0 0.0
        %1444 = vmatmul.mubr.f32.gmra.mrb[0].mxu0 %v1291
        %v1445 = vpop.f32.mrb[0].mxu0
        %v1446 = vadd.f32 0.0, %v1445
        %v1447 = vpop.f32.mrb[0].mxu0
        %1448 = vmatprep.mubr.f32.mxu0 0.0
        %1449 = vmatmul.mubr.f32.gmra.mrb[0].mxu0 %v1294
        %v1450 = vpop.f32.mrb[0].mxu0
        %v1451 = vadd.f32 0.0, %v1450
        %v1452 = vpop.f32.mrb[0].mxu0
        %1453 = vmatprep.mubr.f32.mxu0 0.0
        %1454 = vmatmul.mubr.f32.gmra.mrb[0].mxu0 %v1297
        %v1455 = vpop.f32.mrb[0].mxu0
        %v1456 = vadd.f32 0.0, %v1455
        %v1457 = vpop.f32.mrb[0].mxu0
        %1458 = vmatprep.mubr.f32.mxu0 0.0
        %1459 = vmatmul.mubr.f32.gmra.mrb[0].mxu0 %v1300
        %v1460 = vpop.f32.mrb[0].mxu0
        %v1461 = vadd.f32 0.0, %v1460
        %v1462 = vpop.f32.mrb[0].mxu0
        %1463 = vmatprep.mubr.f32.mxu0 0.0
        %1464 = vmatmul.mubr.f32.gmra.mrb[0].mxu0 %v1303
        %v1465 = vpop.f32.mrb[0].mxu0
        %v1466 = vadd.f32 0.0, %v1465
        %v1467 = vpop.f32.mrb[0].mxu0
        %1468 = vmatprep.mubr.f32.mxu0 0.0
        %1469 = vmatmul.mubr.f32.gmra.mrb[0].mxu0 %v1306
        %v1470 = vpop.f32.mrb[0].mxu0
        %v1471 = vadd.f32 0.0, %v1470
        %v1472 = vpop.f32.mrb[0].mxu0
        %1473 = vmatprep.mubr.f32.mxu0 0.0
        %1474 = vmatmul.mubr.f32.gmra.mrb[0].mxu0 %v1309
        %v1475 = vpop.f32.mrb[0].mxu0
        %v1476 = vadd.f32 0.0, %v1475
        %v1477 = vpop.f32.mrb[0].mxu0
        %1478 = vmatprep.mubr.f32.mxu0 0.0
        %1479 = vmatmul.mubr.f32.gmra.mrb[0].mxu0 %v1312
        %v1480 = vpop.f32.mrb[0].mxu0
        %v1481 = vadd.f32 0.0, %v1480
        %v1482 = vpop.f32.mrb[0].mxu0
        %1483 = vmatprep.mubr.f32.mxu0 0.0
        %1484 = vmatmul.mubr.f32.gmra.mrb[0].mxu0 %v1315
        %v1485 = vpop.f32.mrb[0].mxu0
        %v1486 = vadd.f32 0.0, %v1485
        %v1487 = vpop.f32.mrb[0].mxu0
        %1488 = vmatprep.mubr.f32.mxu0 0.0
        %1489 = vmatmul.mubr.f32.gmra.mrb[0].mxu0 %v1318
        %v1490 = vpop.f32.mrb[0].mxu0
        %v1491 = vadd.f32 0.0, %v1490
        %v1492 = vpop.f32.mrb[0].mxu0
        %1493 = vmatprep.mubr.f32.mxu0 0.0
        %1494 = vmatmul.mubr.f32.gmra.mrb[0].mxu0 %v1321
        %v1495 = vpop.f32.mrb[0].mxu0
        %v1496 = vadd.f32 0.0, %v1495
        %v1497 = vpop.f32.mrb[0].mxu0
        %1498 = vmatprep.mubr.f32.mxu0 0.0
        %1499 = vmatmul.mubr.f32.gmra.mrb[0].mxu0 %v1324
        %v1500 = vpop.f32.mrb[0].mxu0
        %v1501 = vadd.f32 0.0, %v1500
        %v1502 = vpop.f32.mrb[0].mxu0
        %1503 = vmatprep.mubr.f32.mxu0 0.0
        %1504 = vmatmul.mubr.f32.gmra.mrb[0].mxu0 %v1327
        %v1505 = vpop.f32.mrb[0].mxu0
        %v1506 = vadd.f32 0.0, %v1505
        %v1507 = vpop.f32.mrb[0].mxu0
        %1508 = vmatprep.mubr.f32.mxu0 0.0
        %1509 = vmatmul.mubr.f32.gmra.mrb[0].mxu0 %v1330
        %v1510 = vpop.f32.mrb[0].mxu0
        %v1511 = vadd.f32 0.0, %v1510
        %v1512 = vpop.f32.mrb[0].mxu0
        %1513 = vmatprep.mubr.f32.mxu0 0.0
        %1514 = vmatmul.mubr.f32.gmra.mrb[0].mxu0 %v1333
        %v1515 = vpop.f32.mrb[0].mxu0
        %v1516 = vadd.f32 0.0, %v1515
        %v1517 = vpop.f32.mrb[0].mxu0
        %1518 = vmatprep.mubr.f32.mxu0 0.0
        %1519 = vmatmul.mubr.f32.gmra.mrb[0].mxu0 %v1336
        %v1520 = vpop.f32.mrb[0].mxu0
        %v1521 = vadd.f32 0.0, %v1520
        %v1522 = vpop.f32.mrb[0].mxu0
        %1523 = vmatprep.mubr.f32.mxu0 0.0
        %1524 = vmatmul.mubr.f32.gmra.mrb[0].mxu0 %v1339
        %v1525 = vpop.f32.mrb[0].mxu0
        %v1526 = vadd.f32 0.0, %v1525
        %v1527 = vpop.f32.mrb[0].mxu0
        %1528 = vmatprep.mubr.f32.mxu0 0.0
        %1529 = vmatmul.mubr.f32.gmra.mrb[0].mxu0 %v1342
        %v1530 = vpop.f32.mrb[0].mxu0
        %v1531 = vadd.f32 0.0, %v1530
        %v1532 = vpop.f32.mrb[0].mxu0
        %1533 = vmatprep.mubr.f32.mxu0 0.0
        %1534 = vmatmul.mubr.f32.gmra.mrb[0].mxu0 %v1345
        %v1535 = vpop.f32.mrb[0].mxu0
        %v1536 = vadd.f32 0.0, %v1535
        %v1537 = vpop.f32.mrb[0].mxu0
        %1538 = vmatprep.mubr.f32.mxu0 0.0
        %1539 = vmatmul.mubr.f32.gmra.mrb[0].mxu0 %v1348
        %v1540 = vpop.f32.mrb[0].mxu0
        %v1541 = vadd.f32 0.0, %v1540
        %v1542 = vpop.f32.mrb[0].mxu0
        %1543 = vmatprep.mubr.f32.mxu0 0.0
        %1544 = vmatmul.mubr.f32.gmra.mrb[0].mxu0 %v1351
        %v1545 = vpop.f32.mrb[0].mxu0
        %v1546 = vadd.f32 0.0, %v1545
        %v1547 = vpop.f32.mrb[0].mxu0
        %1548 = vmatprep.mubr.f32.mxu0 0.0
        %1549 = vmatmul.mubr.f32.gmra.mrb[0].mxu0 %v1354
        %v1550 = vpop.f32.mrb[0].mxu0
        %v1551 = vadd.f32 0.0, %v1550
        %v1552 = vpop.f32.mrb[0].mxu0
        %1553 = vmatprep.mubr.f32.mxu0 0.0
        %1554 = vmatmul.mubr.f32.gmra.mrb[0].mxu0 %v1357
        %v1555 = vpop.f32.mrb[0].mxu0
        %v1556 = vadd.f32 0.0, %v1555
        %v1557 = vpop.f32.mrb[0].mxu0
        %1558 = vmatprep.mubr.f32.mxu0 0.0
        %1559 = vmatmul.mubr.f32.gmra.mrb[0].mxu0 %v1360
        %v1560 = vpop.f32.mrb[0].mxu0
        %v1561 = vadd.f32 0.0, %v1560
        %v1562 = vpop.f32.mrb[0].mxu0
        %1563 = vmatprep.mubr.f32.mxu0 0.0
        %1564 = vmatmul.mubr.f32.gmra.mrb[0].mxu0 %v1363
        %v1565 = vpop.f32.mrb[0].mxu0
        %v1566 = vadd.f32 0.0, %v1565
        %v1567 = vpop.f32.mrb[0].mxu0
        %1568 = vmatprep.mubr.f32.mxu0 0.0
        %1569 = vmatmul.mubr.f32.gmra.mrb[0].mxu0 %v1366
        %v1570 = vpop.f32.mrb[0].mxu0
        %v1571 = vadd.f32 0.0, %v1570
        %v1572 = vpop.f32.mrb[0].mxu0
        %1573 = vmatprep.mubr.f32.mxu0 0.0
        %1574 = vmatmul.mubr.f32.gmra.mrb[0].mxu0 %v1369
        %v1575 = vpop.f32.mrb[0].mxu0
        %v1576 = vadd.f32 0.0, %v1575
        %v1577 = vpop.f32.mrb[0].mxu0
        %1578 = vdwg.mxu0
        %1607 = vrot.lane.b32.xlu0 %v1441, 16
        %v1608 = vpop.permute.xlu0 %1607
        %1609 = vrot.lane.b32.xlu0 %v1446, 16
        %v1610 = vpop.permute.xlu0 %1609
        %1611 = vrot.lane.b32.xlu0 %v1451, 16
        %v1612 = vpop.permute.xlu0 %1611
        %1613 = vrot.lane.b32.xlu0 %v1456, 16
        %v1614 = vpop.permute.xlu0 %1613
        %1615 = vrot.lane.b32.xlu0 %v1461, 16
        %v1616 = vpop.permute.xlu0 %1615
        %1617 = vrot.lane.b32.xlu0 %v1466, 16
        %v1618 = vpop.permute.xlu0 %1617
        %1619 = vrot.lane.b32.xlu0 %v1471, 16
        %v1620 = vpop.permute.xlu0 %1619
        %1621 = vrot.lane.b32.xlu0 %v1476, 16
        %v1622 = vpop.permute.xlu0 %1621
        %1623 = vrot.lane.b32.xlu0 %v1481, 16
        %v1624 = vpop.permute.xlu0 %1623
        %1625 = vrot.lane.b32.xlu0 %v1486, 16
        %v1626 = vpop.permute.xlu0 %1625
        %1627 = vrot.lane.b32.xlu0 %v1491, 16
        %v1628 = vpop.permute.xlu0 %1627
        %1629 = vrot.lane.b32.xlu0 %v1496, 16
        %v1630 = vpop.permute.xlu0 %1629
        %1631 = vrot.lane.b32.xlu0 %v1501, 16
        %v1632 = vpop.permute.xlu0 %1631
        %1633 = vrot.lane.b32.xlu0 %v1506, 16
        %v1634 = vpop.permute.xlu0 %1633
        %1635 = vrot.lane.b32.xlu0 %v1511, 16
        %v1636 = vpop.permute.xlu0 %1635
        %1637 = vrot.lane.b32.xlu0 %v1516, 16
        %v1638 = vpop.permute.xlu0 %1637
        %1639 = vrot.lane.b32.xlu0 %v1521, 16
        %v1640 = vpop.permute.xlu0 %1639
        %1641 = vrot.lane.b32.xlu0 %v1526, 16
        %v1642 = vpop.permute.xlu0 %1641
        %1643 = vrot.lane.b32.xlu0 %v1531, 16
        %v1644 = vpop.permute.xlu0 %1643
        %1645 = vrot.lane.b32.xlu0 %v1536, 16
        %v1646 = vpop.permute.xlu0 %1645
        %1647 = vrot.lane.b32.xlu0 %v1541, 16
        %v1648 = vpop.permute.xlu0 %1647
        %1649 = vrot.lane.b32.xlu0 %v1546, 16
        %v1650 = vpop.permute.xlu0 %1649
        %1651 = vrot.lane.b32.xlu0 %v1551, 16
        %v1652 = vpop.permute.xlu0 %1651
        %1653 = vrot.lane.b32.xlu0 %v1556, 16
        %v1654 = vpop.permute.xlu0 %1653
        %1655 = vrot.lane.b32.xlu0 %v1561, 16
        %v1656 = vpop.permute.xlu0 %1655
        %1657 = vrot.lane.b32.xlu0 %v1566, 16
        %v1658 = vpop.permute.xlu0 %1657
        %1659 = vrot.lane.b32.xlu0 %v1571, 16
        %v1660 = vpop.permute.xlu0 %1659
        %1661 = vrot.lane.b32.xlu0 %v1576, 16
        %v1662 = vpop.permute.xlu0 %1661
        %vm1691 = vcmask 261248
        %1692 = vst.msk [vmem:[#allocation2] sm:$0xff] %vm1691, %v1608
        %1693 = vst.msk [vmem:[#allocation2 + $0x8] sm:$0xff] %vm1691, %v1610
        %1694 = vst.msk [vmem:[#allocation2 + $0x10] sm:$0xff] %vm1691, %v1612
        %1695 = vst.msk [vmem:[#allocation2 + $0x18] sm:$0xff] %vm1691, %v1614
        %1696 = vst.msk [vmem:[#allocation2 + $0x20] sm:$0xff] %vm1691, %v1616
        %1697 = vst.msk [vmem:[#allocation2 + $0x28] sm:$0xff] %vm1691, %v1618
        %1698 = vst.msk [vmem:[#allocation2 + $0x30] sm:$0xff] %vm1691, %v1620
        %1699 = vst.msk [vmem:[#allocation2 + $0x38] sm:$0xff] %vm1691, %v1622
        %1700 = vst.msk [vmem:[#allocation2 + $0x40] sm:$0xff] %vm1691, %v1624
        %1701 = vst.msk [vmem:[#allocation2 + $0x48] sm:$0xff] %vm1691, %v1626
        %1702 = vst.msk [vmem:[#allocation2 + $0x50] sm:$0xff] %vm1691, %v1628
        %1703 = vst.msk [vmem:[#allocation2 + $0x58] sm:$0xff] %vm1691, %v1630
        %1704 = vst.msk [vmem:[#allocation2 + $0x60] sm:$0xff] %vm1691, %v1632
        %1705 = vst.msk [vmem:[#allocation2 + $0x68] sm:$0xff] %vm1691, %v1634
        %1706 = vst.msk [vmem:[#allocation2 + $0x70] sm:$0xff] %vm1691, %v1636
        %1707 = vst.msk [vmem:[#allocation2 + $0x78] sm:$0xff] %vm1691, %v1638
        %1708 = vst.msk [vmem:[#allocation2 + $0x80] sm:$0xff] %vm1691, %v1640
        %1709 = vst.msk [vmem:[#allocation2 + $0x88] sm:$0xff] %vm1691, %v1642
        %1710 = vst.msk [vmem:[#allocation2 + $0x90] sm:$0xff] %vm1691, %v1644
        %1711 = vst.msk [vmem:[#allocation2 + $0x98] sm:$0xff] %vm1691, %v1646
        %1712 = vst.msk [vmem:[#allocation2 + $0xa0] sm:$0xff] %vm1691, %v1648
        %1713 = vst.msk [vmem:[#allocation2 + $0xa8] sm:$0xff] %vm1691, %v1650
        %1714 = vst.msk [vmem:[#allocation2 + $0xb0] sm:$0xff] %vm1691, %v1652
        %1715 = vst.msk [vmem:[#allocation2 + $0xb8] sm:$0xff] %vm1691, %v1654
        %1716 = vst.msk [vmem:[#allocation2 + $0xc0] sm:$0xff] %vm1691, %v1656
        %1717 = vst.msk [vmem:[#allocation2 + $0xc8] sm:$0xff] %vm1691, %v1658
        %1718 = vst.msk [vmem:[#allocation2 + $0xd0] sm:$0xff] %vm1691, %v1660
        %1719 = vst.msk [vmem:[#allocation2 + $0xd8] sm:$0xff] %vm1691, %v1662
        %s1720 = scalar_lea.vmem %s1, 160
        %v1721 = vld [vmem:[%s1720] sm:$0xff]
        %v1722 = vld [vmem:[%s1720 + $0x8] sm:$0xff]
        %v1723 = vld [vmem:[%s1720 + $0x10] sm:$0xff]
        %v1724 = vld [vmem:[%s1720 + $0x18] sm:$0xff]
        %v1725 = vld [vmem:[%s1720 + $0x20] sm:$0xff]
        %v1726 = vld [vmem:[%s1720 + $0x28] sm:$0xff]
        %v1727 = vld [vmem:[%s1720 + $0x30] sm:$0xff]
        %v1728 = vld [vmem:[%s1720 + $0x38] sm:$0xff]
        %v1729 = vld [vmem:[%s1720 + $0x40] sm:$0xf]
        %v1730 = vld [vmem:[%s1720 + $0x48] sm:$0xf]
        %v1732 = vsel %vm456, %v1722, 0
        %v1735 = vsel %vm456, %v1724, 0
        %v1738 = vsel %vm456, %v1726, 0
        %v1741 = vsel %vm456, %v1728, 0
        %v1744 = vsel %vm456, %v1730, 0
        %1746 = vmatprep.subr.mxu0 0.0
        %1747 = vmatpush1.msra.mxu0 %v277
        %1748 = vmatprep.subr.mxu0 0.0
        %1749 = vmatpush1.msra.mxu0 %v278
        %1750 = vmatprep.subr.mxu0 0.0
        %1751 = vmatpush1.msra.mxu0 %v279
        %1752 = vmatprep.subr.mxu0 0.0
        %1753 = vmatpush1.msra.mxu0 %v280
        %1754 = vmatprep.subr.mxu0 0.0
        %1755 = vmatpush1.msra.mxu0 %v281
        %1756 = vmatprep.subr.mxu0 0.0
        %1757 = vmatpush1.msra.mxu0 %v282
        %1758 = vmatprep.subr.mxu0 0.0
        %1759 = vmatpush1.msra.mxu0 %v283
        %1760 = vmatprep.subr.mxu0 0.0
        %1761 = vmatpush1.msra.mxu0 %v284
        %1762 = vmatprep.subr.mxu0 0.0
        %1763 = vmatpush1.msra.mxu0 %v285
        %1764 = vmatprep.subr.mxu0 0.0
        %1765 = vmatpush1.msra.mxu0 %v286
        %1766 = vmatprep.subr.mxu0 0.0
        %1767 = vmatpush1.msra.mxu0 %v287
        %1768 = vmatprep.subr.mxu0 0.0
        %1769 = vmatpush1.msra.mxu0 %v288
        %1770 = vmatprep.subr.mxu0 0.0
        %1771 = vmatpush1.msra.mxu0 %v289
        %1772 = vmatprep.subr.mxu0 0.0
        %1773 = vmatpush1.msra.mxu0 %v290
        %1774 = vmatprep.subr.mxu0 0.0
        %1775 = vmatpush1.msra.mxu0 %v291
        %1776 = vmatprep.subr.mxu0 0.0
        %1777 = vmatpush1.msra.mxu0 %v292
        %1778 = vmatprep.subr.mxu0 0.0
        %1779 = vmatpush1.msra.mxu0 %v293
        %1780 = vmatprep.subr.mxu0 0.0
        %1781 = vmatpush1.msra.mxu0 %v294
        %1782 = vmatprep.subr.mxu0 0.0
        %1783 = vmatpush1.msra.mxu0 %v295
        %1784 = vmatprep.subr.mxu0 0.0
        %1785 = vmatpush1.msra.mxu0 %v296
        %1786 = vmatprep.subr.mxu0 0.0
        %1787 = vmatpush1.msra.mxu0 %v297
        %1788 = vmatprep.subr.mxu0 0.0
        %1789 = vmatpush1.msra.mxu0 %v298
        %1790 = vmatprep.subr.mxu0 0.0
        %1791 = vmatpush1.msra.mxu0 %v299
        %1792 = vmatprep.subr.mxu0 0.0
        %1793 = vmatpush1.msra.mxu0 %v300
        %1794 = vmatprep.subr.mxu0 0.0
        %1795 = vmatpush1.msra.mxu0 %v301
        %1796 = vmatprep.subr.mxu0 0.0
        %1797 = vmatpush1.msra.mxu0 %v302
        %1798 = vmatprep.subr.mxu0 0.0
        %1799 = vmatpush1.msra.mxu0 %v303
        %1800 = vmatprep.subr.mxu0 0.0
        %1801 = vmatpush1.msra.mxu0 %v304
        %1802 = vmatprep.subr.mxu0 0.0
        %1803 = vmatpush1.msra.mxu0 0.0
        %1804 = vmatprep.subr.mxu0 0.0
        %1805 = vmatpush1.msra.mxu0 0.0
        %1806 = vmatprep.subr.mxu0 0.0
        %1807 = vmatpush1.msra.mxu0 0.0
        %1808 = vmatprep.subr.mxu0 0.0
        %1809 = vmatpush1.msra.mxu0 0.0
        %1810 = vmatprep.mubr.f32.mxu0 %v1732
        %1811 = vmatmul.mubr.f32.gmra.mrb[0].mxu0 %v1721
        %v1812 = vpop.f32.mrb[0].mxu0
        %v1813 = vadd.f32 0.0, %v1812
        %v1814 = vpop.f32.mrb[0].mxu0
        %1815 = vmatprep.mubr.f32.mxu0 %v1735
        %1816 = vmatmul.mubr.f32.gmra.mrb[0].mxu0 %v1723
        %v1817 = vpop.f32.mrb[0].mxu0
        %v1818 = vadd.f32 0.0, %v1817
        %v1819 = vpop.f32.mrb[0].mxu0
        %1820 = vmatprep.mubr.f32.mxu0 %v1738
        %1821 = vmatmul.mubr.f32.gmra.mrb[0].mxu0 %v1725
        %v1822 = vpop.f32.mrb[0].mxu0
        %v1823 = vadd.f32 0.0, %v1822
        %v1824 = vpop.f32.mrb[0].mxu0
        %1825 = vmatprep.mubr.f32.mxu0 %v1741
        %1826 = vmatmul.mubr.f32.gmra.mrb[0].mxu0 %v1727
        %v1827 = vpop.f32.mrb[0].mxu0
        %v1828 = vadd.f32 0.0, %v1827
        %v1829 = vpop.f32.mrb[0].mxu0
        %1830 = vmatprep.mubr.f32.mxu0 %v1744
        %1831 = vmatmul.mubr.f32.gmra.mrb[0].mxu0 %v1729
        %v1832 = vpop.f32.mrb[0].mxu0
        %v1833 = vadd.f32 0.0, %v1832
        %v1834 = vpop.f32.mrb[0].mxu0
        %1835 = vdwg.mxu0
        %s1836 = scalar_lea.vmem %s3, 16
        %v1837 = vld [vmem:[%s1836] sm:$0xff]
        %s1838 = scalar_lea.vmem %s4, 2
        %v1839 = vld [vmem:[%s1838] sm:$0x1]
        %v1841 = vlaneseq
        %v1842 = vshrl.u32 %v1841, 7
        %v1843 = vsub.s32 0, %v1842
        %v1844 = vrot.slane %v1839, %v1843
        %v1847 = vsel %vm570, %v1813, 0
        %v1850 = vsel %vm570, %v1818, 0
        %v1853 = vsel %vm570, %v1823, 0
        %v1856 = vsel %vm570, %v1828, 0
        %v1859 = vsel %vm570, %v1833, 0
        %1861 = vmatprep.subr.mxu0 0.0
        %1862 = vmatpush1.msra.mxu0 %v1837
        %1863 = vmatprep.subr.mxu0 0.0
        %1864 = vmatpush1.msra.mxu0 0.0
        %1865 = vmatprep.subr.mxu0 0.0
        %1866 = vmatpush1.msra.mxu0 0.0
        %1867 = vmatprep.subr.mxu0 0.0
        %1868 = vmatpush1.msra.mxu0 0.0
        %1869 = vmatprep.subr.mxu0 0.0
        %1870 = vmatpush1.msra.mxu0 0.0
        %1871 = vmatprep.subr.mxu0 0.0
        %1872 = vmatpush1.msra.mxu0 0.0
        %1873 = vmatprep.subr.mxu0 0.0
        %1874 = vmatpush1.msra.mxu0 0.0
        %1875 = vmatprep.subr.mxu0 0.0
        %1876 = vmatpush1.msra.mxu0 0.0
        %1877 = vmatprep.subr.mxu0 0.0
        %1878 = vmatpush1.msra.mxu0 0.0
        %1879 = vmatprep.subr.mxu0 0.0
        %1880 = vmatpush1.msra.mxu0 0.0
        %1881 = vmatprep.subr.mxu0 0.0
        %1882 = vmatpush1.msra.mxu0 0.0
        %1883 = vmatprep.subr.mxu0 0.0
        %1884 = vmatpush1.msra.mxu0 0.0
        %1885 = vmatprep.subr.mxu0 0.0
        %1886 = vmatpush1.msra.mxu0 0.0
        %1887 = vmatprep.subr.mxu0 0.0
        %1888 = vmatpush1.msra.mxu0 0.0
        %1889 = vmatprep.subr.mxu0 0.0
        %1890 = vmatpush1.msra.mxu0 0.0
        %1891 = vmatprep.subr.mxu0 0.0
        %1892 = vmatpush1.msra.mxu0 0.0
        %1893 = vmatprep.subr.mxu0 0.0
        %1894 = vmatpush1.msra.mxu0 0.0
        %1895 = vmatprep.subr.mxu0 0.0
        %1896 = vmatpush1.msra.mxu0 0.0
        %1897 = vmatprep.subr.mxu0 0.0
        %1898 = vmatpush1.msra.mxu0 0.0
        %1899 = vmatprep.subr.mxu0 0.0
        %1900 = vmatpush1.msra.mxu0 0.0
        %1901 = vmatprep.subr.mxu0 0.0
        %1902 = vmatpush1.msra.mxu0 0.0
        %1903 = vmatprep.subr.mxu0 0.0
        %1904 = vmatpush1.msra.mxu0 0.0
        %1905 = vmatprep.subr.mxu0 0.0
        %1906 = vmatpush1.msra.mxu0 0.0
        %1907 = vmatprep.subr.mxu0 0.0
        %1908 = vmatpush1.msra.mxu0 0.0
        %1909 = vmatprep.subr.mxu0 0.0
        %1910 = vmatpush1.msra.mxu0 0.0
        %1911 = vmatprep.subr.mxu0 0.0
        %1912 = vmatpush1.msra.mxu0 0.0
        %1913 = vmatprep.subr.mxu0 0.0
        %1914 = vmatpush1.msra.mxu0 0.0
        %1915 = vmatprep.subr.mxu0 0.0
        %1916 = vmatpush1.msra.mxu0 0.0
        %1917 = vmatprep.subr.mxu0 0.0
        %1918 = vmatpush1.msra.mxu0 0.0
        %1919 = vmatprep.subr.mxu0 0.0
        %1920 = vmatpush1.msra.mxu0 0.0
        %1921 = vmatprep.subr.mxu0 0.0
        %1922 = vmatpush1.msra.mxu0 0.0
        %1923 = vmatprep.subr.mxu0 0.0
        %1924 = vmatpush1.msra.mxu0 0.0
        %1925 = vmatprep.mubr.f32.mxu0 0.0
        %1926 = vmatmul.mubr.f32.gmra.mrb[0].mxu0 %v1847
        %v1927 = vpop.f32.mrb[0].mxu0
        %v1928 = vadd.f32 %v1844, %v1927
        %v1929 = vpop.f32.mrb[0].mxu0
        %1930 = vmatprep.mubr.f32.mxu0 0.0
        %1931 = vmatmul.mubr.f32.gmra.mrb[0].mxu0 %v1850
        %v1932 = vpop.f32.mrb[0].mxu0
        %v1933 = vadd.f32 %v1844, %v1932
        %v1934 = vpop.f32.mrb[0].mxu0
        %1935 = vmatprep.mubr.f32.mxu0 0.0
        %1936 = vmatmul.mubr.f32.gmra.mrb[0].mxu0 %v1853
        %v1937 = vpop.f32.mrb[0].mxu0
        %v1938 = vadd.f32 %v1844, %v1937
        %v1939 = vpop.f32.mrb[0].mxu0
        %1940 = vmatprep.mubr.f32.mxu0 0.0
        %1941 = vmatmul.mubr.f32.gmra.mrb[0].mxu0 %v1856
        %v1942 = vpop.f32.mrb[0].mxu0
        %v1943 = vadd.f32 %v1844, %v1942
        %v1944 = vpop.f32.mrb[0].mxu0
        %1945 = vmatprep.mubr.f32.mxu0 0.0
        %1946 = vmatmul.mubr.f32.gmra.mrb[0].mxu0 %v1859
        %v1947 = vpop.f32.mrb[0].mxu0
        %v1948 = vadd.f32 %v1844, %v1947
        %v1949 = vpop.f32.mrb[0].mxu0
        %1950 = vdwg.mxu0
        %s1951 = scalar_lea.vmem %s2, 448
        %v1952 = vld [vmem:[%s1951] sm:$0xff]
        %v1953 = vld [vmem:[%s1951 + $0x8] sm:$0xff]
        %v1954 = vld [vmem:[%s1951 + $0x10] sm:$0xff]
        %v1955 = vld [vmem:[%s1951 + $0x18] sm:$0xff]
        %v1956 = vld [vmem:[%s1951 + $0x20] sm:$0xff]
        %v1957 = vld [vmem:[%s1951 + $0x28] sm:$0xff]
        %v1958 = vld [vmem:[%s1951 + $0x30] sm:$0xff]
        %v1959 = vld [vmem:[%s1951 + $0x38] sm:$0xff]
        %v1960 = vld [vmem:[%s1951 + $0x40] sm:$0xff]
        %v1961 = vld [vmem:[%s1951 + $0x48] sm:$0xff]
        %v1962 = vld [vmem:[%s1951 + $0x50] sm:$0xff]
        %v1963 = vld [vmem:[%s1951 + $0x58] sm:$0xff]
        %v1964 = vld [vmem:[%s1951 + $0x60] sm:$0xff]
        %v1965 = vld [vmem:[%s1951 + $0x68] sm:$0xff]
        %v1966 = vld [vmem:[%s1951 + $0x70] sm:$0xff]
        %v1967 = vld [vmem:[%s1951 + $0x78] sm:$0xff]
        %v1968 = vld [vmem:[%s1951 + $0x80] sm:$0xff]
        %v1969 = vld [vmem:[%s1951 + $0x88] sm:$0xff]
        %v1970 = vld [vmem:[%s1951 + $0x90] sm:$0xff]
        %v1971 = vld [vmem:[%s1951 + $0x98] sm:$0xff]
        %v1972 = vld [vmem:[%s1951 + $0xa0] sm:$0xff]
        %v1973 = vld [vmem:[%s1951 + $0xa8] sm:$0xff]
        %v1974 = vld [vmem:[%s1951 + $0xb0] sm:$0xff]
        %v1975 = vld [vmem:[%s1951 + $0xb8] sm:$0xff]
        %v1976 = vld [vmem:[%s1951 + $0xc0] sm:$0xff]
        %v1977 = vld [vmem:[%s1951 + $0xc8] sm:$0xff]
        %v1978 = vld [vmem:[%s1951 + $0xd0] sm:$0xff]
        %v1979 = vld [vmem:[%s1951 + $0xd8] sm:$0xff]
        %v1981 = vsel %vm704, %v1952, 0
        %v1984 = vsel %vm704, %v1953, 0
        %v1987 = vsel %vm704, %v1954, 0
        %v1990 = vsel %vm704, %v1955, 0
        %v1993 = vsel %vm704, %v1956, 0
        %v1996 = vsel %vm704, %v1957, 0
        %v1999 = vsel %vm704, %v1958, 0
        %v2002 = vsel %vm704, %v1959, 0
        %v2005 = vsel %vm704, %v1960, 0
        %v2008 = vsel %vm704, %v1961, 0
        %v2011 = vsel %vm704, %v1962, 0
        %v2014 = vsel %vm704, %v1963, 0
        %v2017 = vsel %vm704, %v1964, 0
        %v2020 = vsel %vm704, %v1965, 0
        %v2023 = vsel %vm704, %v1966, 0
        %v2026 = vsel %vm704, %v1967, 0
        %v2029 = vsel %vm704, %v1968, 0
        %v2032 = vsel %vm704, %v1969, 0
        %v2035 = vsel %vm704, %v1970, 0
        %v2038 = vsel %vm704, %v1971, 0
        %v2041 = vsel %vm704, %v1972, 0
        %v2044 = vsel %vm704, %v1973, 0
        %v2047 = vsel %vm704, %v1974, 0
        %v2050 = vsel %vm704, %v1975, 0
        %v2053 = vsel %vm704, %v1976, 0
        %v2056 = vsel %vm704, %v1977, 0
        %v2059 = vsel %vm704, %v1978, 0
        %v2062 = vsel %vm704, %v1979, 0
        %v2065 = vsel %vm789, %v1948, 0
        %2067 = vmatprep.subr.mxu0 0.0
        %2068 = vmatpush1.msra.mxu0 %v1928
        %2069 = vmatprep.subr.mxu0 0.0
        %2070 = vmatpush1.msra.mxu0 %v1933
        %2071 = vmatprep.subr.mxu0 0.0
        %2072 = vmatpush1.msra.mxu0 %v1938
        %2073 = vmatprep.subr.mxu0 0.0
        %2074 = vmatpush1.msra.mxu0 %v1943
        %2075 = vmatprep.subr.mxu0 0.0
        %2076 = vmatpush1.msra.mxu0 %v2065
        %2077 = vmatprep.subr.mxu0 0.0
        %2078 = vmatpush1.msra.mxu0 0.0
        %2079 = vmatprep.subr.mxu0 0.0
        %2080 = vmatpush1.msra.mxu0 0.0
        %2081 = vmatprep.subr.mxu0 0.0
        %2082 = vmatpush1.msra.mxu0 0.0
        %2083 = vmatprep.subr.mxu0 0.0
        %2084 = vmatpush1.msra.mxu0 0.0
        %2085 = vmatprep.subr.mxu0 0.0
        %2086 = vmatpush1.msra.mxu0 0.0
        %2087 = vmatprep.subr.mxu0 0.0
        %2088 = vmatpush1.msra.mxu0 0.0
        %2089 = vmatprep.subr.mxu0 0.0
        %2090 = vmatpush1.msra.mxu0 0.0
        %2091 = vmatprep.subr.mxu0 0.0
        %2092 = vmatpush1.msra.mxu0 0.0
        %2093 = vmatprep.subr.mxu0 0.0
        %2094 = vmatpush1.msra.mxu0 0.0
        %2095 = vmatprep.subr.mxu0 0.0
        %2096 = vmatpush1.msra.mxu0 0.0
        %2097 = vmatprep.subr.mxu0 0.0
        %2098 = vmatpush1.msra.mxu0 0.0
        %2099 = vmatprep.subr.mxu0 0.0
        %2100 = vmatpush1.msra.mxu0 0.0
        %2101 = vmatprep.subr.mxu0 0.0
        %2102 = vmatpush1.msra.mxu0 0.0
        %2103 = vmatprep.subr.mxu0 0.0
        %2104 = vmatpush1.msra.mxu0 0.0
        %2105 = vmatprep.subr.mxu0 0.0
        %2106 = vmatpush1.msra.mxu0 0.0
        %2107 = vmatprep.subr.mxu0 0.0
        %2108 = vmatpush1.msra.mxu0 0.0
        %2109 = vmatprep.subr.mxu0 0.0
        %2110 = vmatpush1.msra.mxu0 0.0
        %2111 = vmatprep.subr.mxu0 0.0
        %2112 = vmatpush1.msra.mxu0 0.0
        %2113 = vmatprep.subr.mxu0 0.0
        %2114 = vmatpush1.msra.mxu0 0.0
        %2115 = vmatprep.subr.mxu0 0.0
        %2116 = vmatpush1.msra.mxu0 0.0
        %2117 = vmatprep.subr.mxu0 0.0
        %2118 = vmatpush1.msra.mxu0 0.0
        %2119 = vmatprep.subr.mxu0 0.0
        %2120 = vmatpush1.msra.mxu0 0.0
        %2121 = vmatprep.subr.mxu0 0.0
        %2122 = vmatpush1.msra.mxu0 0.0
        %2123 = vmatprep.subr.mxu0 0.0
        %2124 = vmatpush1.msra.mxu0 0.0
        %2125 = vmatprep.subr.mxu0 0.0
        %2126 = vmatpush1.msra.mxu0 0.0
        %2127 = vmatprep.subr.mxu0 0.0
        %2128 = vmatpush1.msra.mxu0 0.0
        %2129 = vmatprep.subr.mxu0 0.0
        %2130 = vmatpush1.msra.mxu0 0.0
        %2131 = vmatprep.mubr.f32.mxu0 0.0
        %2132 = vmatmul.mubr.f32.gmra.mrb[0].mxu0 %v1981
        %v2133 = vpop.f32.mrb[0].mxu0
        %v2134 = vadd.f32 0.0, %v2133
        %v2135 = vpop.f32.mrb[0].mxu0
        %2136 = vmatprep.mubr.f32.mxu0 0.0
        %2137 = vmatmul.mubr.f32.gmra.mrb[0].mxu0 %v1984
        %v2138 = vpop.f32.mrb[0].mxu0
        %v2139 = vadd.f32 0.0, %v2138
        %v2140 = vpop.f32.mrb[0].mxu0
        %2141 = vmatprep.mubr.f32.mxu0 0.0
        %2142 = vmatmul.mubr.f32.gmra.mrb[0].mxu0 %v1987
        %v2143 = vpop.f32.mrb[0].mxu0
        %v2144 = vadd.f32 0.0, %v2143
        %v2145 = vpop.f32.mrb[0].mxu0
        %2146 = vmatprep.mubr.f32.mxu0 0.0
        %2147 = vmatmul.mubr.f32.gmra.mrb[0].mxu0 %v1990
        %v2148 = vpop.f32.mrb[0].mxu0
        %v2149 = vadd.f32 0.0, %v2148
        %v2150 = vpop.f32.mrb[0].mxu0
        %2151 = vmatprep.mubr.f32.mxu0 0.0
        %2152 = vmatmul.mubr.f32.gmra.mrb[0].mxu0 %v1993
        %v2153 = vpop.f32.mrb[0].mxu0
        %v2154 = vadd.f32 0.0, %v2153
        %v2155 = vpop.f32.mrb[0].mxu0
        %2156 = vmatprep.mubr.f32.mxu0 0.0
        %2157 = vmatmul.mubr.f32.gmra.mrb[0].mxu0 %v1996
        %v2158 = vpop.f32.mrb[0].mxu0
        %v2159 = vadd.f32 0.0, %v2158
        %v2160 = vpop.f32.mrb[0].mxu0
        %2161 = vmatprep.mubr.f32.mxu0 0.0
        %2162 = vmatmul.mubr.f32.gmra.mrb[0].mxu0 %v1999
        %v2163 = vpop.f32.mrb[0].mxu0
        %v2164 = vadd.f32 0.0, %v2163
        %v2165 = vpop.f32.mrb[0].mxu0
        %2166 = vmatprep.mubr.f32.mxu0 0.0
        %2167 = vmatmul.mubr.f32.gmra.mrb[0].mxu0 %v2002
        %v2168 = vpop.f32.mrb[0].mxu0
        %v2169 = vadd.f32 0.0, %v2168
        %v2170 = vpop.f32.mrb[0].mxu0
        %2171 = vmatprep.mubr.f32.mxu0 0.0
        %2172 = vmatmul.mubr.f32.gmra.mrb[0].mxu0 %v2005
        %v2173 = vpop.f32.mrb[0].mxu0
        %v2174 = vadd.f32 0.0, %v2173
        %v2175 = vpop.f32.mrb[0].mxu0
        %2176 = vmatprep.mubr.f32.mxu0 0.0
        %2177 = vmatmul.mubr.f32.gmra.mrb[0].mxu0 %v2008
        %v2178 = vpop.f32.mrb[0].mxu0
        %v2179 = vadd.f32 0.0, %v2178
        %v2180 = vpop.f32.mrb[0].mxu0
        %2181 = vmatprep.mubr.f32.mxu0 0.0
        %2182 = vmatmul.mubr.f32.gmra.mrb[0].mxu0 %v2011
        %v2183 = vpop.f32.mrb[0].mxu0
        %v2184 = vadd.f32 0.0, %v2183
        %v2185 = vpop.f32.mrb[0].mxu0
        %2186 = vmatprep.mubr.f32.mxu0 0.0
        %2187 = vmatmul.mubr.f32.gmra.mrb[0].mxu0 %v2014
        %v2188 = vpop.f32.mrb[0].mxu0
        %v2189 = vadd.f32 0.0, %v2188
        %v2190 = vpop.f32.mrb[0].mxu0
        %2191 = vmatprep.mubr.f32.mxu0 0.0
        %2192 = vmatmul.mubr.f32.gmra.mrb[0].mxu0 %v2017
        %v2193 = vpop.f32.mrb[0].mxu0
        %v2194 = vadd.f32 0.0, %v2193
        %v2195 = vpop.f32.mrb[0].mxu0
        %2196 = vmatprep.mubr.f32.mxu0 0.0
        %2197 = vmatmul.mubr.f32.gmra.mrb[0].mxu0 %v2020
        %v2198 = vpop.f32.mrb[0].mxu0
        %v2199 = vadd.f32 0.0, %v2198
        %v2200 = vpop.f32.mrb[0].mxu0
        %2201 = vmatprep.mubr.f32.mxu0 0.0
        %2202 = vmatmul.mubr.f32.gmra.mrb[0].mxu0 %v2023
        %v2203 = vpop.f32.mrb[0].mxu0
        %v2204 = vadd.f32 0.0, %v2203
        %v2205 = vpop.f32.mrb[0].mxu0
        %2206 = vmatprep.mubr.f32.mxu0 0.0
        %2207 = vmatmul.mubr.f32.gmra.mrb[0].mxu0 %v2026
        %v2208 = vpop.f32.mrb[0].mxu0
        %v2209 = vadd.f32 0.0, %v2208
        %v2210 = vpop.f32.mrb[0].mxu0
        %2211 = vmatprep.mubr.f32.mxu0 0.0
        %2212 = vmatmul.mubr.f32.gmra.mrb[0].mxu0 %v2029
        %v2213 = vpop.f32.mrb[0].mxu0
        %v2214 = vadd.f32 0.0, %v2213
        %v2215 = vpop.f32.mrb[0].mxu0
        %2216 = vmatprep.mubr.f32.mxu0 0.0
        %2217 = vmatmul.mubr.f32.gmra.mrb[0].mxu0 %v2032
        %v2218 = vpop.f32.mrb[0].mxu0
        %v2219 = vadd.f32 0.0, %v2218
        %v2220 = vpop.f32.mrb[0].mxu0
        %2221 = vmatprep.mubr.f32.mxu0 0.0
        %2222 = vmatmul.mubr.f32.gmra.mrb[0].mxu0 %v2035
        %v2223 = vpop.f32.mrb[0].mxu0
        %v2224 = vadd.f32 0.0, %v2223
        %v2225 = vpop.f32.mrb[0].mxu0
        %2226 = vmatprep.mubr.f32.mxu0 0.0
        %2227 = vmatmul.mubr.f32.gmra.mrb[0].mxu0 %v2038
        %v2228 = vpop.f32.mrb[0].mxu0
        %v2229 = vadd.f32 0.0, %v2228
        %v2230 = vpop.f32.mrb[0].mxu0
        %2231 = vmatprep.mubr.f32.mxu0 0.0
        %2232 = vmatmul.mubr.f32.gmra.mrb[0].mxu0 %v2041
        %v2233 = vpop.f32.mrb[0].mxu0
        %v2234 = vadd.f32 0.0, %v2233
        %v2235 = vpop.f32.mrb[0].mxu0
        %2236 = vmatprep.mubr.f32.mxu0 0.0
        %2237 = vmatmul.mubr.f32.gmra.mrb[0].mxu0 %v2044
        %v2238 = vpop.f32.mrb[0].mxu0
        %v2239 = vadd.f32 0.0, %v2238
        %v2240 = vpop.f32.mrb[0].mxu0
        %2241 = vmatprep.mubr.f32.mxu0 0.0
        %2242 = vmatmul.mubr.f32.gmra.mrb[0].mxu0 %v2047
        %v2243 = vpop.f32.mrb[0].mxu0
        %v2244 = vadd.f32 0.0, %v2243
        %v2245 = vpop.f32.mrb[0].mxu0
        %2246 = vmatprep.mubr.f32.mxu0 0.0
        %2247 = vmatmul.mubr.f32.gmra.mrb[0].mxu0 %v2050
        %v2248 = vpop.f32.mrb[0].mxu0
        %v2249 = vadd.f32 0.0, %v2248
        %v2250 = vpop.f32.mrb[0].mxu0
        %2251 = vmatprep.mubr.f32.mxu0 0.0
        %2252 = vmatmul.mubr.f32.gmra.mrb[0].mxu0 %v2053
        %v2253 = vpop.f32.mrb[0].mxu0
        %v2254 = vadd.f32 0.0, %v2253
        %v2255 = vpop.f32.mrb[0].mxu0
        %2256 = vmatprep.mubr.f32.mxu0 0.0
        %2257 = vmatmul.mubr.f32.gmra.mrb[0].mxu0 %v2056
        %v2258 = vpop.f32.mrb[0].mxu0
        %v2259 = vadd.f32 0.0, %v2258
        %v2260 = vpop.f32.mrb[0].mxu0
        %2261 = vmatprep.mubr.f32.mxu0 0.0
        %2262 = vmatmul.mubr.f32.gmra.mrb[0].mxu0 %v2059
        %v2263 = vpop.f32.mrb[0].mxu0
        %v2264 = vadd.f32 0.0, %v2263
        %v2265 = vpop.f32.mrb[0].mxu0
        %2266 = vmatprep.mubr.f32.mxu0 0.0
        %2267 = vmatmul.mubr.f32.gmra.mrb[0].mxu0 %v2062
        %v2268 = vpop.f32.mrb[0].mxu0
        %v2269 = vadd.f32 0.0, %v2268
        %v2270 = vpop.f32.mrb[0].mxu0
        %2271 = vdwg.mxu0
        %2300 = vrot.lane.b32.xlu0 %v2134, 32
        %v2301 = vpop.permute.xlu0 %2300
        %2302 = vrot.lane.b32.xlu0 %v2139, 32
        %v2303 = vpop.permute.xlu0 %2302
        %2304 = vrot.lane.b32.xlu0 %v2144, 32
        %v2305 = vpop.permute.xlu0 %2304
        %2306 = vrot.lane.b32.xlu0 %v2149, 32
        %v2307 = vpop.permute.xlu0 %2306
        %2308 = vrot.lane.b32.xlu0 %v2154, 32
        %v2309 = vpop.permute.xlu0 %2308
        %2310 = vrot.lane.b32.xlu0 %v2159, 32
        %v2311 = vpop.permute.xlu0 %2310
        %2312 = vrot.lane.b32.xlu0 %v2164, 32
        %v2313 = vpop.permute.xlu0 %2312
        %2314 = vrot.lane.b32.xlu0 %v2169, 32
        %v2315 = vpop.permute.xlu0 %2314
        %2316 = vrot.lane.b32.xlu0 %v2174, 32
        %v2317 = vpop.permute.xlu0 %2316
        %2318 = vrot.lane.b32.xlu0 %v2179, 32
        %v2319 = vpop.permute.xlu0 %2318
        %2320 = vrot.lane.b32.xlu0 %v2184, 32
        %v2321 = vpop.permute.xlu0 %2320
        %2322 = vrot.lane.b32.xlu0 %v2189, 32
        %v2323 = vpop.permute.xlu0 %2322
        %2324 = vrot.lane.b32.xlu0 %v2194, 32
        %v2325 = vpop.permute.xlu0 %2324
        %2326 = vrot.lane.b32.xlu0 %v2199, 32
        %v2327 = vpop.permute.xlu0 %2326
        %2328 = vrot.lane.b32.xlu0 %v2204, 32
        %v2329 = vpop.permute.xlu0 %2328
        %2330 = vrot.lane.b32.xlu0 %v2209, 32
        %v2331 = vpop.permute.xlu0 %2330
        %2332 = vrot.lane.b32.xlu0 %v2214, 32
        %v2333 = vpop.permute.xlu0 %2332
        %2334 = vrot.lane.b32.xlu0 %v2219, 32
        %v2335 = vpop.permute.xlu0 %2334
        %2336 = vrot.lane.b32.xlu0 %v2224, 32
        %v2337 = vpop.permute.xlu0 %2336
        %2338 = vrot.lane.b32.xlu0 %v2229, 32
        %v2339 = vpop.permute.xlu0 %2338
        %2340 = vrot.lane.b32.xlu0 %v2234, 32
        %v2341 = vpop.permute.xlu0 %2340
        %2342 = vrot.lane.b32.xlu0 %v2239, 32
        %v2343 = vpop.permute.xlu0 %2342
        %2344 = vrot.lane.b32.xlu0 %v2244, 32
        %v2345 = vpop.permute.xlu0 %2344
        %2346 = vrot.lane.b32.xlu0 %v2249, 32
        %v2347 = vpop.permute.xlu0 %2346
        %2348 = vrot.lane.b32.xlu0 %v2254, 32
        %v2349 = vpop.permute.xlu0 %2348
        %2350 = vrot.lane.b32.xlu0 %v2259, 32
        %v2351 = vpop.permute.xlu0 %2350
        %2352 = vrot.lane.b32.xlu0 %v2264, 32
        %v2353 = vpop.permute.xlu0 %2352
        %2354 = vrot.lane.b32.xlu0 %v2269, 32
        %v2355 = vpop.permute.xlu0 %2354
        %vm2384 = vcmask 392448
        %2385 = vst.msk [vmem:[#allocation2] sm:$0xff] %vm2384, %v2301
        %2386 = vst.msk [vmem:[#allocation2 + $0x8] sm:$0xff] %vm2384, %v2303
        %2387 = vst.msk [vmem:[#allocation2 + $0x10] sm:$0xff] %vm2384, %v2305
        %2388 = vst.msk [vmem:[#allocation2 + $0x18] sm:$0xff] %vm2384, %v2307
        %2389 = vst.msk [vmem:[#allocation2 + $0x20] sm:$0xff] %vm2384, %v2309
        %2390 = vst.msk [vmem:[#allocation2 + $0x28] sm:$0xff] %vm2384, %v2311
        %2391 = vst.msk [vmem:[#allocation2 + $0x30] sm:$0xff] %vm2384, %v2313
        %2392 = vst.msk [vmem:[#allocation2 + $0x38] sm:$0xff] %vm2384, %v2315
        %2393 = vst.msk [vmem:[#allocation2 + $0x40] sm:$0xff] %vm2384, %v2317
        %2394 = vst.msk [vmem:[#allocation2 + $0x48] sm:$0xff] %vm2384, %v2319
        %2395 = vst.msk [vmem:[#allocation2 + $0x50] sm:$0xff] %vm2384, %v2321
        %2396 = vst.msk [vmem:[#allocation2 + $0x58] sm:$0xff] %vm2384, %v2323
        %2397 = vst.msk [vmem:[#allocation2 + $0x60] sm:$0xff] %vm2384, %v2325
        %2398 = vst.msk [vmem:[#allocation2 + $0x68] sm:$0xff] %vm2384, %v2327
        %2399 = vst.msk [vmem:[#allocation2 + $0x70] sm:$0xff] %vm2384, %v2329
        %2400 = vst.msk [vmem:[#allocation2 + $0x78] sm:$0xff] %vm2384, %v2331
        %2401 = vst.msk [vmem:[#allocation2 + $0x80] sm:$0xff] %vm2384, %v2333
        %2402 = vst.msk [vmem:[#allocation2 + $0x88] sm:$0xff] %vm2384, %v2335
        %2403 = vst.msk [vmem:[#allocation2 + $0x90] sm:$0xff] %vm2384, %v2337
        %2404 = vst.msk [vmem:[#allocation2 + $0x98] sm:$0xff] %vm2384, %v2339
        %2405 = vst.msk [vmem:[#allocation2 + $0xa0] sm:$0xff] %vm2384, %v2341
        %2406 = vst.msk [vmem:[#allocation2 + $0xa8] sm:$0xff] %vm2384, %v2343
        %2407 = vst.msk [vmem:[#allocation2 + $0xb0] sm:$0xff] %vm2384, %v2345
        %2408 = vst.msk [vmem:[#allocation2 + $0xb8] sm:$0xff] %vm2384, %v2347
        %2409 = vst.msk [vmem:[#allocation2 + $0xc0] sm:$0xff] %vm2384, %v2349
        %2410 = vst.msk [vmem:[#allocation2 + $0xc8] sm:$0xff] %vm2384, %v2351
        %2411 = vst.msk [vmem:[#allocation2 + $0xd0] sm:$0xff] %vm2384, %v2353
        %2412 = vst.msk [vmem:[#allocation2 + $0xd8] sm:$0xff] %vm2384, %v2355
        %s2413 = scalar_lea.vmem %s1, 240
        %v2414 = vld [vmem:[%s2413] sm:$0xff]
        %v2415 = vld [vmem:[%s2413 + $0x8] sm:$0xff]
        %v2416 = vld [vmem:[%s2413 + $0x10] sm:$0xff]
        %v2417 = vld [vmem:[%s2413 + $0x18] sm:$0xff]
        %v2418 = vld [vmem:[%s2413 + $0x20] sm:$0xff]
        %v2419 = vld [vmem:[%s2413 + $0x28] sm:$0xff]
        %v2420 = vld [vmem:[%s2413 + $0x30] sm:$0xff]
        %v2421 = vld [vmem:[%s2413 + $0x38] sm:$0xff]
        %v2422 = vld [vmem:[%s2413 + $0x40] sm:$0xf]
        %v2423 = vld [vmem:[%s2413 + $0x48] sm:$0xf]
        %v2425 = vsel %vm456, %v2415, 0
        %v2428 = vsel %vm456, %v2417, 0
        %v2431 = vsel %vm456, %v2419, 0
        %v2434 = vsel %vm456, %v2421, 0
        %v2437 = vsel %vm456, %v2423, 0
        %2439 = vmatprep.subr.mxu0 0.0
        %2440 = vmatpush1.msra.mxu0 %v277
        %2441 = vmatprep.subr.mxu0 0.0
        %2442 = vmatpush1.msra.mxu0 %v278
        %2443 = vmatprep.subr.mxu0 0.0
        %2444 = vmatpush1.msra.mxu0 %v279
        %2445 = vmatprep.subr.mxu0 0.0
        %2446 = vmatpush1.msra.mxu0 %v280
        %2447 = vmatprep.subr.mxu0 0.0
        %2448 = vmatpush1.msra.mxu0 %v281
        %2449 = vmatprep.subr.mxu0 0.0
        %2450 = vmatpush1.msra.mxu0 %v282
        %2451 = vmatprep.subr.mxu0 0.0
        %2452 = vmatpush1.msra.mxu0 %v283
        %2453 = vmatprep.subr.mxu0 0.0
        %2454 = vmatpush1.msra.mxu0 %v284
        %2455 = vmatprep.subr.mxu0 0.0
        %2456 = vmatpush1.msra.mxu0 %v285
        %2457 = vmatprep.subr.mxu0 0.0
        %2458 = vmatpush1.msra.mxu0 %v286
        %2459 = vmatprep.subr.mxu0 0.0
        %2460 = vmatpush1.msra.mxu0 %v287
        %2461 = vmatprep.subr.mxu0 0.0
        %2462 = vmatpush1.msra.mxu0 %v288
        %2463 = vmatprep.subr.mxu0 0.0
        %2464 = vmatpush1.msra.mxu0 %v289
        %2465 = vmatprep.subr.mxu0 0.0
        %2466 = vmatpush1.msra.mxu0 %v290
        %2467 = vmatprep.subr.mxu0 0.0
        %2468 = vmatpush1.msra.mxu0 %v291
        %2469 = vmatprep.subr.mxu0 0.0
        %2470 = vmatpush1.msra.mxu0 %v292
        %2471 = vmatprep.subr.mxu0 0.0
        %2472 = vmatpush1.msra.mxu0 %v293
        %2473 = vmatprep.subr.mxu0 0.0
        %2474 = vmatpush1.msra.mxu0 %v294
        %2475 = vmatprep.subr.mxu0 0.0
        %2476 = vmatpush1.msra.mxu0 %v295
        %2477 = vmatprep.subr.mxu0 0.0
        %2478 = vmatpush1.msra.mxu0 %v296
        %2479 = vmatprep.subr.mxu0 0.0
        %2480 = vmatpush1.msra.mxu0 %v297
        %2481 = vmatprep.subr.mxu0 0.0
        %2482 = vmatpush1.msra.mxu0 %v298
        %2483 = vmatprep.subr.mxu0 0.0
        %2484 = vmatpush1.msra.mxu0 %v299
        %2485 = vmatprep.subr.mxu0 0.0
        %2486 = vmatpush1.msra.mxu0 %v300
        %2487 = vmatprep.subr.mxu0 0.0
        %2488 = vmatpush1.msra.mxu0 %v301
        %2489 = vmatprep.subr.mxu0 0.0
        %2490 = vmatpush1.msra.mxu0 %v302
        %2491 = vmatprep.subr.mxu0 0.0
        %2492 = vmatpush1.msra.mxu0 %v303
        %2493 = vmatprep.subr.mxu0 0.0
        %2494 = vmatpush1.msra.mxu0 %v304
        %2495 = vmatprep.subr.mxu0 0.0
        %2496 = vmatpush1.msra.mxu0 0.0
        %2497 = vmatprep.subr.mxu0 0.0
        %2498 = vmatpush1.msra.mxu0 0.0
        %2499 = vmatprep.subr.mxu0 0.0
        %2500 = vmatpush1.msra.mxu0 0.0
        %2501 = vmatprep.subr.mxu0 0.0
        %2502 = vmatpush1.msra.mxu0 0.0
        %2503 = vmatprep.mubr.f32.mxu0 %v2425
        %2504 = vmatmul.mubr.f32.gmra.mrb[0].mxu0 %v2414
        %v2505 = vpop.f32.mrb[0].mxu0
        %v2506 = vadd.f32 0.0, %v2505
        %v2507 = vpop.f32.mrb[0].mxu0
        %2508 = vmatprep.mubr.f32.mxu0 %v2428
        %2509 = vmatmul.mubr.f32.gmra.mrb[0].mxu0 %v2416
        %v2510 = vpop.f32.mrb[0].mxu0
        %v2511 = vadd.f32 0.0, %v2510
        %v2512 = vpop.f32.mrb[0].mxu0
        %2513 = vmatprep.mubr.f32.mxu0 %v2431
        %2514 = vmatmul.mubr.f32.gmra.mrb[0].mxu0 %v2418
        %v2515 = vpop.f32.mrb[0].mxu0
        %v2516 = vadd.f32 0.0, %v2515
        %v2517 = vpop.f32.mrb[0].mxu0
        %2518 = vmatprep.mubr.f32.mxu0 %v2434
        %2519 = vmatmul.mubr.f32.gmra.mrb[0].mxu0 %v2420
        %v2520 = vpop.f32.mrb[0].mxu0
        %v2521 = vadd.f32 0.0, %v2520
        %v2522 = vpop.f32.mrb[0].mxu0
        %2523 = vmatprep.mubr.f32.mxu0 %v2437
        %2524 = vmatmul.mubr.f32.gmra.mrb[0].mxu0 %v2422
        %v2525 = vpop.f32.mrb[0].mxu0
        %v2526 = vadd.f32 0.0, %v2525
        %v2527 = vpop.f32.mrb[0].mxu0
        %2528 = vdwg.mxu0
        %s2529 = scalar_lea.vmem %s3, 24
        %v2530 = vld [vmem:[%s2529] sm:$0xff]
        %s2531 = scalar_lea.vmem %s4, 3
        %v2532 = vld [vmem:[%s2531] sm:$0x1]
        %v2534 = vlaneseq
        %v2535 = vshrl.u32 %v2534, 7
        %v2536 = vsub.s32 0, %v2535
        %v2537 = vrot.slane %v2532, %v2536
        %v2540 = vsel %vm570, %v2506, 0
        %v2543 = vsel %vm570, %v2511, 0
        %v2546 = vsel %vm570, %v2516, 0
        %v2549 = vsel %vm570, %v2521, 0
        %v2552 = vsel %vm570, %v2526, 0
        %2554 = vmatprep.subr.mxu0 0.0
        %2555 = vmatpush1.msra.mxu0 %v2530
        %2556 = vmatprep.subr.mxu0 0.0
        %2557 = vmatpush1.msra.mxu0 0.0
        %2558 = vmatprep.subr.mxu0 0.0
        %2559 = vmatpush1.msra.mxu0 0.0
        %2560 = vmatprep.subr.mxu0 0.0
        %2561 = vmatpush1.msra.mxu0 0.0
        %2562 = vmatprep.subr.mxu0 0.0
        %2563 = vmatpush1.msra.mxu0 0.0
        %2564 = vmatprep.subr.mxu0 0.0
        %2565 = vmatpush1.msra.mxu0 0.0
        %2566 = vmatprep.subr.mxu0 0.0
        %2567 = vmatpush1.msra.mxu0 0.0
        %2568 = vmatprep.subr.mxu0 0.0
        %2569 = vmatpush1.msra.mxu0 0.0
        %2570 = vmatprep.subr.mxu0 0.0
        %2571 = vmatpush1.msra.mxu0 0.0
        %2572 = vmatprep.subr.mxu0 0.0
        %2573 = vmatpush1.msra.mxu0 0.0
        %2574 = vmatprep.subr.mxu0 0.0
        %2575 = vmatpush1.msra.mxu0 0.0
        %2576 = vmatprep.subr.mxu0 0.0
        %2577 = vmatpush1.msra.mxu0 0.0
        %2578 = vmatprep.subr.mxu0 0.0
        %2579 = vmatpush1.msra.mxu0 0.0
        %2580 = vmatprep.subr.mxu0 0.0
        %2581 = vmatpush1.msra.mxu0 0.0
        %2582 = vmatprep.subr.mxu0 0.0
        %2583 = vmatpush1.msra.mxu0 0.0
        %2584 = vmatprep.subr.mxu0 0.0
        %2585 = vmatpush1.msra.mxu0 0.0
        %2586 = vmatprep.subr.mxu0 0.0
        %2587 = vmatpush1.msra.mxu0 0.0
        %2588 = vmatprep.subr.mxu0 0.0
        %2589 = vmatpush1.msra.mxu0 0.0
        %2590 = vmatprep.subr.mxu0 0.0
        %2591 = vmatpush1.msra.mxu0 0.0
        %2592 = vmatprep.subr.mxu0 0.0
        %2593 = vmatpush1.msra.mxu0 0.0
        %2594 = vmatprep.subr.mxu0 0.0
        %2595 = vmatpush1.msra.mxu0 0.0
        %2596 = vmatprep.subr.mxu0 0.0
        %2597 = vmatpush1.msra.mxu0 0.0
        %2598 = vmatprep.subr.mxu0 0.0
        %2599 = vmatpush1.msra.mxu0 0.0
        %2600 = vmatprep.subr.mxu0 0.0
        %2601 = vmatpush1.msra.mxu0 0.0
        %2602 = vmatprep.subr.mxu0 0.0
        %2603 = vmatpush1.msra.mxu0 0.0
        %2604 = vmatprep.subr.mxu0 0.0
        %2605 = vmatpush1.msra.mxu0 0.0
        %2606 = vmatprep.subr.mxu0 0.0
        %2607 = vmatpush1.msra.mxu0 0.0
        %2608 = vmatprep.subr.mxu0 0.0
        %2609 = vmatpush1.msra.mxu0 0.0
        %2610 = vmatprep.subr.mxu0 0.0
        %2611 = vmatpush1.msra.mxu0 0.0
        %2612 = vmatprep.subr.mxu0 0.0
        %2613 = vmatpush1.msra.mxu0 0.0
        %2614 = vmatprep.subr.mxu0 0.0
        %2615 = vmatpush1.msra.mxu0 0.0
        %2616 = vmatprep.subr.mxu0 0.0
        %2617 = vmatpush1.msra.mxu0 0.0
        %2618 = vmatprep.mubr.f32.mxu0 0.0
        %2619 = vmatmul.mubr.f32.gmra.mrb[0].mxu0 %v2540
        %v2620 = vpop.f32.mrb[0].mxu0
        %v2621 = vadd.f32 %v2537, %v2620
        %v2622 = vpop.f32.mrb[0].mxu0
        %2623 = vmatprep.mubr.f32.mxu0 0.0
        %2624 = vmatmul.mubr.f32.gmra.mrb[0].mxu0 %v2543
        %v2625 = vpop.f32.mrb[0].mxu0
        %v2626 = vadd.f32 %v2537, %v2625
        %v2627 = vpop.f32.mrb[0].mxu0
        %2628 = vmatprep.mubr.f32.mxu0 0.0
        %2629 = vmatmul.mubr.f32.gmra.mrb[0].mxu0 %v2546
        %v2630 = vpop.f32.mrb[0].mxu0
        %v2631 = vadd.f32 %v2537, %v2630
        %v2632 = vpop.f32.mrb[0].mxu0
        %2633 = vmatprep.mubr.f32.mxu0 0.0
        %2634 = vmatmul.mubr.f32.gmra.mrb[0].mxu0 %v2549
        %v2635 = vpop.f32.mrb[0].mxu0
        %v2636 = vadd.f32 %v2537, %v2635
        %v2637 = vpop.f32.mrb[0].mxu0
        %2638 = vmatprep.mubr.f32.mxu0 0.0
        %2639 = vmatmul.mubr.f32.gmra.mrb[0].mxu0 %v2552
        %v2640 = vpop.f32.mrb[0].mxu0
        %v2641 = vadd.f32 %v2537, %v2640
        %v2642 = vpop.f32.mrb[0].mxu0
        %2643 = vdwg.mxu0
        %s2644 = scalar_lea.vmem %s2, 672
        %v2645 = vld [vmem:[%s2644] sm:$0xff]
        %v2646 = vld [vmem:[%s2644 + $0x8] sm:$0xff]
        %v2647 = vld [vmem:[%s2644 + $0x10] sm:$0xff]
        %v2648 = vld [vmem:[%s2644 + $0x18] sm:$0xff]
        %v2649 = vld [vmem:[%s2644 + $0x20] sm:$0xff]
        %v2650 = vld [vmem:[%s2644 + $0x28] sm:$0xff]
        %v2651 = vld [vmem:[%s2644 + $0x30] sm:$0xff]
        %v2652 = vld [vmem:[%s2644 + $0x38] sm:$0xff]
        %v2653 = vld [vmem:[%s2644 + $0x40] sm:$0xff]
        %v2654 = vld [vmem:[%s2644 + $0x48] sm:$0xff]
        %v2655 = vld [vmem:[%s2644 + $0x50] sm:$0xff]
        %v2656 = vld [vmem:[%s2644 + $0x58] sm:$0xff]
        %v2657 = vld [vmem:[%s2644 + $0x60] sm:$0xff]
        %v2658 = vld [vmem:[%s2644 + $0x68] sm:$0xff]
        %v2659 = vld [vmem:[%s2644 + $0x70] sm:$0xff]
        %v2660 = vld [vmem:[%s2644 + $0x78] sm:$0xff]
        %v2661 = vld [vmem:[%s2644 + $0x80] sm:$0xff]
        %v2662 = vld [vmem:[%s2644 + $0x88] sm:$0xff]
        %v2663 = vld [vmem:[%s2644 + $0x90] sm:$0xff]
        %v2664 = vld [vmem:[%s2644 + $0x98] sm:$0xff]
        %v2665 = vld [vmem:[%s2644 + $0xa0] sm:$0xff]
        %v2666 = vld [vmem:[%s2644 + $0xa8] sm:$0xff]
        %v2667 = vld [vmem:[%s2644 + $0xb0] sm:$0xff]
        %v2668 = vld [vmem:[%s2644 + $0xb8] sm:$0xff]
        %v2669 = vld [vmem:[%s2644 + $0xc0] sm:$0xff]
        %v2670 = vld [vmem:[%s2644 + $0xc8] sm:$0xff]
        %v2671 = vld [vmem:[%s2644 + $0xd0] sm:$0xff]
        %v2672 = vld [vmem:[%s2644 + $0xd8] sm:$0xff]
        %v2674 = vsel %vm704, %v2645, 0
        %v2677 = vsel %vm704, %v2646, 0
        %v2680 = vsel %vm704, %v2647, 0
        %v2683 = vsel %vm704, %v2648, 0
        %v2686 = vsel %vm704, %v2649, 0
        %v2689 = vsel %vm704, %v2650, 0
        %v2692 = vsel %vm704, %v2651, 0
        %v2695 = vsel %vm704, %v2652, 0
        %v2698 = vsel %vm704, %v2653, 0
        %v2701 = vsel %vm704, %v2654, 0
        %v2704 = vsel %vm704, %v2655, 0
        %v2707 = vsel %vm704, %v2656, 0
        %v2710 = vsel %vm704, %v2657, 0
        %v2713 = vsel %vm704, %v2658, 0
        %v2716 = vsel %vm704, %v2659, 0
        %v2719 = vsel %vm704, %v2660, 0
        %v2722 = vsel %vm704, %v2661, 0
        %v2725 = vsel %vm704, %v2662, 0
        %v2728 = vsel %vm704, %v2663, 0
        %v2731 = vsel %vm704, %v2664, 0
        %v2734 = vsel %vm704, %v2665, 0
        %v2737 = vsel %vm704, %v2666, 0
        %v2740 = vsel %vm704, %v2667, 0
        %v2743 = vsel %vm704, %v2668, 0
        %v2746 = vsel %vm704, %v2669, 0
        %v2749 = vsel %vm704, %v2670, 0
        %v2752 = vsel %vm704, %v2671, 0
        %v2755 = vsel %vm704, %v2672, 0
        %v2758 = vsel %vm789, %v2641, 0
        %2760 = vmatprep.subr.mxu0 0.0
        %2761 = vmatpush1.msra.mxu0 %v2621
        %2762 = vmatprep.subr.mxu0 0.0
        %2763 = vmatpush1.msra.mxu0 %v2626
        %2764 = vmatprep.subr.mxu0 0.0
        %2765 = vmatpush1.msra.mxu0 %v2631
        %2766 = vmatprep.subr.mxu0 0.0
        %2767 = vmatpush1.msra.mxu0 %v2636
        %2768 = vmatprep.subr.mxu0 0.0
        %2769 = vmatpush1.msra.mxu0 %v2758
        %2770 = vmatprep.subr.mxu0 0.0
        %2771 = vmatpush1.msra.mxu0 0.0
        %2772 = vmatprep.subr.mxu0 0.0
        %2773 = vmatpush1.msra.mxu0 0.0
        %2774 = vmatprep.subr.mxu0 0.0
        %2775 = vmatpush1.msra.mxu0 0.0
        %2776 = vmatprep.subr.mxu0 0.0
        %2777 = vmatpush1.msra.mxu0 0.0
        %2778 = vmatprep.subr.mxu0 0.0
        %2779 = vmatpush1.msra.mxu0 0.0
        %2780 = vmatprep.subr.mxu0 0.0
        %2781 = vmatpush1.msra.mxu0 0.0
        %2782 = vmatprep.subr.mxu0 0.0
        %2783 = vmatpush1.msra.mxu0 0.0
        %2784 = vmatprep.subr.mxu0 0.0
        %2785 = vmatpush1.msra.mxu0 0.0
        %2786 = vmatprep.subr.mxu0 0.0
        %2787 = vmatpush1.msra.mxu0 0.0
        %2788 = vmatprep.subr.mxu0 0.0
        %2789 = vmatpush1.msra.mxu0 0.0
        %2790 = vmatprep.subr.mxu0 0.0
        %2791 = vmatpush1.msra.mxu0 0.0
        %2792 = vmatprep.subr.mxu0 0.0
        %2793 = vmatpush1.msra.mxu0 0.0
        %2794 = vmatprep.subr.mxu0 0.0
        %2795 = vmatpush1.msra.mxu0 0.0
        %2796 = vmatprep.subr.mxu0 0.0
        %2797 = vmatpush1.msra.mxu0 0.0
        %2798 = vmatprep.subr.mxu0 0.0
        %2799 = vmatpush1.msra.mxu0 0.0
        %2800 = vmatprep.subr.mxu0 0.0
        %2801 = vmatpush1.msra.mxu0 0.0
        %2802 = vmatprep.subr.mxu0 0.0
        %2803 = vmatpush1.msra.mxu0 0.0
        %2804 = vmatprep.subr.mxu0 0.0
        %2805 = vmatpush1.msra.mxu0 0.0
        %2806 = vmatprep.subr.mxu0 0.0
        %2807 = vmatpush1.msra.mxu0 0.0
        %2808 = vmatprep.subr.mxu0 0.0
        %2809 = vmatpush1.msra.mxu0 0.0
        %2810 = vmatprep.subr.mxu0 0.0
        %2811 = vmatpush1.msra.mxu0 0.0
        %2812 = vmatprep.subr.mxu0 0.0
        %2813 = vmatpush1.msra.mxu0 0.0
        %2814 = vmatprep.subr.mxu0 0.0
        %2815 = vmatpush1.msra.mxu0 0.0
        %2816 = vmatprep.subr.mxu0 0.0
        %2817 = vmatpush1.msra.mxu0 0.0
        %2818 = vmatprep.subr.mxu0 0.0
        %2819 = vmatpush1.msra.mxu0 0.0
        %2820 = vmatprep.subr.mxu0 0.0
        %2821 = vmatpush1.msra.mxu0 0.0
        %2822 = vmatprep.subr.mxu0 0.0
        %2823 = vmatpush1.msra.mxu0 0.0
        %2824 = vmatprep.mubr.f32.mxu0 0.0
        %2825 = vmatmul.mubr.f32.gmra.mrb[0].mxu0 %v2674
        %v2826 = vpop.f32.mrb[0].mxu0
        %v2827 = vadd.f32 0.0, %v2826
        %v2828 = vpop.f32.mrb[0].mxu0
        %2829 = vmatprep.mubr.f32.mxu0 0.0
        %2830 = vmatmul.mubr.f32.gmra.mrb[0].mxu0 %v2677
        %v2831 = vpop.f32.mrb[0].mxu0
        %v2832 = vadd.f32 0.0, %v2831
        %v2833 = vpop.f32.mrb[0].mxu0
        %2834 = vmatprep.mubr.f32.mxu0 0.0
        %2835 = vmatmul.mubr.f32.gmra.mrb[0].mxu0 %v2680
        %v2836 = vpop.f32.mrb[0].mxu0
        %v2837 = vadd.f32 0.0, %v2836
        %v2838 = vpop.f32.mrb[0].mxu0
        %2839 = vmatprep.mubr.f32.mxu0 0.0
        %2840 = vmatmul.mubr.f32.gmra.mrb[0].mxu0 %v2683
        %v2841 = vpop.f32.mrb[0].mxu0
        %v2842 = vadd.f32 0.0, %v2841
        %v2843 = vpop.f32.mrb[0].mxu0
        %2844 = vmatprep.mubr.f32.mxu0 0.0
        %2845 = vmatmul.mubr.f32.gmra.mrb[0].mxu0 %v2686
        %v2846 = vpop.f32.mrb[0].mxu0
        %v2847 = vadd.f32 0.0, %v2846
        %v2848 = vpop.f32.mrb[0].mxu0
        %2849 = vmatprep.mubr.f32.mxu0 0.0
        %2850 = vmatmul.mubr.f32.gmra.mrb[0].mxu0 %v2689
        %v2851 = vpop.f32.mrb[0].mxu0
        %v2852 = vadd.f32 0.0, %v2851
        %v2853 = vpop.f32.mrb[0].mxu0
        %2854 = vmatprep.mubr.f32.mxu0 0.0
        %2855 = vmatmul.mubr.f32.gmra.mrb[0].mxu0 %v2692
        %v2856 = vpop.f32.mrb[0].mxu0
        %v2857 = vadd.f32 0.0, %v2856
        %v2858 = vpop.f32.mrb[0].mxu0
        %2859 = vmatprep.mubr.f32.mxu0 0.0
        %2860 = vmatmul.mubr.f32.gmra.mrb[0].mxu0 %v2695
        %v2861 = vpop.f32.mrb[0].mxu0
        %v2862 = vadd.f32 0.0, %v2861
        %v2863 = vpop.f32.mrb[0].mxu0
        %2864 = vmatprep.mubr.f32.mxu0 0.0
        %2865 = vmatmul.mubr.f32.gmra.mrb[0].mxu0 %v2698
        %v2866 = vpop.f32.mrb[0].mxu0
        %v2867 = vadd.f32 0.0, %v2866
        %v2868 = vpop.f32.mrb[0].mxu0
        %2869 = vmatprep.mubr.f32.mxu0 0.0
        %2870 = vmatmul.mubr.f32.gmra.mrb[0].mxu0 %v2701
        %v2871 = vpop.f32.mrb[0].mxu0
        %v2872 = vadd.f32 0.0, %v2871
        %v2873 = vpop.f32.mrb[0].mxu0
        %2874 = vmatprep.mubr.f32.mxu0 0.0
        %2875 = vmatmul.mubr.f32.gmra.mrb[0].mxu0 %v2704
        %v2876 = vpop.f32.mrb[0].mxu0
        %v2877 = vadd.f32 0.0, %v2876
        %v2878 = vpop.f32.mrb[0].mxu0
        %2879 = vmatprep.mubr.f32.mxu0 0.0
        %2880 = vmatmul.mubr.f32.gmra.mrb[0].mxu0 %v2707
        %v2881 = vpop.f32.mrb[0].mxu0
        %v2882 = vadd.f32 0.0, %v2881
        %v2883 = vpop.f32.mrb[0].mxu0
        %2884 = vmatprep.mubr.f32.mxu0 0.0
        %2885 = vmatmul.mubr.f32.gmra.mrb[0].mxu0 %v2710
        %v2886 = vpop.f32.mrb[0].mxu0
        %v2887 = vadd.f32 0.0, %v2886
        %v2888 = vpop.f32.mrb[0].mxu0
        %2889 = vmatprep.mubr.f32.mxu0 0.0
        %2890 = vmatmul.mubr.f32.gmra.mrb[0].mxu0 %v2713
        %v2891 = vpop.f32.mrb[0].mxu0
        %v2892 = vadd.f32 0.0, %v2891
        %v2893 = vpop.f32.mrb[0].mxu0
        %2894 = vmatprep.mubr.f32.mxu0 0.0
        %2895 = vmatmul.mubr.f32.gmra.mrb[0].mxu0 %v2716
        %v2896 = vpop.f32.mrb[0].mxu0
        %v2897 = vadd.f32 0.0, %v2896
        %v2898 = vpop.f32.mrb[0].mxu0
        %2899 = vmatprep.mubr.f32.mxu0 0.0
        %2900 = vmatmul.mubr.f32.gmra.mrb[0].mxu0 %v2719
        %v2901 = vpop.f32.mrb[0].mxu0
        %v2902 = vadd.f32 0.0, %v2901
        %v2903 = vpop.f32.mrb[0].mxu0
        %2904 = vmatprep.mubr.f32.mxu0 0.0
        %2905 = vmatmul.mubr.f32.gmra.mrb[0].mxu0 %v2722
        %v2906 = vpop.f32.mrb[0].mxu0
        %v2907 = vadd.f32 0.0, %v2906
        %v2908 = vpop.f32.mrb[0].mxu0
        %2909 = vmatprep.mubr.f32.mxu0 0.0
        %2910 = vmatmul.mubr.f32.gmra.mrb[0].mxu0 %v2725
        %v2911 = vpop.f32.mrb[0].mxu0
        %v2912 = vadd.f32 0.0, %v2911
        %v2913 = vpop.f32.mrb[0].mxu0
        %2914 = vmatprep.mubr.f32.mxu0 0.0
        %2915 = vmatmul.mubr.f32.gmra.mrb[0].mxu0 %v2728
        %v2916 = vpop.f32.mrb[0].mxu0
        %v2917 = vadd.f32 0.0, %v2916
        %v2918 = vpop.f32.mrb[0].mxu0
        %2919 = vmatprep.mubr.f32.mxu0 0.0
        %2920 = vmatmul.mubr.f32.gmra.mrb[0].mxu0 %v2731
        %v2921 = vpop.f32.mrb[0].mxu0
        %v2922 = vadd.f32 0.0, %v2921
        %v2923 = vpop.f32.mrb[0].mxu0
        %2924 = vmatprep.mubr.f32.mxu0 0.0
        %2925 = vmatmul.mubr.f32.gmra.mrb[0].mxu0 %v2734
        %v2926 = vpop.f32.mrb[0].mxu0
        %v2927 = vadd.f32 0.0, %v2926
        %v2928 = vpop.f32.mrb[0].mxu0
        %2929 = vmatprep.mubr.f32.mxu0 0.0
        %2930 = vmatmul.mubr.f32.gmra.mrb[0].mxu0 %v2737
        %v2931 = vpop.f32.mrb[0].mxu0
        %v2932 = vadd.f32 0.0, %v2931
        %v2933 = vpop.f32.mrb[0].mxu0
        %2934 = vmatprep.mubr.f32.mxu0 0.0
        %2935 = vmatmul.mubr.f32.gmra.mrb[0].mxu0 %v2740
        %v2936 = vpop.f32.mrb[0].mxu0
        %v2937 = vadd.f32 0.0, %v2936
        %v2938 = vpop.f32.mrb[0].mxu0
        %2939 = vmatprep.mubr.f32.mxu0 0.0
        %2940 = vmatmul.mubr.f32.gmra.mrb[0].mxu0 %v2743
        %v2941 = vpop.f32.mrb[0].mxu0
        %v2942 = vadd.f32 0.0, %v2941
        %v2943 = vpop.f32.mrb[0].mxu0
        %2944 = vmatprep.mubr.f32.mxu0 0.0
        %2945 = vmatmul.mubr.f32.gmra.mrb[0].mxu0 %v2746
        %v2946 = vpop.f32.mrb[0].mxu0
        %v2947 = vadd.f32 0.0, %v2946
        %v2948 = vpop.f32.mrb[0].mxu0
        %2949 = vmatprep.mubr.f32.mxu0 0.0
        %2950 = vmatmul.mubr.f32.gmra.mrb[0].mxu0 %v2749
        %v2951 = vpop.f32.mrb[0].mxu0
        %v2952 = vadd.f32 0.0, %v2951
        %v2953 = vpop.f32.mrb[0].mxu0
        %2954 = vmatprep.mubr.f32.mxu0 0.0
        %2955 = vmatmul.mubr.f32.gmra.mrb[0].mxu0 %v2752
        %v2956 = vpop.f32.mrb[0].mxu0
        %v2957 = vadd.f32 0.0, %v2956
        %v2958 = vpop.f32.mrb[0].mxu0
        %2959 = vmatprep.mubr.f32.mxu0 0.0
        %2960 = vmatmul.mubr.f32.gmra.mrb[0].mxu0 %v2755
        %v2961 = vpop.f32.mrb[0].mxu0
        %v2962 = vadd.f32 0.0, %v2961
        %v2963 = vpop.f32.mrb[0].mxu0
        %2964 = vdwg.mxu0
        %2993 = vrot.lane.b32.xlu0 %v2827, 48
        %v2994 = vpop.permute.xlu0 %2993
        %2995 = vrot.lane.b32.xlu0 %v2832, 48
        %v2996 = vpop.permute.xlu0 %2995
        %2997 = vrot.lane.b32.xlu0 %v2837, 48
        %v2998 = vpop.permute.xlu0 %2997
        %2999 = vrot.lane.b32.xlu0 %v2842, 48
        %v3000 = vpop.permute.xlu0 %2999
        %3001 = vrot.lane.b32.xlu0 %v2847, 48
        %v3002 = vpop.permute.xlu0 %3001
        %3003 = vrot.lane.b32.xlu0 %v2852, 48
        %v3004 = vpop.permute.xlu0 %3003
        %3005 = vrot.lane.b32.xlu0 %v2857, 48
        %v3006 = vpop.permute.xlu0 %3005
        %3007 = vrot.lane.b32.xlu0 %v2862, 48
        %v3008 = vpop.permute.xlu0 %3007
        %3009 = vrot.lane.b32.xlu0 %v2867, 48
        %v3010 = vpop.permute.xlu0 %3009
        %3011 = vrot.lane.b32.xlu0 %v2872, 48
        %v3012 = vpop.permute.xlu0 %3011
        %3013 = vrot.lane.b32.xlu0 %v2877, 48
        %v3014 = vpop.permute.xlu0 %3013
        %3015 = vrot.lane.b32.xlu0 %v2882, 48
        %v3016 = vpop.permute.xlu0 %3015
        %3017 = vrot.lane.b32.xlu0 %v2887, 48
        %v3018 = vpop.permute.xlu0 %3017
        %3019 = vrot.lane.b32.xlu0 %v2892, 48
        %v3020 = vpop.permute.xlu0 %3019
        %3021 = vrot.lane.b32.xlu0 %v2897, 48
        %v3022 = vpop.permute.xlu0 %3021
        %3023 = vrot.lane.b32.xlu0 %v2902, 48
        %v3024 = vpop.permute.xlu0 %3023
        %3025 = vrot.lane.b32.xlu0 %v2907, 48
        %v3026 = vpop.permute.xlu0 %3025
        %3027 = vrot.lane.b32.xlu0 %v2912, 48
        %v3028 = vpop.permute.xlu0 %3027
        %3029 = vrot.lane.b32.xlu0 %v2917, 48
        %v3030 = vpop.permute.xlu0 %3029
        %3031 = vrot.lane.b32.xlu0 %v2922, 48
        %v3032 = vpop.permute.xlu0 %3031
        %3033 = vrot.lane.b32.xlu0 %v2927, 48
        %v3034 = vpop.permute.xlu0 %3033
        %3035 = vrot.lane.b32.xlu0 %v2932, 48
        %v3036 = vpop.permute.xlu0 %3035
        %3037 = vrot.lane.b32.xlu0 %v2937, 48
        %v3038 = vpop.permute.xlu0 %3037
        %3039 = vrot.lane.b32.xlu0 %v2942, 48
        %v3040 = vpop.permute.xlu0 %3039
        %3041 = vrot.lane.b32.xlu0 %v2947, 48
        %v3042 = vpop.permute.xlu0 %3041
        %3043 = vrot.lane.b32.xlu0 %v2952, 48
        %v3044 = vpop.permute.xlu0 %3043
        %3045 = vrot.lane.b32.xlu0 %v2957, 48
        %v3046 = vpop.permute.xlu0 %3045
        %3047 = vrot.lane.b32.xlu0 %v2962, 48
        %v3048 = vpop.permute.xlu0 %3047
        %vm3077 = vcmask 523648
        %3078 = vst.msk [vmem:[#allocation2] sm:$0xff] %vm3077, %v2994
        %3079 = vst.msk [vmem:[#allocation2 + $0x8] sm:$0xff] %vm3077, %v2996
        %3080 = vst.msk [vmem:[#allocation2 + $0x10] sm:$0xff] %vm3077, %v2998
        %3081 = vst.msk [vmem:[#allocation2 + $0x18] sm:$0xff] %vm3077, %v3000
        %3082 = vst.msk [vmem:[#allocation2 + $0x20] sm:$0xff] %vm3077, %v3002
        %3083 = vst.msk [vmem:[#allocation2 + $0x28] sm:$0xff] %vm3077, %v3004
        %3084 = vst.msk [vmem:[#allocation2 + $0x30] sm:$0xff] %vm3077, %v3006
        %3085 = vst.msk [vmem:[#allocation2 + $0x38] sm:$0xff] %vm3077, %v3008
        %3086 = vst.msk [vmem:[#allocation2 + $0x40] sm:$0xff] %vm3077, %v3010
        %3087 = vst.msk [vmem:[#allocation2 + $0x48] sm:$0xff] %vm3077, %v3012
        %3088 = vst.msk [vmem:[#allocation2 + $0x50] sm:$0xff] %vm3077, %v3014
        %3089 = vst.msk [vmem:[#allocation2 + $0x58] sm:$0xff] %vm3077, %v3016
        %3090 = vst.msk [vmem:[#allocation2 + $0x60] sm:$0xff] %vm3077, %v3018
        %3091 = vst.msk [vmem:[#allocation2 + $0x68] sm:$0xff] %vm3077, %v3020
        %3092 = vst.msk [vmem:[#allocation2 + $0x70] sm:$0xff] %vm3077, %v3022
        %3093 = vst.msk [vmem:[#allocation2 + $0x78] sm:$0xff] %vm3077, %v3024
        %3094 = vst.msk [vmem:[#allocation2 + $0x80] sm:$0xff] %vm3077, %v3026
        %3095 = vst.msk [vmem:[#allocation2 + $0x88] sm:$0xff] %vm3077, %v3028
        %3096 = vst.msk [vmem:[#allocation2 + $0x90] sm:$0xff] %vm3077, %v3030
        %3097 = vst.msk [vmem:[#allocation2 + $0x98] sm:$0xff] %vm3077, %v3032
        %3098 = vst.msk [vmem:[#allocation2 + $0xa0] sm:$0xff] %vm3077, %v3034
        %3099 = vst.msk [vmem:[#allocation2 + $0xa8] sm:$0xff] %vm3077, %v3036
        %3100 = vst.msk [vmem:[#allocation2 + $0xb0] sm:$0xff] %vm3077, %v3038
        %3101 = vst.msk [vmem:[#allocation2 + $0xb8] sm:$0xff] %vm3077, %v3040
        %3102 = vst.msk [vmem:[#allocation2 + $0xc0] sm:$0xff] %vm3077, %v3042
        %3103 = vst.msk [vmem:[#allocation2 + $0xc8] sm:$0xff] %vm3077, %v3044
        %3104 = vst.msk [vmem:[#allocation2 + $0xd0] sm:$0xff] %vm3077, %v3046
        %3105 = vst.msk [vmem:[#allocation2 + $0xd8] sm:$0xff] %vm3077, %v3048
        %v3106 = vld [vmem:[#allocation2 + $0xd] sm:$0xff]
        %v3107 = vld [vmem:[#allocation2 + $0x15] sm:$0xff]
        %v3108 = vld [vmem:[#allocation2 + $0x1d] sm:$0xff]
        %v3109 = vld [vmem:[#allocation2 + $0x25] sm:$0xff]
        %v3110 = vld [vmem:[#allocation2 + $0x2d] sm:$0xff]
        %v3111 = vld [vmem:[#allocation2 + $0x35] sm:$0xff]
        %v3112 = vld [vmem:[#allocation2 + $0x3d] sm:$0xff]
        %v3113 = vld [vmem:[#allocation2 + $0x45] sm:$0xff]
        %v3114 = vld [vmem:[#allocation2 + $0x4d] sm:$0xff]
        %v3115 = vld [vmem:[#allocation2 + $0x55] sm:$0xff]
        %v3116 = vld [vmem:[#allocation2 + $0x5d] sm:$0xff]
        %v3117 = vld [vmem:[#allocation2 + $0x65] sm:$0xff]
        %v3118 = vld [vmem:[#allocation2 + $0x6d] sm:$0xff]
        %v3119 = vld [vmem:[#allocation2 + $0x75] sm:$0xff]
        %v3120 = vld [vmem:[#allocation2 + $0x7d] sm:$0xff]
        %v3121 = vld [vmem:[#allocation2 + $0x85] sm:$0xff]
        %v3122 = vld [vmem:[#allocation2 + $0x8d] sm:$0xff]
        %v3123 = vld [vmem:[#allocation2 + $0x95] sm:$0xff]
        %v3124 = vld [vmem:[#allocation2 + $0x9d] sm:$0xff]
        %v3125 = vld [vmem:[#allocation2 + $0xa5] sm:$0xff]
        %v3126 = vld [vmem:[#allocation2 + $0xad] sm:$0xff]
        %v3127 = vld [vmem:[%s5] sm:$0xff]
        %v3128 = vld [vmem:[%s5 + $0x8] sm:$0xff]
        %v3129 = vld [vmem:[%s5 + $0x10] sm:$0xff]
        %v3130 = vld [vmem:[%s5 + $0x18] sm:$0xff]
        %v3131 = vld [vmem:[%s5 + $0x20] sm:$0xff]
        %v3132 = vld [vmem:[%s5 + $0x28] sm:$0xff]
        %v3133 = vld [vmem:[%s5 + $0x30] sm:$0xff]
        %v3134 = vld [vmem:[%s5 + $0x38] sm:$0xff]
        %v3135 = vld [vmem:[%s5 + $0x40] sm:$0xff]
        %v3136 = vld [vmem:[#allocation2 + $0xe] sm:$0xff]
        %v3137 = vld [vmem:[#allocation2 + $0x16] sm:$0xff]
        %v3138 = vld [vmem:[#allocation2 + $0x1e] sm:$0xff]
        %v3139 = vld [vmem:[#allocation2 + $0x26] sm:$0xff]
        %v3140 = vld [vmem:[#allocation2 + $0x2e] sm:$0xff]
        %v3141 = vld [vmem:[#allocation2 + $0x36] sm:$0xff]
        %v3142 = vld [vmem:[#allocation2 + $0x3e] sm:$0xff]
        %v3143 = vld [vmem:[#allocation2 + $0x46] sm:$0xff]
        %v3144 = vld [vmem:[#allocation2 + $0x4e] sm:$0xff]
        %v3145 = vld [vmem:[#allocation2 + $0x56] sm:$0xff]
        %v3146 = vld [vmem:[#allocation2 + $0x5e] sm:$0xff]
        %v3147 = vld [vmem:[#allocation2 + $0x66] sm:$0xff]
        %v3148 = vld [vmem:[#allocation2 + $0x6e] sm:$0xff]
        %v3149 = vld [vmem:[#allocation2 + $0x76] sm:$0xff]
        %v3150 = vld [vmem:[#allocation2 + $0x7e] sm:$0xff]
        %v3151 = vld [vmem:[#allocation2 + $0x86] sm:$0xff]
        %v3152 = vld [vmem:[#allocation2 + $0x8e] sm:$0xff]
        %v3153 = vld [vmem:[#allocation2 + $0x96] sm:$0xff]
        %v3154 = vld [vmem:[#allocation2 + $0x9e] sm:$0xff]
        %v3155 = vld [vmem:[#allocation2 + $0xa6] sm:$0xff]
        %v3156 = vld [vmem:[#allocation2 + $0xae] sm:$0xff]
        %s3157 = scalar_lea.vmem %s5, 72
        %v3158 = vld [vmem:[%s3157] sm:$0xff]
        %v3159 = vld [vmem:[%s3157 + $0x8] sm:$0xff]
        %v3160 = vld [vmem:[%s3157 + $0x10] sm:$0xff]
        %v3161 = vld [vmem:[%s3157 + $0x18] sm:$0xff]
        %v3162 = vld [vmem:[%s3157 + $0x20] sm:$0xff]
        %v3163 = vld [vmem:[%s3157 + $0x28] sm:$0xff]
        %v3164 = vld [vmem:[%s3157 + $0x30] sm:$0xff]
        %v3165 = vld [vmem:[%s3157 + $0x38] sm:$0xff]
        %v3166 = vld [vmem:[%s3157 + $0x40] sm:$0xff]
        %vm3167 = vcmask 588800
        %v3169 = vsel %vm3167, %v3136, 0
        %v3172 = vsel %vm3167, %v3137, 0
        %v3175 = vsel %vm3167, %v3138, 0
        %v3178 = vsel %vm3167, %v3139, 0
        %v3181 = vsel %vm3167, %v3140, 0
        %v3184 = vsel %vm3167, %v3141, 0
        %v3187 = vsel %vm3167, %v3142, 0
        %v3190 = vsel %vm3167, %v3143, 0
        %v3193 = vsel %vm3167, %v3144, 0
        %v3196 = vsel %vm3167, %v3145, 0
        %v3199 = vsel %vm3167, %v3146, 0
        %v3202 = vsel %vm3167, %v3147, 0
        %v3205 = vsel %vm3167, %v3148, 0
        %v3208 = vsel %vm3167, %v3149, 0
        %v3211 = vsel %vm3167, %v3150, 0
        %v3214 = vsel %vm3167, %v3151, 0
        %v3217 = vsel %vm3167, %v3152, 0
        %v3220 = vsel %vm3167, %v3153, 0
        %v3223 = vsel %vm3167, %v3154, 0
        %v3226 = vsel %vm3167, %v3155, 0
        %v3229 = vsel %vm3167, %v3156, 0
        %3231 = vmatprep.subr.mxu0 0.0
        %3232 = vmatpush1.msra.mxu0 %v3158
        %3233 = vmatprep.subr.mxu0 0.0
        %3234 = vmatpush1.msra.mxu0 %v3159
        %3235 = vmatprep.subr.mxu0 0.0
        %3236 = vmatpush1.msra.mxu0 %v3160
        %3237 = vmatprep.subr.mxu0 0.0
        %3238 = vmatpush1.msra.mxu0 %v3161
        %3239 = vmatprep.subr.mxu0 0.0
        %3240 = vmatpush1.msra.mxu0 %v3162
        %3241 = vmatprep.subr.mxu0 0.0
        %3242 = vmatpush1.msra.mxu0 %v3163
        %3243 = vmatprep.subr.mxu0 0.0
        %3244 = vmatpush1.msra.mxu0 %v3164
        %3245 = vmatprep.subr.mxu0 0.0
        %3246 = vmatpush1.msra.mxu0 %v3165
        %3247 = vmatprep.subr.mxu0 0.0
        %3248 = vmatpush1.msra.mxu0 %v3166
        %3249 = vmatprep.subr.mxu0 0.0
        %3250 = vmatpush1.msra.mxu0 0.0
        %3251 = vmatprep.subr.mxu0 0.0
        %3252 = vmatpush1.msra.mxu0 0.0
        %3253 = vmatprep.subr.mxu0 0.0
        %3254 = vmatpush1.msra.mxu0 0.0
        %3255 = vmatprep.subr.mxu0 0.0
        %3256 = vmatpush1.msra.mxu0 0.0
        %3257 = vmatprep.subr.mxu0 0.0
        %3258 = vmatpush1.msra.mxu0 0.0
        %3259 = vmatprep.subr.mxu0 0.0
        %3260 = vmatpush1.msra.mxu0 0.0
        %3261 = vmatprep.subr.mxu0 0.0
        %3262 = vmatpush1.msra.mxu0 0.0
        %3263 = vmatprep.subr.mxu0 0.0
        %3264 = vmatpush1.msra.mxu0 0.0
        %3265 = vmatprep.subr.mxu0 0.0
        %3266 = vmatpush1.msra.mxu0 0.0
        %3267 = vmatprep.subr.mxu0 0.0
        %3268 = vmatpush1.msra.mxu0 0.0
        %3269 = vmatprep.subr.mxu0 0.0
        %3270 = vmatpush1.msra.mxu0 0.0
        %3271 = vmatprep.subr.mxu0 0.0
        %3272 = vmatpush1.msra.mxu0 0.0
        %3273 = vmatprep.subr.mxu0 0.0
        %3274 = vmatpush1.msra.mxu0 0.0
        %3275 = vmatprep.subr.mxu0 0.0
        %3276 = vmatpush1.msra.mxu0 0.0
        %3277 = vmatprep.subr.mxu0 0.0
        %3278 = vmatpush1.msra.mxu0 0.0
        %3279 = vmatprep.subr.mxu0 0.0
        %3280 = vmatpush1.msra.mxu0 0.0
        %3281 = vmatprep.subr.mxu0 0.0
        %3282 = vmatpush1.msra.mxu0 0.0
        %3283 = vmatprep.subr.mxu0 0.0
        %3284 = vmatpush1.msra.mxu0 0.0
        %3285 = vmatprep.subr.mxu0 0.0
        %3286 = vmatpush1.msra.mxu0 0.0
        %3287 = vmatprep.subr.mxu0 0.0
        %3288 = vmatpush1.msra.mxu0 0.0
        %3289 = vmatprep.subr.mxu0 0.0
        %3290 = vmatpush1.msra.mxu0 0.0
        %3291 = vmatprep.subr.mxu0 0.0
        %3292 = vmatpush1.msra.mxu0 0.0
        %3293 = vmatprep.subr.mxu0 0.0
        %3294 = vmatpush1.msra.mxu0 0.0
        %3295 = vmatprep.mubr.f32.mxu0 0.0
        %3296 = vmatmul.mubr.f32.gmra.mrb[0].mxu0 %v3169
        %v3297 = vpop.f32.mrb[0].mxu0
        %v3298 = vadd.f32 0.0, %v3297
        %v3299 = vpop.f32.mrb[0].mxu0
        %3300 = vmatprep.mubr.f32.mxu0 0.0
        %3301 = vmatmul.mubr.f32.gmra.mrb[0].mxu0 %v3172
        %v3302 = vpop.f32.mrb[0].mxu0
        %v3303 = vadd.f32 0.0, %v3302
        %v3304 = vpop.f32.mrb[0].mxu0
        %3305 = vmatprep.mubr.f32.mxu0 0.0
        %3306 = vmatmul.mubr.f32.gmra.mrb[0].mxu0 %v3175
        %v3307 = vpop.f32.mrb[0].mxu0
        %v3308 = vadd.f32 0.0, %v3307
        %v3309 = vpop.f32.mrb[0].mxu0
        %3310 = vmatprep.mubr.f32.mxu0 0.0
        %3311 = vmatmul.mubr.f32.gmra.mrb[0].mxu0 %v3178
        %v3312 = vpop.f32.mrb[0].mxu0
        %v3313 = vadd.f32 0.0, %v3312
        %v3314 = vpop.f32.mrb[0].mxu0
        %3315 = vmatprep.mubr.f32.mxu0 0.0
        %3316 = vmatmul.mubr.f32.gmra.mrb[0].mxu0 %v3181
        %v3317 = vpop.f32.mrb[0].mxu0
        %v3318 = vadd.f32 0.0, %v3317
        %v3319 = vpop.f32.mrb[0].mxu0
        %3320 = vmatprep.mubr.f32.mxu0 0.0
        %3321 = vmatmul.mubr.f32.gmra.mrb[0].mxu0 %v3184
        %v3322 = vpop.f32.mrb[0].mxu0
        %v3323 = vadd.f32 0.0, %v3322
        %v3324 = vpop.f32.mrb[0].mxu0
        %3325 = vmatprep.mubr.f32.mxu0 0.0
        %3326 = vmatmul.mubr.f32.gmra.mrb[0].mxu0 %v3187
        %v3327 = vpop.f32.mrb[0].mxu0
        %v3328 = vadd.f32 0.0, %v3327
        %v3329 = vpop.f32.mrb[0].mxu0
        %3330 = vmatprep.mubr.f32.mxu0 0.0
        %3331 = vmatmul.mubr.f32.gmra.mrb[0].mxu0 %v3190
        %v3332 = vpop.f32.mrb[0].mxu0
        %v3333 = vadd.f32 0.0, %v3332
        %v3334 = vpop.f32.mrb[0].mxu0
        %3335 = vmatprep.mubr.f32.mxu0 0.0
        %3336 = vmatmul.mubr.f32.gmra.mrb[0].mxu0 %v3193
        %v3337 = vpop.f32.mrb[0].mxu0
        %v3338 = vadd.f32 0.0, %v3337
        %v3339 = vpop.f32.mrb[0].mxu0
        %3340 = vmatprep.mubr.f32.mxu0 0.0
        %3341 = vmatmul.mubr.f32.gmra.mrb[0].mxu0 %v3196
        %v3342 = vpop.f32.mrb[0].mxu0
        %v3343 = vadd.f32 0.0, %v3342
        %v3344 = vpop.f32.mrb[0].mxu0
        %3345 = vmatprep.mubr.f32.mxu0 0.0
        %3346 = vmatmul.mubr.f32.gmra.mrb[0].mxu0 %v3199
        %v3347 = vpop.f32.mrb[0].mxu0
        %v3348 = vadd.f32 0.0, %v3347
        %v3349 = vpop.f32.mrb[0].mxu0
        %3350 = vmatprep.mubr.f32.mxu0 0.0
        %3351 = vmatmul.mubr.f32.gmra.mrb[0].mxu0 %v3202
        %v3352 = vpop.f32.mrb[0].mxu0
        %v3353 = vadd.f32 0.0, %v3352
        %v3354 = vpop.f32.mrb[0].mxu0
        %3355 = vmatprep.mubr.f32.mxu0 0.0
        %3356 = vmatmul.mubr.f32.gmra.mrb[0].mxu0 %v3205
        %v3357 = vpop.f32.mrb[0].mxu0
        %v3358 = vadd.f32 0.0, %v3357
        %v3359 = vpop.f32.mrb[0].mxu0
        %3360 = vmatprep.mubr.f32.mxu0 0.0
        %3361 = vmatmul.mubr.f32.gmra.mrb[0].mxu0 %v3208
        %v3362 = vpop.f32.mrb[0].mxu0
        %v3363 = vadd.f32 0.0, %v3362
        %v3364 = vpop.f32.mrb[0].mxu0
        %3365 = vmatprep.mubr.f32.mxu0 0.0
        %3366 = vmatmul.mubr.f32.gmra.mrb[0].mxu0 %v3211
        %v3367 = vpop.f32.mrb[0].mxu0
        %v3368 = vadd.f32 0.0, %v3367
        %v3369 = vpop.f32.mrb[0].mxu0
        %3370 = vmatprep.mubr.f32.mxu0 0.0
        %3371 = vmatmul.mubr.f32.gmra.mrb[0].mxu0 %v3214
        %v3372 = vpop.f32.mrb[0].mxu0
        %v3373 = vadd.f32 0.0, %v3372
        %v3374 = vpop.f32.mrb[0].mxu0
        %3375 = vmatprep.mubr.f32.mxu0 0.0
        %3376 = vmatmul.mubr.f32.gmra.mrb[0].mxu0 %v3217
        %v3377 = vpop.f32.mrb[0].mxu0
        %v3378 = vadd.f32 0.0, %v3377
        %v3379 = vpop.f32.mrb[0].mxu0
        %3380 = vmatprep.mubr.f32.mxu0 0.0
        %3381 = vmatmul.mubr.f32.gmra.mrb[0].mxu0 %v3220
        %v3382 = vpop.f32.mrb[0].mxu0
        %v3383 = vadd.f32 0.0, %v3382
        %v3384 = vpop.f32.mrb[0].mxu0
        %3385 = vmatprep.mubr.f32.mxu0 0.0
        %3386 = vmatmul.mubr.f32.gmra.mrb[0].mxu0 %v3223
        %v3387 = vpop.f32.mrb[0].mxu0
        %v3388 = vadd.f32 0.0, %v3387
        %v3389 = vpop.f32.mrb[0].mxu0
        %3390 = vmatprep.mubr.f32.mxu0 0.0
        %3391 = vmatmul.mubr.f32.gmra.mrb[0].mxu0 %v3226
        %v3392 = vpop.f32.mrb[0].mxu0
        %v3393 = vadd.f32 0.0, %v3392
        %v3394 = vpop.f32.mrb[0].mxu0
        %3395 = vmatprep.mubr.f32.mxu0 0.0
        %3396 = vmatmul.mubr.f32.gmra.mrb[0].mxu0 %v3229
        %v3397 = vpop.f32.mrb[0].mxu0
        %v3398 = vadd.f32 0.0, %v3397
        %v3399 = vpop.f32.mrb[0].mxu0
        %3400 = vdwg.mxu0
        %v3402 = vsel %vm3167, %v3106, 0
        %v3405 = vsel %vm3167, %v3107, 0
        %v3408 = vsel %vm3167, %v3108, 0
        %v3411 = vsel %vm3167, %v3109, 0
        %v3414 = vsel %vm3167, %v3110, 0
        %v3417 = vsel %vm3167, %v3111, 0
        %v3420 = vsel %vm3167, %v3112, 0
        %v3423 = vsel %vm3167, %v3113, 0
        %v3426 = vsel %vm3167, %v3114, 0
        %v3429 = vsel %vm3167, %v3115, 0
        %v3432 = vsel %vm3167, %v3116, 0
        %v3435 = vsel %vm3167, %v3117, 0
        %v3438 = vsel %vm3167, %v3118, 0
        %v3441 = vsel %vm3167, %v3119, 0
        %v3444 = vsel %vm3167, %v3120, 0
        %v3447 = vsel %vm3167, %v3121, 0
        %v3450 = vsel %vm3167, %v3122, 0
        %v3453 = vsel %vm3167, %v3123, 0
        %v3456 = vsel %vm3167, %v3124, 0
        %v3459 = vsel %vm3167, %v3125, 0
        %v3462 = vsel %vm3167, %v3126, 0
        %3464 = vmatprep.subr.mxu0 0.0
        %3465 = vmatpush1.msra.mxu0 %v3127
        %3466 = vmatprep.subr.mxu0 0.0
        %3467 = vmatpush1.msra.mxu0 %v3128
        %3468 = vmatprep.subr.mxu0 0.0
        %3469 = vmatpush1.msra.mxu0 %v3129
        %3470 = vmatprep.subr.mxu0 0.0
        %3471 = vmatpush1.msra.mxu0 %v3130
        %3472 = vmatprep.subr.mxu0 0.0
        %3473 = vmatpush1.msra.mxu0 %v3131
        %3474 = vmatprep.subr.mxu0 0.0
        %3475 = vmatpush1.msra.mxu0 %v3132
        %3476 = vmatprep.subr.mxu0 0.0
        %3477 = vmatpush1.msra.mxu0 %v3133
        %3478 = vmatprep.subr.mxu0 0.0
        %3479 = vmatpush1.msra.mxu0 %v3134
        %3480 = vmatprep.subr.mxu0 0.0
        %3481 = vmatpush1.msra.mxu0 %v3135
        %3482 = vmatprep.subr.mxu0 0.0
        %3483 = vmatpush1.msra.mxu0 0.0
        %3484 = vmatprep.subr.mxu0 0.0
        %3485 = vmatpush1.msra.mxu0 0.0
        %3486 = vmatprep.subr.mxu0 0.0
        %3487 = vmatpush1.msra.mxu0 0.0
        %3488 = vmatprep.subr.mxu0 0.0
        %3489 = vmatpush1.msra.mxu0 0.0
        %3490 = vmatprep.subr.mxu0 0.0
        %3491 = vmatpush1.msra.mxu0 0.0
        %3492 = vmatprep.subr.mxu0 0.0
        %3493 = vmatpush1.msra.mxu0 0.0
        %3494 = vmatprep.subr.mxu0 0.0
        %3495 = vmatpush1.msra.mxu0 0.0
        %3496 = vmatprep.subr.mxu0 0.0
        %3497 = vmatpush1.msra.mxu0 0.0
        %3498 = vmatprep.subr.mxu0 0.0
        %3499 = vmatpush1.msra.mxu0 0.0
        %3500 = vmatprep.subr.mxu0 0.0
        %3501 = vmatpush1.msra.mxu0 0.0
        %3502 = vmatprep.subr.mxu0 0.0
        %3503 = vmatpush1.msra.mxu0 0.0
        %3504 = vmatprep.subr.mxu0 0.0
        %3505 = vmatpush1.msra.mxu0 0.0
        %3506 = vmatprep.subr.mxu0 0.0
        %3507 = vmatpush1.msra.mxu0 0.0
        %3508 = vmatprep.subr.mxu0 0.0
        %3509 = vmatpush1.msra.mxu0 0.0
        %3510 = vmatprep.subr.mxu0 0.0
        %3511 = vmatpush1.msra.mxu0 0.0
        %3512 = vmatprep.subr.mxu0 0.0
        %3513 = vmatpush1.msra.mxu0 0.0
        %3514 = vmatprep.subr.mxu0 0.0
        %3515 = vmatpush1.msra.mxu0 0.0
        %3516 = vmatprep.subr.mxu0 0.0
        %3517 = vmatpush1.msra.mxu0 0.0
        %3518 = vmatprep.subr.mxu0 0.0
        %3519 = vmatpush1.msra.mxu0 0.0
        %3520 = vmatprep.subr.mxu0 0.0
        %3521 = vmatpush1.msra.mxu0 0.0
        %3522 = vmatprep.subr.mxu0 0.0
        %3523 = vmatpush1.msra.mxu0 0.0
        %3524 = vmatprep.subr.mxu0 0.0
        %3525 = vmatpush1.msra.mxu0 0.0
        %3526 = vmatprep.subr.mxu0 0.0
        %3527 = vmatpush1.msra.mxu0 0.0
        %3528 = vmatprep.mubr.f32.mxu0 0.0
        %3529 = vmatmul.mubr.f32.gmra.mrb[0].mxu0 %v3402
        %v3530 = vpop.f32.mrb[0].mxu0
        %v3531 = vadd.f32 %v3298, %v3530
        %v3532 = vpop.f32.mrb[0].mxu0
        %3533 = vmatprep.mubr.f32.mxu0 0.0
        %3534 = vmatmul.mubr.f32.gmra.mrb[0].mxu0 %v3405
        %v3535 = vpop.f32.mrb[0].mxu0
        %v3536 = vadd.f32 %v3303, %v3535
        %v3537 = vpop.f32.mrb[0].mxu0
        %3538 = vmatprep.mubr.f32.mxu0 0.0
        %3539 = vmatmul.mubr.f32.gmra.mrb[0].mxu0 %v3408
        %v3540 = vpop.f32.mrb[0].mxu0
        %v3541 = vadd.f32 %v3308, %v3540
        %v3542 = vpop.f32.mrb[0].mxu0
        %3543 = vmatprep.mubr.f32.mxu0 0.0
        %3544 = vmatmul.mubr.f32.gmra.mrb[0].mxu0 %v3411
        %v3545 = vpop.f32.mrb[0].mxu0
        %v3546 = vadd.f32 %v3313, %v3545
        %v3547 = vpop.f32.mrb[0].mxu0
        %3548 = vmatprep.mubr.f32.mxu0 0.0
        %3549 = vmatmul.mubr.f32.gmra.mrb[0].mxu0 %v3414
        %v3550 = vpop.f32.mrb[0].mxu0
        %v3551 = vadd.f32 %v3318, %v3550
        %v3552 = vpop.f32.mrb[0].mxu0
        %3553 = vmatprep.mubr.f32.mxu0 0.0
        %3554 = vmatmul.mubr.f32.gmra.mrb[0].mxu0 %v3417
        %v3555 = vpop.f32.mrb[0].mxu0
        %v3556 = vadd.f32 %v3323, %v3555
        %v3557 = vpop.f32.mrb[0].mxu0
        %3558 = vmatprep.mubr.f32.mxu0 0.0
        %3559 = vmatmul.mubr.f32.gmra.mrb[0].mxu0 %v3420
        %v3560 = vpop.f32.mrb[0].mxu0
        %v3561 = vadd.f32 %v3328, %v3560
        %v3562 = vpop.f32.mrb[0].mxu0
        %3563 = vmatprep.mubr.f32.mxu0 0.0
        %3564 = vmatmul.mubr.f32.gmra.mrb[0].mxu0 %v3423
        %v3565 = vpop.f32.mrb[0].mxu0
        %v3566 = vadd.f32 %v3333, %v3565
        %v3567 = vpop.f32.mrb[0].mxu0
        %3568 = vmatprep.mubr.f32.mxu0 0.0
        %3569 = vmatmul.mubr.f32.gmra.mrb[0].mxu0 %v3426
        %v3570 = vpop.f32.mrb[0].mxu0
        %v3571 = vadd.f32 %v3338, %v3570
        %v3572 = vpop.f32.mrb[0].mxu0
        %3573 = vmatprep.mubr.f32.mxu0 0.0
        %3574 = vmatmul.mubr.f32.gmra.mrb[0].mxu0 %v3429
        %v3575 = vpop.f32.mrb[0].mxu0
        %v3576 = vadd.f32 %v3343, %v3575
        %v3577 = vpop.f32.mrb[0].mxu0
        %3578 = vmatprep.mubr.f32.mxu0 0.0
        %3579 = vmatmul.mubr.f32.gmra.mrb[0].mxu0 %v3432
        %v3580 = vpop.f32.mrb[0].mxu0
        %v3581 = vadd.f32 %v3348, %v3580
        %v3582 = vpop.f32.mrb[0].mxu0
        %3583 = vmatprep.mubr.f32.mxu0 0.0
        %3584 = vmatmul.mubr.f32.gmra.mrb[0].mxu0 %v3435
        %v3585 = vpop.f32.mrb[0].mxu0
        %v3586 = vadd.f32 %v3353, %v3585
        %v3587 = vpop.f32.mrb[0].mxu0
        %3588 = vmatprep.mubr.f32.mxu0 0.0
        %3589 = vmatmul.mubr.f32.gmra.mrb[0].mxu0 %v3438
        %v3590 = vpop.f32.mrb[0].mxu0
        %v3591 = vadd.f32 %v3358, %v3590
        %v3592 = vpop.f32.mrb[0].mxu0
        %3593 = vmatprep.mubr.f32.mxu0 0.0
        %3594 = vmatmul.mubr.f32.gmra.mrb[0].mxu0 %v3441
        %v3595 = vpop.f32.mrb[0].mxu0
        %v3596 = vadd.f32 %v3363, %v3595
        %v3597 = vpop.f32.mrb[0].mxu0
        %3598 = vmatprep.mubr.f32.mxu0 0.0
        %3599 = vmatmul.mubr.f32.gmra.mrb[0].mxu0 %v3444
        %v3600 = vpop.f32.mrb[0].mxu0
        %v3601 = vadd.f32 %v3368, %v3600
        %v3602 = vpop.f32.mrb[0].mxu0
        %3603 = vmatprep.mubr.f32.mxu0 0.0
        %3604 = vmatmul.mubr.f32.gmra.mrb[0].mxu0 %v3447
        %v3605 = vpop.f32.mrb[0].mxu0
        %v3606 = vadd.f32 %v3373, %v3605
        %v3607 = vpop.f32.mrb[0].mxu0
        %3608 = vmatprep.mubr.f32.mxu0 0.0
        %3609 = vmatmul.mubr.f32.gmra.mrb[0].mxu0 %v3450
        %v3610 = vpop.f32.mrb[0].mxu0
        %v3611 = vadd.f32 %v3378, %v3610
        %v3612 = vpop.f32.mrb[0].mxu0
        %3613 = vmatprep.mubr.f32.mxu0 0.0
        %3614 = vmatmul.mubr.f32.gmra.mrb[0].mxu0 %v3453
        %v3615 = vpop.f32.mrb[0].mxu0
        %v3616 = vadd.f32 %v3383, %v3615
        %v3617 = vpop.f32.mrb[0].mxu0
        %3618 = vmatprep.mubr.f32.mxu0 0.0
        %3619 = vmatmul.mubr.f32.gmra.mrb[0].mxu0 %v3456
        %v3620 = vpop.f32.mrb[0].mxu0
        %v3621 = vadd.f32 %v3388, %v3620
        %v3622 = vpop.f32.mrb[0].mxu0
        %3623 = vmatprep.mubr.f32.mxu0 0.0
        %3624 = vmatmul.mubr.f32.gmra.mrb[0].mxu0 %v3459
        %v3625 = vpop.f32.mrb[0].mxu0
        %v3626 = vadd.f32 %v3393, %v3625
        %v3627 = vpop.f32.mrb[0].mxu0
        %3628 = vmatprep.mubr.f32.mxu0 0.0
        %3629 = vmatmul.mubr.f32.gmra.mrb[0].mxu0 %v3462
        %v3630 = vpop.f32.mrb[0].mxu0
        %v3631 = vadd.f32 %v3398, %v3630
        %v3632 = vpop.f32.mrb[0].mxu0
        %3633 = vdwg.mxu0
        %v3634 = vld [vmem:[#allocation2 + $0xf] sm:$0xff]
        %v3635 = vld [vmem:[#allocation2 + $0x17] sm:$0xff]
        %v3636 = vld [vmem:[#allocation2 + $0x1f] sm:$0xff]
        %v3637 = vld [vmem:[#allocation2 + $0x27] sm:$0xff]
        %v3638 = vld [vmem:[#allocation2 + $0x2f] sm:$0xff]
        %v3639 = vld [vmem:[#allocation2 + $0x37] sm:$0xff]
        %v3640 = vld [vmem:[#allocation2 + $0x3f] sm:$0xff]
        %v3641 = vld [vmem:[#allocation2 + $0x47] sm:$0xff]
        %v3642 = vld [vmem:[#allocation2 + $0x4f] sm:$0xff]
        %v3643 = vld [vmem:[#allocation2 + $0x57] sm:$0xff]
        %v3644 = vld [vmem:[#allocation2 + $0x5f] sm:$0xff]
        %v3645 = vld [vmem:[#allocation2 + $0x67] sm:$0xff]
        %v3646 = vld [vmem:[#allocation2 + $0x6f] sm:$0xff]
        %v3647 = vld [vmem:[#allocation2 + $0x77] sm:$0xff]
        %v3648 = vld [vmem:[#allocation2 + $0x7f] sm:$0xff]
        %v3649 = vld [vmem:[#allocation2 + $0x87] sm:$0xff]
        %v3650 = vld [vmem:[#allocation2 + $0x8f] sm:$0xff]
        %v3651 = vld [vmem:[#allocation2 + $0x97] sm:$0xff]
        %v3652 = vld [vmem:[#allocation2 + $0x9f] sm:$0xff]
        %v3653 = vld [vmem:[#allocation2 + $0xa7] sm:$0xff]
        %v3654 = vld [vmem:[#allocation2 + $0xaf] sm:$0xff]
        %s3655 = scalar_lea.vmem %s5, 144
        %v3656 = vld [vmem:[%s3655] sm:$0xff]
        %v3657 = vld [vmem:[%s3655 + $0x8] sm:$0xff]
        %v3658 = vld [vmem:[%s3655 + $0x10] sm:$0xff]
        %v3659 = vld [vmem:[%s3655 + $0x18] sm:$0xff]
        %v3660 = vld [vmem:[%s3655 + $0x20] sm:$0xff]
        %v3661 = vld [vmem:[%s3655 + $0x28] sm:$0xff]
        %v3662 = vld [vmem:[%s3655 + $0x30] sm:$0xff]
        %v3663 = vld [vmem:[%s3655 + $0x38] sm:$0xff]
        %v3664 = vld [vmem:[%s3655 + $0x40] sm:$0xff]
        %v3666 = vsel %vm3167, %v3634, 0
        %v3669 = vsel %vm3167, %v3635, 0
        %v3672 = vsel %vm3167, %v3636, 0
        %v3675 = vsel %vm3167, %v3637, 0
        %v3678 = vsel %vm3167, %v3638, 0
        %v3681 = vsel %vm3167, %v3639, 0
        %v3684 = vsel %vm3167, %v3640, 0
        %v3687 = vsel %vm3167, %v3641, 0
        %v3690 = vsel %vm3167, %v3642, 0
        %v3693 = vsel %vm3167, %v3643, 0
        %v3696 = vsel %vm3167, %v3644, 0
        %v3699 = vsel %vm3167, %v3645, 0
        %v3702 = vsel %vm3167, %v3646, 0
        %v3705 = vsel %vm3167, %v3647, 0
        %v3708 = vsel %vm3167, %v3648, 0
        %v3711 = vsel %vm3167, %v3649, 0
        %v3714 = vsel %vm3167, %v3650, 0
        %v3717 = vsel %vm3167, %v3651, 0
        %v3720 = vsel %vm3167, %v3652, 0
        %v3723 = vsel %vm3167, %v3653, 0
        %v3726 = vsel %vm3167, %v3654, 0
        %3728 = vmatprep.subr.mxu0 0.0
        %3729 = vmatpush1.msra.mxu0 %v3656
        %3730 = vmatprep.subr.mxu0 0.0
        %3731 = vmatpush1.msra.mxu0 %v3657
        %3732 = vmatprep.subr.mxu0 0.0
        %3733 = vmatpush1.msra.mxu0 %v3658
        %3734 = vmatprep.subr.mxu0 0.0
        %3735 = vmatpush1.msra.mxu0 %v3659
        %3736 = vmatprep.subr.mxu0 0.0
        %3737 = vmatpush1.msra.mxu0 %v3660
        %3738 = vmatprep.subr.mxu0 0.0
        %3739 = vmatpush1.msra.mxu0 %v3661
        %3740 = vmatprep.subr.mxu0 0.0
        %3741 = vmatpush1.msra.mxu0 %v3662
        %3742 = vmatprep.subr.mxu0 0.0
        %3743 = vmatpush1.msra.mxu0 %v3663
        %3744 = vmatprep.subr.mxu0 0.0
        %3745 = vmatpush1.msra.mxu0 %v3664
        %3746 = vmatprep.subr.mxu0 0.0
        %3747 = vmatpush1.msra.mxu0 0.0
        %3748 = vmatprep.subr.mxu0 0.0
        %3749 = vmatpush1.msra.mxu0 0.0
        %3750 = vmatprep.subr.mxu0 0.0
        %3751 = vmatpush1.msra.mxu0 0.0
        %3752 = vmatprep.subr.mxu0 0.0
        %3753 = vmatpush1.msra.mxu0 0.0
        %3754 = vmatprep.subr.mxu0 0.0
        %3755 = vmatpush1.msra.mxu0 0.0
        %3756 = vmatprep.subr.mxu0 0.0
        %3757 = vmatpush1.msra.mxu0 0.0
        %3758 = vmatprep.subr.mxu0 0.0
        %3759 = vmatpush1.msra.mxu0 0.0
        %3760 = vmatprep.subr.mxu0 0.0
        %3761 = vmatpush1.msra.mxu0 0.0
        %3762 = vmatprep.subr.mxu0 0.0
        %3763 = vmatpush1.msra.mxu0 0.0
        %3764 = vmatprep.subr.mxu0 0.0
        %3765 = vmatpush1.msra.mxu0 0.0
        %3766 = vmatprep.subr.mxu0 0.0
        %3767 = vmatpush1.msra.mxu0 0.0
        %3768 = vmatprep.subr.mxu0 0.0
        %3769 = vmatpush1.msra.mxu0 0.0
        %3770 = vmatprep.subr.mxu0 0.0
        %3771 = vmatpush1.msra.mxu0 0.0
        %3772 = vmatprep.subr.mxu0 0.0
        %3773 = vmatpush1.msra.mxu0 0.0
        %3774 = vmatprep.subr.mxu0 0.0
        %3775 = vmatpush1.msra.mxu0 0.0
        %3776 = vmatprep.subr.mxu0 0.0
        %3777 = vmatpush1.msra.mxu0 0.0
        %3778 = vmatprep.subr.mxu0 0.0
        %3779 = vmatpush1.msra.mxu0 0.0
        %3780 = vmatprep.subr.mxu0 0.0
        %3781 = vmatpush1.msra.mxu0 0.0
        %3782 = vmatprep.subr.mxu0 0.0
        %3783 = vmatpush1.msra.mxu0 0.0
        %3784 = vmatprep.subr.mxu0 0.0
        %3785 = vmatpush1.msra.mxu0 0.0
        %3786 = vmatprep.subr.mxu0 0.0
        %3787 = vmatpush1.msra.mxu0 0.0
        %3788 = vmatprep.subr.mxu0 0.0
        %3789 = vmatpush1.msra.mxu0 0.0
        %3790 = vmatprep.subr.mxu0 0.0
        %3791 = vmatpush1.msra.mxu0 0.0
        %3792 = vmatprep.mubr.f32.mxu0 0.0
        %3793 = vmatmul.mubr.f32.gmra.mrb[0].mxu0 %v3666
        %v3794 = vpop.f32.mrb[0].mxu0
        %v3795 = vadd.f32 0.0, %v3794
        %v3796 = vpop.f32.mrb[0].mxu0
        %3797 = vmatprep.mubr.f32.mxu0 0.0
        %3798 = vmatmul.mubr.f32.gmra.mrb[0].mxu0 %v3669
        %v3799 = vpop.f32.mrb[0].mxu0
        %v3800 = vadd.f32 0.0, %v3799
        %v3801 = vpop.f32.mrb[0].mxu0
        %3802 = vmatprep.mubr.f32.mxu0 0.0
        %3803 = vmatmul.mubr.f32.gmra.mrb[0].mxu0 %v3672
        %v3804 = vpop.f32.mrb[0].mxu0
        %v3805 = vadd.f32 0.0, %v3804
        %v3806 = vpop.f32.mrb[0].mxu0
        %3807 = vmatprep.mubr.f32.mxu0 0.0
        %3808 = vmatmul.mubr.f32.gmra.mrb[0].mxu0 %v3675
        %v3809 = vpop.f32.mrb[0].mxu0
        %v3810 = vadd.f32 0.0, %v3809
        %v3811 = vpop.f32.mrb[0].mxu0
        %3812 = vmatprep.mubr.f32.mxu0 0.0
        %3813 = vmatmul.mubr.f32.gmra.mrb[0].mxu0 %v3678
        %v3814 = vpop.f32.mrb[0].mxu0
        %v3815 = vadd.f32 0.0, %v3814
        %v3816 = vpop.f32.mrb[0].mxu0
        %3817 = vmatprep.mubr.f32.mxu0 0.0
        %3818 = vmatmul.mubr.f32.gmra.mrb[0].mxu0 %v3681
        %v3819 = vpop.f32.mrb[0].mxu0
        %v3820 = vadd.f32 0.0, %v3819
        %v3821 = vpop.f32.mrb[0].mxu0
        %3822 = vmatprep.mubr.f32.mxu0 0.0
        %3823 = vmatmul.mubr.f32.gmra.mrb[0].mxu0 %v3684
        %v3824 = vpop.f32.mrb[0].mxu0
        %v3825 = vadd.f32 0.0, %v3824
        %v3826 = vpop.f32.mrb[0].mxu0
        %3827 = vmatprep.mubr.f32.mxu0 0.0
        %3828 = vmatmul.mubr.f32.gmra.mrb[0].mxu0 %v3687
        %v3829 = vpop.f32.mrb[0].mxu0
        %v3830 = vadd.f32 0.0, %v3829
        %v3831 = vpop.f32.mrb[0].mxu0
        %3832 = vmatprep.mubr.f32.mxu0 0.0
        %3833 = vmatmul.mubr.f32.gmra.mrb[0].mxu0 %v3690
        %v3834 = vpop.f32.mrb[0].mxu0
        %v3835 = vadd.f32 0.0, %v3834
        %v3836 = vpop.f32.mrb[0].mxu0
        %3837 = vmatprep.mubr.f32.mxu0 0.0
        %3838 = vmatmul.mubr.f32.gmra.mrb[0].mxu0 %v3693
        %v3839 = vpop.f32.mrb[0].mxu0
        %v3840 = vadd.f32 0.0, %v3839
        %v3841 = vpop.f32.mrb[0].mxu0
        %3842 = vmatprep.mubr.f32.mxu0 0.0
        %3843 = vmatmul.mubr.f32.gmra.mrb[0].mxu0 %v3696
        %v3844 = vpop.f32.mrb[0].mxu0
        %v3845 = vadd.f32 0.0, %v3844
        %v3846 = vpop.f32.mrb[0].mxu0
        %3847 = vmatprep.mubr.f32.mxu0 0.0
        %3848 = vmatmul.mubr.f32.gmra.mrb[0].mxu0 %v3699
        %v3849 = vpop.f32.mrb[0].mxu0
        %v3850 = vadd.f32 0.0, %v3849
        %v3851 = vpop.f32.mrb[0].mxu0
        %3852 = vmatprep.mubr.f32.mxu0 0.0
        %3853 = vmatmul.mubr.f32.gmra.mrb[0].mxu0 %v3702
        %v3854 = vpop.f32.mrb[0].mxu0
        %v3855 = vadd.f32 0.0, %v3854
        %v3856 = vpop.f32.mrb[0].mxu0
        %3857 = vmatprep.mubr.f32.mxu0 0.0
        %3858 = vmatmul.mubr.f32.gmra.mrb[0].mxu0 %v3705
        %v3859 = vpop.f32.mrb[0].mxu0
        %v3860 = vadd.f32 0.0, %v3859
        %v3861 = vpop.f32.mrb[0].mxu0
        %3862 = vmatprep.mubr.f32.mxu0 0.0
        %3863 = vmatmul.mubr.f32.gmra.mrb[0].mxu0 %v3708
        %v3864 = vpop.f32.mrb[0].mxu0
        %v3865 = vadd.f32 0.0, %v3864
        %v3866 = vpop.f32.mrb[0].mxu0
        %3867 = vmatprep.mubr.f32.mxu0 0.0
        %3868 = vmatmul.mubr.f32.gmra.mrb[0].mxu0 %v3711
        %v3869 = vpop.f32.mrb[0].mxu0
        %v3870 = vadd.f32 0.0, %v3869
        %v3871 = vpop.f32.mrb[0].mxu0
        %3872 = vmatprep.mubr.f32.mxu0 0.0
        %3873 = vmatmul.mubr.f32.gmra.mrb[0].mxu0 %v3714
        %v3874 = vpop.f32.mrb[0].mxu0
        %v3875 = vadd.f32 0.0, %v3874
        %v3876 = vpop.f32.mrb[0].mxu0
        %3877 = vmatprep.mubr.f32.mxu0 0.0
        %3878 = vmatmul.mubr.f32.gmra.mrb[0].mxu0 %v3717
        %v3879 = vpop.f32.mrb[0].mxu0
        %v3880 = vadd.f32 0.0, %v3879
        %v3881 = vpop.f32.mrb[0].mxu0
        %3882 = vmatprep.mubr.f32.mxu0 0.0
        %3883 = vmatmul.mubr.f32.gmra.mrb[0].mxu0 %v3720
        %v3884 = vpop.f32.mrb[0].mxu0
        %v3885 = vadd.f32 0.0, %v3884
        %v3886 = vpop.f32.mrb[0].mxu0
        %3887 = vmatprep.mubr.f32.mxu0 0.0
        %3888 = vmatmul.mubr.f32.gmra.mrb[0].mxu0 %v3723
        %v3889 = vpop.f32.mrb[0].mxu0
        %v3890 = vadd.f32 0.0, %v3889
        %v3891 = vpop.f32.mrb[0].mxu0
        %3892 = vmatprep.mubr.f32.mxu0 0.0
        %3893 = vmatmul.mubr.f32.gmra.mrb[0].mxu0 %v3726
        %v3894 = vpop.f32.mrb[0].mxu0
        %v3895 = vadd.f32 0.0, %v3894
        %v3896 = vpop.f32.mrb[0].mxu0
        %3897 = vdwg.mxu0
        %v3898 = vadd.f32 %v3531, %v3795
        %v3899 = vadd.f32 %v3536, %v3800
        %v3900 = vadd.f32 %v3541, %v3805
        %v3901 = vadd.f32 %v3546, %v3810
        %v3902 = vadd.f32 %v3551, %v3815
        %v3903 = vadd.f32 %v3556, %v3820
        %v3904 = vadd.f32 %v3561, %v3825
        %v3905 = vadd.f32 %v3566, %v3830
        %v3906 = vadd.f32 %v3571, %v3835
        %v3907 = vadd.f32 %v3576, %v3840
        %v3908 = vadd.f32 %v3581, %v3845
        %v3909 = vadd.f32 %v3586, %v3850
        %v3910 = vadd.f32 %v3591, %v3855
        %v3911 = vadd.f32 %v3596, %v3860
        %v3912 = vadd.f32 %v3601, %v3865
        %v3913 = vadd.f32 %v3606, %v3870
        %v3914 = vadd.f32 %v3611, %v3875
        %v3915 = vadd.f32 %v3616, %v3880
        %v3916 = vadd.f32 %v3621, %v3885
        %v3917 = vadd.f32 %v3626, %v3890
        %v3918 = vadd.f32 %v3631, %v3895
        %v3919 = vld [vmem:[#allocation2 + $0x1b] sm:$0xff]
        %v3920 = vld [vmem:[#allocation2 + $0x23] sm:$0xff]
        %v3921 = vld [vmem:[#allocation2 + $0x2b] sm:$0xff]
        %v3922 = vld [vmem:[#allocation2 + $0x33] sm:$0xff]
        %v3923 = vld [vmem:[#allocation2 + $0x3b] sm:$0xff]
        %v3924 = vld [vmem:[#allocation2 + $0x43] sm:$0xff]
        %v3925 = vld [vmem:[#allocation2 + $0x4b] sm:$0xff]
        %v3926 = vld [vmem:[#allocation2 + $0x53] sm:$0xff]
        %v3927 = vld [vmem:[#allocation2 + $0x5b] sm:$0xff]
        %v3928 = vld [vmem:[#allocation2 + $0x63] sm:$0xff]
        %v3929 = vld [vmem:[#allocation2 + $0x6b] sm:$0xff]
        %v3930 = vld [vmem:[#allocation2 + $0x73] sm:$0xff]
        %v3931 = vld [vmem:[#allocation2 + $0x7b] sm:$0xff]
        %v3932 = vld [vmem:[#allocation2 + $0x83] sm:$0xff]
        %v3933 = vld [vmem:[#allocation2 + $0x8b] sm:$0xff]
        %v3934 = vld [vmem:[#allocation2 + $0x93] sm:$0xff]
        %v3935 = vld [vmem:[#allocation2 + $0x9b] sm:$0xff]
        %v3936 = vld [vmem:[#allocation2 + $0xa3] sm:$0xff]
        %v3937 = vld [vmem:[#allocation2 + $0xab] sm:$0xff]
        %v3938 = vld [vmem:[#allocation2 + $0xb3] sm:$0xff]
        %v3939 = vld [vmem:[#allocation2 + $0xbb] sm:$0xff]
        %s3940 = scalar_lea.vmem %s5, 216
        %v3941 = vld [vmem:[%s3940] sm:$0xff]
        %v3942 = vld [vmem:[%s3940 + $0x8] sm:$0xff]
        %v3943 = vld [vmem:[%s3940 + $0x10] sm:$0xff]
        %v3944 = vld [vmem:[%s3940 + $0x18] sm:$0xff]
        %v3945 = vld [vmem:[%s3940 + $0x20] sm:$0xff]
        %v3946 = vld [vmem:[%s3940 + $0x28] sm:$0xff]
        %v3947 = vld [vmem:[%s3940 + $0x30] sm:$0xff]
        %v3948 = vld [vmem:[%s3940 + $0x38] sm:$0xff]
        %v3949 = vld [vmem:[%s3940 + $0x40] sm:$0xff]
        %v3951 = vsel %vm3167, %v3919, 0
        %v3954 = vsel %vm3167, %v3920, 0
        %v3957 = vsel %vm3167, %v3921, 0
        %v3960 = vsel %vm3167, %v3922, 0
        %v3963 = vsel %vm3167, %v3923, 0
        %v3966 = vsel %vm3167, %v3924, 0
        %v3969 = vsel %vm3167, %v3925, 0
        %v3972 = vsel %vm3167, %v3926, 0
        %v3975 = vsel %vm3167, %v3927, 0
        %v3978 = vsel %vm3167, %v3928, 0
        %v3981 = vsel %vm3167, %v3929, 0
        %v3984 = vsel %vm3167, %v3930, 0
        %v3987 = vsel %vm3167, %v3931, 0
        %v3990 = vsel %vm3167, %v3932, 0
        %v3993 = vsel %vm3167, %v3933, 0
        %v3996 = vsel %vm3167, %v3934, 0
        %v3999 = vsel %vm3167, %v3935, 0
        %v4002 = vsel %vm3167, %v3936, 0
        %v4005 = vsel %vm3167, %v3937, 0
        %v4008 = vsel %vm3167, %v3938, 0
        %v4011 = vsel %vm3167, %v3939, 0
        %4013 = vmatprep.subr.mxu0 0.0
        %4014 = vmatpush1.msra.mxu0 %v3941
        %4015 = vmatprep.subr.mxu0 0.0
        %4016 = vmatpush1.msra.mxu0 %v3942
        %4017 = vmatprep.subr.mxu0 0.0
        %4018 = vmatpush1.msra.mxu0 %v3943
        %4019 = vmatprep.subr.mxu0 0.0
        %4020 = vmatpush1.msra.mxu0 %v3944
        %4021 = vmatprep.subr.mxu0 0.0
        %4022 = vmatpush1.msra.mxu0 %v3945
        %4023 = vmatprep.subr.mxu0 0.0
        %4024 = vmatpush1.msra.mxu0 %v3946
        %4025 = vmatprep.subr.mxu0 0.0
        %4026 = vmatpush1.msra.mxu0 %v3947
        %4027 = vmatprep.subr.mxu0 0.0
        %4028 = vmatpush1.msra.mxu0 %v3948
        %4029 = vmatprep.subr.mxu0 0.0
        %4030 = vmatpush1.msra.mxu0 %v3949
        %4031 = vmatprep.subr.mxu0 0.0
        %4032 = vmatpush1.msra.mxu0 0.0
        %4033 = vmatprep.subr.mxu0 0.0
        %4034 = vmatpush1.msra.mxu0 0.0
        %4035 = vmatprep.subr.mxu0 0.0
        %4036 = vmatpush1.msra.mxu0 0.0
        %4037 = vmatprep.subr.mxu0 0.0
        %4038 = vmatpush1.msra.mxu0 0.0
        %4039 = vmatprep.subr.mxu0 0.0
        %4040 = vmatpush1.msra.mxu0 0.0
        %4041 = vmatprep.subr.mxu0 0.0
        %4042 = vmatpush1.msra.mxu0 0.0
        %4043 = vmatprep.subr.mxu0 0.0
        %4044 = vmatpush1.msra.mxu0 0.0
        %4045 = vmatprep.subr.mxu0 0.0
        %4046 = vmatpush1.msra.mxu0 0.0
        %4047 = vmatprep.subr.mxu0 0.0
        %4048 = vmatpush1.msra.mxu0 0.0
        %4049 = vmatprep.subr.mxu0 0.0
        %4050 = vmatpush1.msra.mxu0 0.0
        %4051 = vmatprep.subr.mxu0 0.0
        %4052 = vmatpush1.msra.mxu0 0.0
        %4053 = vmatprep.subr.mxu0 0.0
        %4054 = vmatpush1.msra.mxu0 0.0
        %4055 = vmatprep.subr.mxu0 0.0
        %4056 = vmatpush1.msra.mxu0 0.0
        %4057 = vmatprep.subr.mxu0 0.0
        %4058 = vmatpush1.msra.mxu0 0.0
        %4059 = vmatprep.subr.mxu0 0.0
        %4060 = vmatpush1.msra.mxu0 0.0
        %4061 = vmatprep.subr.mxu0 0.0
        %4062 = vmatpush1.msra.mxu0 0.0
        %4063 = vmatprep.subr.mxu0 0.0
        %4064 = vmatpush1.msra.mxu0 0.0
        %4065 = vmatprep.subr.mxu0 0.0
        %4066 = vmatpush1.msra.mxu0 0.0
        %4067 = vmatprep.subr.mxu0 0.0
        %4068 = vmatpush1.msra.mxu0 0.0
        %4069 = vmatprep.subr.mxu0 0.0
        %4070 = vmatpush1.msra.mxu0 0.0
        %4071 = vmatprep.subr.mxu0 0.0
        %4072 = vmatpush1.msra.mxu0 0.0
        %4073 = vmatprep.subr.mxu0 0.0
        %4074 = vmatpush1.msra.mxu0 0.0
        %4075 = vmatprep.subr.mxu0 0.0
        %4076 = vmatpush1.msra.mxu0 0.0
        %4077 = vmatprep.mubr.f32.mxu0 0.0
        %4078 = vmatmul.mubr.f32.gmra.mrb[0].mxu0 %v3951
        %v4079 = vpop.f32.mrb[0].mxu0
        %v4080 = vadd.f32 0.0, %v4079
        %v4081 = vpop.f32.mrb[0].mxu0
        %4082 = vmatprep.mubr.f32.mxu0 0.0
        %4083 = vmatmul.mubr.f32.gmra.mrb[0].mxu0 %v3954
        %v4084 = vpop.f32.mrb[0].mxu0
        %v4085 = vadd.f32 0.0, %v4084
        %v4086 = vpop.f32.mrb[0].mxu0
        %4087 = vmatprep.mubr.f32.mxu0 0.0
        %4088 = vmatmul.mubr.f32.gmra.mrb[0].mxu0 %v3957
        %v4089 = vpop.f32.mrb[0].mxu0
        %v4090 = vadd.f32 0.0, %v4089
        %v4091 = vpop.f32.mrb[0].mxu0
        %4092 = vmatprep.mubr.f32.mxu0 0.0
        %4093 = vmatmul.mubr.f32.gmra.mrb[0].mxu0 %v3960
        %v4094 = vpop.f32.mrb[0].mxu0
        %v4095 = vadd.f32 0.0, %v4094
        %v4096 = vpop.f32.mrb[0].mxu0
        %4097 = vmatprep.mubr.f32.mxu0 0.0
        %4098 = vmatmul.mubr.f32.gmra.mrb[0].mxu0 %v3963
        %v4099 = vpop.f32.mrb[0].mxu0
        %v4100 = vadd.f32 0.0, %v4099
        %v4101 = vpop.f32.mrb[0].mxu0
        %4102 = vmatprep.mubr.f32.mxu0 0.0
        %4103 = vmatmul.mubr.f32.gmra.mrb[0].mxu0 %v3966
        %v4104 = vpop.f32.mrb[0].mxu0
        %v4105 = vadd.f32 0.0, %v4104
        %v4106 = vpop.f32.mrb[0].mxu0
        %4107 = vmatprep.mubr.f32.mxu0 0.0
        %4108 = vmatmul.mubr.f32.gmra.mrb[0].mxu0 %v3969
        %v4109 = vpop.f32.mrb[0].mxu0
        %v4110 = vadd.f32 0.0, %v4109
        %v4111 = vpop.f32.mrb[0].mxu0
        %4112 = vmatprep.mubr.f32.mxu0 0.0
        %4113 = vmatmul.mubr.f32.gmra.mrb[0].mxu0 %v3972
        %v4114 = vpop.f32.mrb[0].mxu0
        %v4115 = vadd.f32 0.0, %v4114
        %v4116 = vpop.f32.mrb[0].mxu0
        %4117 = vmatprep.mubr.f32.mxu0 0.0
        %4118 = vmatmul.mubr.f32.gmra.mrb[0].mxu0 %v3975
        %v4119 = vpop.f32.mrb[0].mxu0
        %v4120 = vadd.f32 0.0, %v4119
        %v4121 = vpop.f32.mrb[0].mxu0
        %4122 = vmatprep.mubr.f32.mxu0 0.0
        %4123 = vmatmul.mubr.f32.gmra.mrb[0].mxu0 %v3978
        %v4124 = vpop.f32.mrb[0].mxu0
        %v4125 = vadd.f32 0.0, %v4124
        %v4126 = vpop.f32.mrb[0].mxu0
        %4127 = vmatprep.mubr.f32.mxu0 0.0
        %4128 = vmatmul.mubr.f32.gmra.mrb[0].mxu0 %v3981
        %v4129 = vpop.f32.mrb[0].mxu0
        %v4130 = vadd.f32 0.0, %v4129
        %v4131 = vpop.f32.mrb[0].mxu0
        %4132 = vmatprep.mubr.f32.mxu0 0.0
        %4133 = vmatmul.mubr.f32.gmra.mrb[0].mxu0 %v3984
        %v4134 = vpop.f32.mrb[0].mxu0
        %v4135 = vadd.f32 0.0, %v4134
        %v4136 = vpop.f32.mrb[0].mxu0
        %4137 = vmatprep.mubr.f32.mxu0 0.0
        %4138 = vmatmul.mubr.f32.gmra.mrb[0].mxu0 %v3987
        %v4139 = vpop.f32.mrb[0].mxu0
        %v4140 = vadd.f32 0.0, %v4139
        %v4141 = vpop.f32.mrb[0].mxu0
        %4142 = vmatprep.mubr.f32.mxu0 0.0
        %4143 = vmatmul.mubr.f32.gmra.mrb[0].mxu0 %v3990
        %v4144 = vpop.f32.mrb[0].mxu0
        %v4145 = vadd.f32 0.0, %v4144
        %v4146 = vpop.f32.mrb[0].mxu0
        %4147 = vmatprep.mubr.f32.mxu0 0.0
        %4148 = vmatmul.mubr.f32.gmra.mrb[0].mxu0 %v3993
        %v4149 = vpop.f32.mrb[0].mxu0
        %v4150 = vadd.f32 0.0, %v4149
        %v4151 = vpop.f32.mrb[0].mxu0
        %4152 = vmatprep.mubr.f32.mxu0 0.0
        %4153 = vmatmul.mubr.f32.gmra.mrb[0].mxu0 %v3996
        %v4154 = vpop.f32.mrb[0].mxu0
        %v4155 = vadd.f32 0.0, %v4154
        %v4156 = vpop.f32.mrb[0].mxu0
        %4157 = vmatprep.mubr.f32.mxu0 0.0
        %4158 = vmatmul.mubr.f32.gmra.mrb[0].mxu0 %v3999
        %v4159 = vpop.f32.mrb[0].mxu0
        %v4160 = vadd.f32 0.0, %v4159
        %v4161 = vpop.f32.mrb[0].mxu0
        %4162 = vmatprep.mubr.f32.mxu0 0.0
        %4163 = vmatmul.mubr.f32.gmra.mrb[0].mxu0 %v4002
        %v4164 = vpop.f32.mrb[0].mxu0
        %v4165 = vadd.f32 0.0, %v4164
        %v4166 = vpop.f32.mrb[0].mxu0
        %4167 = vmatprep.mubr.f32.mxu0 0.0
        %4168 = vmatmul.mubr.f32.gmra.mrb[0].mxu0 %v4005
        %v4169 = vpop.f32.mrb[0].mxu0
        %v4170 = vadd.f32 0.0, %v4169
        %v4171 = vpop.f32.mrb[0].mxu0
        %4172 = vmatprep.mubr.f32.mxu0 0.0
        %4173 = vmatmul.mubr.f32.gmra.mrb[0].mxu0 %v4008
        %v4174 = vpop.f32.mrb[0].mxu0
        %v4175 = vadd.f32 0.0, %v4174
        %v4176 = vpop.f32.mrb[0].mxu0
        %4177 = vmatprep.mubr.f32.mxu0 0.0
        %4178 = vmatmul.mubr.f32.gmra.mrb[0].mxu0 %v4011
        %v4179 = vpop.f32.mrb[0].mxu0
        %v4180 = vadd.f32 0.0, %v4179
        %v4181 = vpop.f32.mrb[0].mxu0
        %4182 = vdwg.mxu0
        %v4183 = vadd.f32 %v3898, %v4080
        %v4184 = vadd.f32 %v3899, %v4085
        %v4185 = vadd.f32 %v3900, %v4090
        %v4186 = vadd.f32 %v3901, %v4095
        %v4187 = vadd.f32 %v3902, %v4100
        %v4188 = vadd.f32 %v3903, %v4105
        %v4189 = vadd.f32 %v3904, %v4110
        %v4190 = vadd.f32 %v3905, %v4115
        %v4191 = vadd.f32 %v3906, %v4120
        %v4192 = vadd.f32 %v3907, %v4125
        %v4193 = vadd.f32 %v3908, %v4130
        %v4194 = vadd.f32 %v3909, %v4135
        %v4195 = vadd.f32 %v3910, %v4140
        %v4196 = vadd.f32 %v3911, %v4145
        %v4197 = vadd.f32 %v3912, %v4150
        %v4198 = vadd.f32 %v3913, %v4155
        %v4199 = vadd.f32 %v3914, %v4160
        %v4200 = vadd.f32 %v3915, %v4165
        %v4201 = vadd.f32 %v3916, %v4170
        %v4202 = vadd.f32 %v3917, %v4175
        %v4203 = vadd.f32 %v3918, %v4180
        %v4204 = vld [vmem:[#allocation2 + $0x1c] sm:$0xff]
        %v4205 = vld [vmem:[#allocation2 + $0x24] sm:$0xff]
        %v4206 = vld [vmem:[#allocation2 + $0x2c] sm:$0xff]
        %v4207 = vld [vmem:[#allocation2 + $0x34] sm:$0xff]
        %v4208 = vld [vmem:[#allocation2 + $0x3c] sm:$0xff]
        %v4209 = vld [vmem:[#allocation2 + $0x44] sm:$0xff]
        %v4210 = vld [vmem:[#allocation2 + $0x4c] sm:$0xff]
        %v4211 = vld [vmem:[#allocation2 + $0x54] sm:$0xff]
        %v4212 = vld [vmem:[#allocation2 + $0x5c] sm:$0xff]
        %v4213 = vld [vmem:[#allocation2 + $0x64] sm:$0xff]
        %v4214 = vld [vmem:[#allocation2 + $0x6c] sm:$0xff]
        %v4215 = vld [vmem:[#allocation2 + $0x74] sm:$0xff]
        %v4216 = vld [vmem:[#allocation2 + $0x7c] sm:$0xff]
        %v4217 = vld [vmem:[#allocation2 + $0x84] sm:$0xff]
        %v4218 = vld [vmem:[#allocation2 + $0x8c] sm:$0xff]
        %v4219 = vld [vmem:[#allocation2 + $0x94] sm:$0xff]
        %v4220 = vld [vmem:[#allocation2 + $0x9c] sm:$0xff]
        %v4221 = vld [vmem:[#allocation2 + $0xa4] sm:$0xff]
        %v4222 = vld [vmem:[#allocation2 + $0xac] sm:$0xff]
        %v4223 = vld [vmem:[#allocation2 + $0xb4] sm:$0xff]
        %v4224 = vld [vmem:[#allocation2 + $0xbc] sm:$0xff]
        %s4225 = scalar_lea.vmem %s5, 288
        %v4226 = vld [vmem:[%s4225] sm:$0xff]
        %v4227 = vld [vmem:[%s4225 + $0x8] sm:$0xff]
        %v4228 = vld [vmem:[%s4225 + $0x10] sm:$0xff]
        %v4229 = vld [vmem:[%s4225 + $0x18] sm:$0xff]
        %v4230 = vld [vmem:[%s4225 + $0x20] sm:$0xff]
        %v4231 = vld [vmem:[%s4225 + $0x28] sm:$0xff]
        %v4232 = vld [vmem:[%s4225 + $0x30] sm:$0xff]
        %v4233 = vld [vmem:[%s4225 + $0x38] sm:$0xff]
        %v4234 = vld [vmem:[%s4225 + $0x40] sm:$0xff]
        %v4236 = vsel %vm3167, %v4204, 0
        %v4239 = vsel %vm3167, %v4205, 0
        %v4242 = vsel %vm3167, %v4206, 0
        %v4245 = vsel %vm3167, %v4207, 0
        %v4248 = vsel %vm3167, %v4208, 0
        %v4251 = vsel %vm3167, %v4209, 0
        %v4254 = vsel %vm3167, %v4210, 0
        %v4257 = vsel %vm3167, %v4211, 0
        %v4260 = vsel %vm3167, %v4212, 0
        %v4263 = vsel %vm3167, %v4213, 0
        %v4266 = vsel %vm3167, %v4214, 0
        %v4269 = vsel %vm3167, %v4215, 0
        %v4272 = vsel %vm3167, %v4216, 0
        %v4275 = vsel %vm3167, %v4217, 0
        %v4278 = vsel %vm3167, %v4218, 0
        %v4281 = vsel %vm3167, %v4219, 0
        %v4284 = vsel %vm3167, %v4220, 0
        %v4287 = vsel %vm3167, %v4221, 0
        %v4290 = vsel %vm3167, %v4222, 0
        %v4293 = vsel %vm3167, %v4223, 0
        %v4296 = vsel %vm3167, %v4224, 0
        %4298 = vmatprep.subr.mxu0 0.0
        %4299 = vmatpush1.msra.mxu0 %v4226
        %4300 = vmatprep.subr.mxu0 0.0
        %4301 = vmatpush1.msra.mxu0 %v4227
        %4302 = vmatprep.subr.mxu0 0.0
        %4303 = vmatpush1.msra.mxu0 %v4228
        %4304 = vmatprep.subr.mxu0 0.0
        %4305 = vmatpush1.msra.mxu0 %v4229
        %4306 = vmatprep.subr.mxu0 0.0
        %4307 = vmatpush1.msra.mxu0 %v4230
        %4308 = vmatprep.subr.mxu0 0.0
        %4309 = vmatpush1.msra.mxu0 %v4231
        %4310 = vmatprep.subr.mxu0 0.0
        %4311 = vmatpush1.msra.mxu0 %v4232
        %4312 = vmatprep.subr.mxu0 0.0
        %4313 = vmatpush1.msra.mxu0 %v4233
        %4314 = vmatprep.subr.mxu0 0.0
        %4315 = vmatpush1.msra.mxu0 %v4234
        %4316 = vmatprep.subr.mxu0 0.0
        %4317 = vmatpush1.msra.mxu0 0.0
        %4318 = vmatprep.subr.mxu0 0.0
        %4319 = vmatpush1.msra.mxu0 0.0
        %4320 = vmatprep.subr.mxu0 0.0
        %4321 = vmatpush1.msra.mxu0 0.0
        %4322 = vmatprep.subr.mxu0 0.0
        %4323 = vmatpush1.msra.mxu0 0.0
        %4324 = vmatprep.subr.mxu0 0.0
        %4325 = vmatpush1.msra.mxu0 0.0
        %4326 = vmatprep.subr.mxu0 0.0
        %4327 = vmatpush1.msra.mxu0 0.0
        %4328 = vmatprep.subr.mxu0 0.0
        %4329 = vmatpush1.msra.mxu0 0.0
        %4330 = vmatprep.subr.mxu0 0.0
        %4331 = vmatpush1.msra.mxu0 0.0
        %4332 = vmatprep.subr.mxu0 0.0
        %4333 = vmatpush1.msra.mxu0 0.0
        %4334 = vmatprep.subr.mxu0 0.0
        %4335 = vmatpush1.msra.mxu0 0.0
        %4336 = vmatprep.subr.mxu0 0.0
        %4337 = vmatpush1.msra.mxu0 0.0
        %4338 = vmatprep.subr.mxu0 0.0
        %4339 = vmatpush1.msra.mxu0 0.0
        %4340 = vmatprep.subr.mxu0 0.0
        %4341 = vmatpush1.msra.mxu0 0.0
        %4342 = vmatprep.subr.mxu0 0.0
        %4343 = vmatpush1.msra.mxu0 0.0
        %4344 = vmatprep.subr.mxu0 0.0
        %4345 = vmatpush1.msra.mxu0 0.0
        %4346 = vmatprep.subr.mxu0 0.0
        %4347 = vmatpush1.msra.mxu0 0.0
        %4348 = vmatprep.subr.mxu0 0.0
        %4349 = vmatpush1.msra.mxu0 0.0
        %4350 = vmatprep.subr.mxu0 0.0
        %4351 = vmatpush1.msra.mxu0 0.0
        %4352 = vmatprep.subr.mxu0 0.0
        %4353 = vmatpush1.msra.mxu0 0.0
        %4354 = vmatprep.subr.mxu0 0.0
        %4355 = vmatpush1.msra.mxu0 0.0
        %4356 = vmatprep.subr.mxu0 0.0
        %4357 = vmatpush1.msra.mxu0 0.0
        %4358 = vmatprep.subr.mxu0 0.0
        %4359 = vmatpush1.msra.mxu0 0.0
        %4360 = vmatprep.subr.mxu0 0.0
        %4361 = vmatpush1.msra.mxu0 0.0
        %4362 = vmatprep.mubr.f32.mxu0 0.0
        %4363 = vmatmul.mubr.f32.gmra.mrb[0].mxu0 %v4236
        %v4364 = vpop.f32.mrb[0].mxu0
        %v4365 = vadd.f32 0.0, %v4364
        %v4366 = vpop.f32.mrb[0].mxu0
        %4367 = vmatprep.mubr.f32.mxu0 0.0
        %4368 = vmatmul.mubr.f32.gmra.mrb[0].mxu0 %v4239
        %v4369 = vpop.f32.mrb[0].mxu0
        %v4370 = vadd.f32 0.0, %v4369
        %v4371 = vpop.f32.mrb[0].mxu0
        %4372 = vmatprep.mubr.f32.mxu0 0.0
        %4373 = vmatmul.mubr.f32.gmra.mrb[0].mxu0 %v4242
        %v4374 = vpop.f32.mrb[0].mxu0
        %v4375 = vadd.f32 0.0, %v4374
        %v4376 = vpop.f32.mrb[0].mxu0
        %4377 = vmatprep.mubr.f32.mxu0 0.0
        %4378 = vmatmul.mubr.f32.gmra.mrb[0].mxu0 %v4245
        %v4379 = vpop.f32.mrb[0].mxu0
        %v4380 = vadd.f32 0.0, %v4379
        %v4381 = vpop.f32.mrb[0].mxu0
        %4382 = vmatprep.mubr.f32.mxu0 0.0
        %4383 = vmatmul.mubr.f32.gmra.mrb[0].mxu0 %v4248
        %v4384 = vpop.f32.mrb[0].mxu0
        %v4385 = vadd.f32 0.0, %v4384
        %v4386 = vpop.f32.mrb[0].mxu0
        %4387 = vmatprep.mubr.f32.mxu0 0.0
        %4388 = vmatmul.mubr.f32.gmra.mrb[0].mxu0 %v4251
        %v4389 = vpop.f32.mrb[0].mxu0
        %v4390 = vadd.f32 0.0, %v4389
        %v4391 = vpop.f32.mrb[0].mxu0
        %4392 = vmatprep.mubr.f32.mxu0 0.0
        %4393 = vmatmul.mubr.f32.gmra.mrb[0].mxu0 %v4254
        %v4394 = vpop.f32.mrb[0].mxu0
        %v4395 = vadd.f32 0.0, %v4394
        %v4396 = vpop.f32.mrb[0].mxu0
        %4397 = vmatprep.mubr.f32.mxu0 0.0
        %4398 = vmatmul.mubr.f32.gmra.mrb[0].mxu0 %v4257
        %v4399 = vpop.f32.mrb[0].mxu0
        %v4400 = vadd.f32 0.0, %v4399
        %v4401 = vpop.f32.mrb[0].mxu0
        %4402 = vmatprep.mubr.f32.mxu0 0.0
        %4403 = vmatmul.mubr.f32.gmra.mrb[0].mxu0 %v4260
        %v4404 = vpop.f32.mrb[0].mxu0
        %v4405 = vadd.f32 0.0, %v4404
        %v4406 = vpop.f32.mrb[0].mxu0
        %4407 = vmatprep.mubr.f32.mxu0 0.0
        %4408 = vmatmul.mubr.f32.gmra.mrb[0].mxu0 %v4263
        %v4409 = vpop.f32.mrb[0].mxu0
        %v4410 = vadd.f32 0.0, %v4409
        %v4411 = vpop.f32.mrb[0].mxu0
        %4412 = vmatprep.mubr.f32.mxu0 0.0
        %4413 = vmatmul.mubr.f32.gmra.mrb[0].mxu0 %v4266
        %v4414 = vpop.f32.mrb[0].mxu0
        %v4415 = vadd.f32 0.0, %v4414
        %v4416 = vpop.f32.mrb[0].mxu0
        %4417 = vmatprep.mubr.f32.mxu0 0.0
        %4418 = vmatmul.mubr.f32.gmra.mrb[0].mxu0 %v4269
        %v4419 = vpop.f32.mrb[0].mxu0
        %v4420 = vadd.f32 0.0, %v4419
        %v4421 = vpop.f32.mrb[0].mxu0
        %4422 = vmatprep.mubr.f32.mxu0 0.0
        %4423 = vmatmul.mubr.f32.gmra.mrb[0].mxu0 %v4272
        %v4424 = vpop.f32.mrb[0].mxu0
        %v4425 = vadd.f32 0.0, %v4424
        %v4426 = vpop.f32.mrb[0].mxu0
        %4427 = vmatprep.mubr.f32.mxu0 0.0
        %4428 = vmatmul.mubr.f32.gmra.mrb[0].mxu0 %v4275
        %v4429 = vpop.f32.mrb[0].mxu0
        %v4430 = vadd.f32 0.0, %v4429
        %v4431 = vpop.f32.mrb[0].mxu0
        %4432 = vmatprep.mubr.f32.mxu0 0.0
        %4433 = vmatmul.mubr.f32.gmra.mrb[0].mxu0 %v4278
        %v4434 = vpop.f32.mrb[0].mxu0
        %v4435 = vadd.f32 0.0, %v4434
        %v4436 = vpop.f32.mrb[0].mxu0
        %4437 = vmatprep.mubr.f32.mxu0 0.0
        %4438 = vmatmul.mubr.f32.gmra.mrb[0].mxu0 %v4281
        %v4439 = vpop.f32.mrb[0].mxu0
        %v4440 = vadd.f32 0.0, %v4439
        %v4441 = vpop.f32.mrb[0].mxu0
        %4442 = vmatprep.mubr.f32.mxu0 0.0
        %4443 = vmatmul.mubr.f32.gmra.mrb[0].mxu0 %v4284
        %v4444 = vpop.f32.mrb[0].mxu0
        %v4445 = vadd.f32 0.0, %v4444
        %v4446 = vpop.f32.mrb[0].mxu0
        %4447 = vmatprep.mubr.f32.mxu0 0.0
        %4448 = vmatmul.mubr.f32.gmra.mrb[0].mxu0 %v4287
        %v4449 = vpop.f32.mrb[0].mxu0
        %v4450 = vadd.f32 0.0, %v4449
        %v4451 = vpop.f32.mrb[0].mxu0
        %4452 = vmatprep.mubr.f32.mxu0 0.0
        %4453 = vmatmul.mubr.f32.gmra.mrb[0].mxu0 %v4290
        %v4454 = vpop.f32.mrb[0].mxu0
        %v4455 = vadd.f32 0.0, %v4454
        %v4456 = vpop.f32.mrb[0].mxu0
        %4457 = vmatprep.mubr.f32.mxu0 0.0
        %4458 = vmatmul.mubr.f32.gmra.mrb[0].mxu0 %v4293
        %v4459 = vpop.f32.mrb[0].mxu0
        %v4460 = vadd.f32 0.0, %v4459
        %v4461 = vpop.f32.mrb[0].mxu0
        %4462 = vmatprep.mubr.f32.mxu0 0.0
        %4463 = vmatmul.mubr.f32.gmra.mrb[0].mxu0 %v4296
        %v4464 = vpop.f32.mrb[0].mxu0
        %v4465 = vadd.f32 0.0, %v4464
        %v4466 = vpop.f32.mrb[0].mxu0
        %4467 = vdwg.mxu0
        %v4468 = vadd.f32 %v4183, %v4365
        %v4469 = vadd.f32 %v4184, %v4370
        %v4470 = vadd.f32 %v4185, %v4375
        %v4471 = vadd.f32 %v4186, %v4380
        %v4472 = vadd.f32 %v4187, %v4385
        %v4473 = vadd.f32 %v4188, %v4390
        %v4474 = vadd.f32 %v4189, %v4395
        %v4475 = vadd.f32 %v4190, %v4400
        %v4476 = vadd.f32 %v4191, %v4405
        %v4477 = vadd.f32 %v4192, %v4410
        %v4478 = vadd.f32 %v4193, %v4415
        %v4479 = vadd.f32 %v4194, %v4420
        %v4480 = vadd.f32 %v4195, %v4425
        %v4481 = vadd.f32 %v4196, %v4430
        %v4482 = vadd.f32 %v4197, %v4435
        %v4483 = vadd.f32 %v4198, %v4440
        %v4484 = vadd.f32 %v4199, %v4445
        %v4485 = vadd.f32 %v4200, %v4450
        %v4486 = vadd.f32 %v4201, %v4455
        %v4487 = vadd.f32 %v4202, %v4460
        %v4488 = vadd.f32 %v4203, %v4465
        %v4489 = vld [vmem:[#allocation2 + $0x1d] sm:$0xff]
        %v4490 = vld [vmem:[#allocation2 + $0x25] sm:$0xff]
        %v4491 = vld [vmem:[#allocation2 + $0x2d] sm:$0xff]
        %v4492 = vld [vmem:[#allocation2 + $0x35] sm:$0xff]
        %v4493 = vld [vmem:[#allocation2 + $0x3d] sm:$0xff]
        %v4494 = vld [vmem:[#allocation2 + $0x45] sm:$0xff]
        %v4495 = vld [vmem:[#allocation2 + $0x4d] sm:$0xff]
        %v4496 = vld [vmem:[#allocation2 + $0x55] sm:$0xff]
        %v4497 = vld [vmem:[#allocation2 + $0x5d] sm:$0xff]
        %v4498 = vld [vmem:[#allocation2 + $0x65] sm:$0xff]
        %v4499 = vld [vmem:[#allocation2 + $0x6d] sm:$0xff]
        %v4500 = vld [vmem:[#allocation2 + $0x75] sm:$0xff]
        %v4501 = vld [vmem:[#allocation2 + $0x7d] sm:$0xff]
        %v4502 = vld [vmem:[#allocation2 + $0x85] sm:$0xff]
        %v4503 = vld [vmem:[#allocation2 + $0x8d] sm:$0xff]
        %v4504 = vld [vmem:[#allocation2 + $0x95] sm:$0xff]
        %v4505 = vld [vmem:[#allocation2 + $0x9d] sm:$0xff]
        %v4506 = vld [vmem:[#allocation2 + $0xa5] sm:$0xff]
        %v4507 = vld [vmem:[#allocation2 + $0xad] sm:$0xff]
        %v4508 = vld [vmem:[#allocation2 + $0xb5] sm:$0xff]
        %v4509 = vld [vmem:[#allocation2 + $0xbd] sm:$0xff]
        %s4510 = scalar_lea.vmem %s5, 360
        %v4511 = vld [vmem:[%s4510] sm:$0xff]
        %v4512 = vld [vmem:[%s4510 + $0x8] sm:$0xff]
        %v4513 = vld [vmem:[%s4510 + $0x10] sm:$0xff]
        %v4514 = vld [vmem:[%s4510 + $0x18] sm:$0xff]
        %v4515 = vld [vmem:[%s4510 + $0x20] sm:$0xff]
        %v4516 = vld [vmem:[%s4510 + $0x28] sm:$0xff]
        %v4517 = vld [vmem:[%s4510 + $0x30] sm:$0xff]
        %v4518 = vld [vmem:[%s4510 + $0x38] sm:$0xff]
        %v4519 = vld [vmem:[%s4510 + $0x40] sm:$0xff]
        %v4521 = vsel %vm3167, %v4489, 0
        %v4524 = vsel %vm3167, %v4490, 0
        %v4527 = vsel %vm3167, %v4491, 0
        %v4530 = vsel %vm3167, %v4492, 0
        %v4533 = vsel %vm3167, %v4493, 0
        %v4536 = vsel %vm3167, %v4494, 0
        %v4539 = vsel %vm3167, %v4495, 0
        %v4542 = vsel %vm3167, %v4496, 0
        %v4545 = vsel %vm3167, %v4497, 0
        %v4548 = vsel %vm3167, %v4498, 0
        %v4551 = vsel %vm3167, %v4499, 0
        %v4554 = vsel %vm3167, %v4500, 0
        %v4557 = vsel %vm3167, %v4501, 0
        %v4560 = vsel %vm3167, %v4502, 0
        %v4563 = vsel %vm3167, %v4503, 0
        %v4566 = vsel %vm3167, %v4504, 0
        %v4569 = vsel %vm3167, %v4505, 0
        %v4572 = vsel %vm3167, %v4506, 0
        %v4575 = vsel %vm3167, %v4507, 0
        %v4578 = vsel %vm3167, %v4508, 0
        %v4581 = vsel %vm3167, %v4509, 0
        %4583 = vmatprep.subr.mxu0 0.0
        %4584 = vmatpush1.msra.mxu0 %v4511
        %4585 = vmatprep.subr.mxu0 0.0
        %4586 = vmatpush1.msra.mxu0 %v4512
        %4587 = vmatprep.subr.mxu0 0.0
        %4588 = vmatpush1.msra.mxu0 %v4513
        %4589 = vmatprep.subr.mxu0 0.0
        %4590 = vmatpush1.msra.mxu0 %v4514
        %4591 = vmatprep.subr.mxu0 0.0
        %4592 = vmatpush1.msra.mxu0 %v4515
        %4593 = vmatprep.subr.mxu0 0.0
        %4594 = vmatpush1.msra.mxu0 %v4516
        %4595 = vmatprep.subr.mxu0 0.0
        %4596 = vmatpush1.msra.mxu0 %v4517
        %4597 = vmatprep.subr.mxu0 0.0
        %4598 = vmatpush1.msra.mxu0 %v4518
        %4599 = vmatprep.subr.mxu0 0.0
        %4600 = vmatpush1.msra.mxu0 %v4519
        %4601 = vmatprep.subr.mxu0 0.0
        %4602 = vmatpush1.msra.mxu0 0.0
        %4603 = vmatprep.subr.mxu0 0.0
        %4604 = vmatpush1.msra.mxu0 0.0
        %4605 = vmatprep.subr.mxu0 0.0
        %4606 = vmatpush1.msra.mxu0 0.0
        %4607 = vmatprep.subr.mxu0 0.0
        %4608 = vmatpush1.msra.mxu0 0.0
        %4609 = vmatprep.subr.mxu0 0.0
        %4610 = vmatpush1.msra.mxu0 0.0
        %4611 = vmatprep.subr.mxu0 0.0
        %4612 = vmatpush1.msra.mxu0 0.0
        %4613 = vmatprep.subr.mxu0 0.0
        %4614 = vmatpush1.msra.mxu0 0.0
        %4615 = vmatprep.subr.mxu0 0.0
        %4616 = vmatpush1.msra.mxu0 0.0
        %4617 = vmatprep.subr.mxu0 0.0
        %4618 = vmatpush1.msra.mxu0 0.0
        %4619 = vmatprep.subr.mxu0 0.0
        %4620 = vmatpush1.msra.mxu0 0.0
        %4621 = vmatprep.subr.mxu0 0.0
        %4622 = vmatpush1.msra.mxu0 0.0
        %4623 = vmatprep.subr.mxu0 0.0
        %4624 = vmatpush1.msra.mxu0 0.0
        %4625 = vmatprep.subr.mxu0 0.0
        %4626 = vmatpush1.msra.mxu0 0.0
        %4627 = vmatprep.subr.mxu0 0.0
        %4628 = vmatpush1.msra.mxu0 0.0
        %4629 = vmatprep.subr.mxu0 0.0
        %4630 = vmatpush1.msra.mxu0 0.0
        %4631 = vmatprep.subr.mxu0 0.0
        %4632 = vmatpush1.msra.mxu0 0.0
        %4633 = vmatprep.subr.mxu0 0.0
        %4634 = vmatpush1.msra.mxu0 0.0
        %4635 = vmatprep.subr.mxu0 0.0
        %4636 = vmatpush1.msra.mxu0 0.0
        %4637 = vmatprep.subr.mxu0 0.0
        %4638 = vmatpush1.msra.mxu0 0.0
        %4639 = vmatprep.subr.mxu0 0.0
        %4640 = vmatpush1.msra.mxu0 0.0
        %4641 = vmatprep.subr.mxu0 0.0
        %4642 = vmatpush1.msra.mxu0 0.0
        %4643 = vmatprep.subr.mxu0 0.0
        %4644 = vmatpush1.msra.mxu0 0.0
        %4645 = vmatprep.subr.mxu0 0.0
        %4646 = vmatpush1.msra.mxu0 0.0
        %4647 = vmatprep.mubr.f32.mxu0 0.0
        %4648 = vmatmul.mubr.f32.gmra.mrb[0].mxu0 %v4521
        %v4649 = vpop.f32.mrb[0].mxu0
        %v4650 = vadd.f32 0.0, %v4649
        %v4651 = vpop.f32.mrb[0].mxu0
        %4652 = vmatprep.mubr.f32.mxu0 0.0
        %4653 = vmatmul.mubr.f32.gmra.mrb[0].mxu0 %v4524
        %v4654 = vpop.f32.mrb[0].mxu0
        %v4655 = vadd.f32 0.0, %v4654
        %v4656 = vpop.f32.mrb[0].mxu0
        %4657 = vmatprep.mubr.f32.mxu0 0.0
        %4658 = vmatmul.mubr.f32.gmra.mrb[0].mxu0 %v4527
        %v4659 = vpop.f32.mrb[0].mxu0
        %v4660 = vadd.f32 0.0, %v4659
        %v4661 = vpop.f32.mrb[0].mxu0
        %4662 = vmatprep.mubr.f32.mxu0 0.0
        %4663 = vmatmul.mubr.f32.gmra.mrb[0].mxu0 %v4530
        %v4664 = vpop.f32.mrb[0].mxu0
        %v4665 = vadd.f32 0.0, %v4664
        %v4666 = vpop.f32.mrb[0].mxu0
        %4667 = vmatprep.mubr.f32.mxu0 0.0
        %4668 = vmatmul.mubr.f32.gmra.mrb[0].mxu0 %v4533
        %v4669 = vpop.f32.mrb[0].mxu0
        %v4670 = vadd.f32 0.0, %v4669
        %v4671 = vpop.f32.mrb[0].mxu0
        %4672 = vmatprep.mubr.f32.mxu0 0.0
        %4673 = vmatmul.mubr.f32.gmra.mrb[0].mxu0 %v4536
        %v4674 = vpop.f32.mrb[0].mxu0
        %v4675 = vadd.f32 0.0, %v4674
        %v4676 = vpop.f32.mrb[0].mxu0
        %4677 = vmatprep.mubr.f32.mxu0 0.0
        %4678 = vmatmul.mubr.f32.gmra.mrb[0].mxu0 %v4539
        %v4679 = vpop.f32.mrb[0].mxu0
        %v4680 = vadd.f32 0.0, %v4679
        %v4681 = vpop.f32.mrb[0].mxu0
        %4682 = vmatprep.mubr.f32.mxu0 0.0
        %4683 = vmatmul.mubr.f32.gmra.mrb[0].mxu0 %v4542
        %v4684 = vpop.f32.mrb[0].mxu0
        %v4685 = vadd.f32 0.0, %v4684
        %v4686 = vpop.f32.mrb[0].mxu0
        %4687 = vmatprep.mubr.f32.mxu0 0.0
        %4688 = vmatmul.mubr.f32.gmra.mrb[0].mxu0 %v4545
        %v4689 = vpop.f32.mrb[0].mxu0
        %v4690 = vadd.f32 0.0, %v4689
        %v4691 = vpop.f32.mrb[0].mxu0
        %4692 = vmatprep.mubr.f32.mxu0 0.0
        %4693 = vmatmul.mubr.f32.gmra.mrb[0].mxu0 %v4548
        %v4694 = vpop.f32.mrb[0].mxu0
        %v4695 = vadd.f32 0.0, %v4694
        %v4696 = vpop.f32.mrb[0].mxu0
        %4697 = vmatprep.mubr.f32.mxu0 0.0
        %4698 = vmatmul.mubr.f32.gmra.mrb[0].mxu0 %v4551
        %v4699 = vpop.f32.mrb[0].mxu0
        %v4700 = vadd.f32 0.0, %v4699
        %v4701 = vpop.f32.mrb[0].mxu0
        %4702 = vmatprep.mubr.f32.mxu0 0.0
        %4703 = vmatmul.mubr.f32.gmra.mrb[0].mxu0 %v4554
        %v4704 = vpop.f32.mrb[0].mxu0
        %v4705 = vadd.f32 0.0, %v4704
        %v4706 = vpop.f32.mrb[0].mxu0
        %4707 = vmatprep.mubr.f32.mxu0 0.0
        %4708 = vmatmul.mubr.f32.gmra.mrb[0].mxu0 %v4557
        %v4709 = vpop.f32.mrb[0].mxu0
        %v4710 = vadd.f32 0.0, %v4709
        %v4711 = vpop.f32.mrb[0].mxu0
        %4712 = vmatprep.mubr.f32.mxu0 0.0
        %4713 = vmatmul.mubr.f32.gmra.mrb[0].mxu0 %v4560
        %v4714 = vpop.f32.mrb[0].mxu0
        %v4715 = vadd.f32 0.0, %v4714
        %v4716 = vpop.f32.mrb[0].mxu0
        %4717 = vmatprep.mubr.f32.mxu0 0.0
        %4718 = vmatmul.mubr.f32.gmra.mrb[0].mxu0 %v4563
        %v4719 = vpop.f32.mrb[0].mxu0
        %v4720 = vadd.f32 0.0, %v4719
        %v4721 = vpop.f32.mrb[0].mxu0
        %4722 = vmatprep.mubr.f32.mxu0 0.0
        %4723 = vmatmul.mubr.f32.gmra.mrb[0].mxu0 %v4566
        %v4724 = vpop.f32.mrb[0].mxu0
        %v4725 = vadd.f32 0.0, %v4724
        %v4726 = vpop.f32.mrb[0].mxu0
        %4727 = vmatprep.mubr.f32.mxu0 0.0
        %4728 = vmatmul.mubr.f32.gmra.mrb[0].mxu0 %v4569
        %v4729 = vpop.f32.mrb[0].mxu0
        %v4730 = vadd.f32 0.0, %v4729
        %v4731 = vpop.f32.mrb[0].mxu0
        %4732 = vmatprep.mubr.f32.mxu0 0.0
        %4733 = vmatmul.mubr.f32.gmra.mrb[0].mxu0 %v4572
        %v4734 = vpop.f32.mrb[0].mxu0
        %v4735 = vadd.f32 0.0, %v4734
        %v4736 = vpop.f32.mrb[0].mxu0
        %4737 = vmatprep.mubr.f32.mxu0 0.0
        %4738 = vmatmul.mubr.f32.gmra.mrb[0].mxu0 %v4575
        %v4739 = vpop.f32.mrb[0].mxu0
        %v4740 = vadd.f32 0.0, %v4739
        %v4741 = vpop.f32.mrb[0].mxu0
        %4742 = vmatprep.mubr.f32.mxu0 0.0
        %4743 = vmatmul.mubr.f32.gmra.mrb[0].mxu0 %v4578
        %v4744 = vpop.f32.mrb[0].mxu0
        %v4745 = vadd.f32 0.0, %v4744
        %v4746 = vpop.f32.mrb[0].mxu0
        %4747 = vmatprep.mubr.f32.mxu0 0.0
        %4748 = vmatmul.mubr.f32.gmra.mrb[0].mxu0 %v4581
        %v4749 = vpop.f32.mrb[0].mxu0
        %v4750 = vadd.f32 0.0, %v4749
        %v4751 = vpop.f32.mrb[0].mxu0
        %4752 = vdwg.mxu0
        %v4753 = vadd.f32 %v4468, %v4650
        %v4754 = vadd.f32 %v4469, %v4655
        %v4755 = vadd.f32 %v4470, %v4660
        %v4756 = vadd.f32 %v4471, %v4665
        %v4757 = vadd.f32 %v4472, %v4670
        %v4758 = vadd.f32 %v4473, %v4675
        %v4759 = vadd.f32 %v4474, %v4680
        %v4760 = vadd.f32 %v4475, %v4685
        %v4761 = vadd.f32 %v4476, %v4690
        %v4762 = vadd.f32 %v4477, %v4695
        %v4763 = vadd.f32 %v4478, %v4700
        %v4764 = vadd.f32 %v4479, %v4705
        %v4765 = vadd.f32 %v4480, %v4710
        %v4766 = vadd.f32 %v4481, %v4715
        %v4767 = vadd.f32 %v4482, %v4720
        %v4768 = vadd.f32 %v4483, %v4725
        %v4769 = vadd.f32 %v4484, %v4730
        %v4770 = vadd.f32 %v4485, %v4735
        %v4771 = vadd.f32 %v4486, %v4740
        %v4772 = vadd.f32 %v4487, %v4745
        %v4773 = vadd.f32 %v4488, %v4750
        %v4774 = vld [vmem:[#allocation2 + $0x29] sm:$0xff]
        %v4775 = vld [vmem:[#allocation2 + $0x31] sm:$0xff]
        %v4776 = vld [vmem:[#allocation2 + $0x39] sm:$0xff]
        %v4777 = vld [vmem:[#allocation2 + $0x41] sm:$0xff]
        %v4778 = vld [vmem:[#allocation2 + $0x49] sm:$0xff]
        %v4779 = vld [vmem:[#allocation2 + $0x51] sm:$0xff]
        %v4780 = vld [vmem:[#allocation2 + $0x59] sm:$0xff]
        %v4781 = vld [vmem:[#allocation2 + $0x61] sm:$0xff]
        %v4782 = vld [vmem:[#allocation2 + $0x69] sm:$0xff]
        %v4783 = vld [vmem:[#allocation2 + $0x71] sm:$0xff]
        %v4784 = vld [vmem:[#allocation2 + $0x79] sm:$0xff]
        %v4785 = vld [vmem:[#allocation2 + $0x81] sm:$0xff]
        %v4786 = vld [vmem:[#allocation2 + $0x89] sm:$0xff]
        %v4787 = vld [vmem:[#allocation2 + $0x91] sm:$0xff]
        %v4788 = vld [vmem:[#allocation2 + $0x99] sm:$0xff]
        %v4789 = vld [vmem:[#allocation2 + $0xa1] sm:$0xff]
        %v4790 = vld [vmem:[#allocation2 + $0xa9] sm:$0xff]
        %v4791 = vld [vmem:[#allocation2 + $0xb1] sm:$0xff]
        %v4792 = vld [vmem:[#allocation2 + $0xb9] sm:$0xff]
        %v4793 = vld [vmem:[#allocation2 + $0xc1] sm:$0xff]
        %v4794 = vld [vmem:[#allocation2 + $0xc9] sm:$0xff]
        %s4795 = scalar_lea.vmem %s5, 432
        %v4796 = vld [vmem:[%s4795] sm:$0xff]
        %v4797 = vld [vmem:[%s4795 + $0x8] sm:$0xff]
        %v4798 = vld [vmem:[%s4795 + $0x10] sm:$0xff]
        %v4799 = vld [vmem:[%s4795 + $0x18] sm:$0xff]
        %v4800 = vld [vmem:[%s4795 + $0x20] sm:$0xff]
        %v4801 = vld [vmem:[%s4795 + $0x28] sm:$0xff]
        %v4802 = vld [vmem:[%s4795 + $0x30] sm:$0xff]
        %v4803 = vld [vmem:[%s4795 + $0x38] sm:$0xff]
        %v4804 = vld [vmem:[%s4795 + $0x40] sm:$0xff]
        %v4806 = vsel %vm3167, %v4774, 0
        %v4809 = vsel %vm3167, %v4775, 0
        %v4812 = vsel %vm3167, %v4776, 0
        %v4815 = vsel %vm3167, %v4777, 0
        %v4818 = vsel %vm3167, %v4778, 0
        %v4821 = vsel %vm3167, %v4779, 0
        %v4824 = vsel %vm3167, %v4780, 0
        %v4827 = vsel %vm3167, %v4781, 0
        %v4830 = vsel %vm3167, %v4782, 0
        %v4833 = vsel %vm3167, %v4783, 0
        %v4836 = vsel %vm3167, %v4784, 0
        %v4839 = vsel %vm3167, %v4785, 0
        %v4842 = vsel %vm3167, %v4786, 0
        %v4845 = vsel %vm3167, %v4787, 0
        %v4848 = vsel %vm3167, %v4788, 0
        %v4851 = vsel %vm3167, %v4789, 0
        %v4854 = vsel %vm3167, %v4790, 0
        %v4857 = vsel %vm3167, %v4791, 0
        %v4860 = vsel %vm3167, %v4792, 0
        %v4863 = vsel %vm3167, %v4793, 0
        %v4866 = vsel %vm3167, %v4794, 0
        %4868 = vmatprep.subr.mxu0 0.0
        %4869 = vmatpush1.msra.mxu0 %v4796
        %4870 = vmatprep.subr.mxu0 0.0
        %4871 = vmatpush1.msra.mxu0 %v4797
        %4872 = vmatprep.subr.mxu0 0.0
        %4873 = vmatpush1.msra.mxu0 %v4798
        %4874 = vmatprep.subr.mxu0 0.0
        %4875 = vmatpush1.msra.mxu0 %v4799
        %4876 = vmatprep.subr.mxu0 0.0
        %4877 = vmatpush1.msra.mxu0 %v4800
        %4878 = vmatprep.subr.mxu0 0.0
        %4879 = vmatpush1.msra.mxu0 %v4801
        %4880 = vmatprep.subr.mxu0 0.0
        %4881 = vmatpush1.msra.mxu0 %v4802
        %4882 = vmatprep.subr.mxu0 0.0
        %4883 = vmatpush1.msra.mxu0 %v4803
        %4884 = vmatprep.subr.mxu0 0.0
        %4885 = vmatpush1.msra.mxu0 %v4804
        %4886 = vmatprep.subr.mxu0 0.0
        %4887 = vmatpush1.msra.mxu0 0.0
        %4888 = vmatprep.subr.mxu0 0.0
        %4889 = vmatpush1.msra.mxu0 0.0
        %4890 = vmatprep.subr.mxu0 0.0
        %4891 = vmatpush1.msra.mxu0 0.0
        %4892 = vmatprep.subr.mxu0 0.0
        %4893 = vmatpush1.msra.mxu0 0.0
        %4894 = vmatprep.subr.mxu0 0.0
        %4895 = vmatpush1.msra.mxu0 0.0
        %4896 = vmatprep.subr.mxu0 0.0
        %4897 = vmatpush1.msra.mxu0 0.0
        %4898 = vmatprep.subr.mxu0 0.0
        %4899 = vmatpush1.msra.mxu0 0.0
        %4900 = vmatprep.subr.mxu0 0.0
        %4901 = vmatpush1.msra.mxu0 0.0
        %4902 = vmatprep.subr.mxu0 0.0
        %4903 = vmatpush1.msra.mxu0 0.0
        %4904 = vmatprep.subr.mxu0 0.0
        %4905 = vmatpush1.msra.mxu0 0.0
        %4906 = vmatprep.subr.mxu0 0.0
        %4907 = vmatpush1.msra.mxu0 0.0
        %4908 = vmatprep.subr.mxu0 0.0
        %4909 = vmatpush1.msra.mxu0 0.0
        %4910 = vmatprep.subr.mxu0 0.0
        %4911 = vmatpush1.msra.mxu0 0.0
        %4912 = vmatprep.subr.mxu0 0.0
        %4913 = vmatpush1.msra.mxu0 0.0
        %4914 = vmatprep.subr.mxu0 0.0
        %4915 = vmatpush1.msra.mxu0 0.0
        %4916 = vmatprep.subr.mxu0 0.0
        %4917 = vmatpush1.msra.mxu0 0.0
        %4918 = vmatprep.subr.mxu0 0.0
        %4919 = vmatpush1.msra.mxu0 0.0
        %4920 = vmatprep.subr.mxu0 0.0
        %4921 = vmatpush1.msra.mxu0 0.0
        %4922 = vmatprep.subr.mxu0 0.0
        %4923 = vmatpush1.msra.mxu0 0.0
        %4924 = vmatprep.subr.mxu0 0.0
        %4925 = vmatpush1.msra.mxu0 0.0
        %4926 = vmatprep.subr.mxu0 0.0
        %4927 = vmatpush1.msra.mxu0 0.0
        %4928 = vmatprep.subr.mxu0 0.0
        %4929 = vmatpush1.msra.mxu0 0.0
        %4930 = vmatprep.subr.mxu0 0.0
        %4931 = vmatpush1.msra.mxu0 0.0
        %4932 = vmatprep.mubr.f32.mxu0 0.0
        %4933 = vmatmul.mubr.f32.gmra.mrb[0].mxu0 %v4806
        %v4934 = vpop.f32.mrb[0].mxu0
        %v4935 = vadd.f32 0.0, %v4934
        %v4936 = vpop.f32.mrb[0].mxu0
        %4937 = vmatprep.mubr.f32.mxu0 0.0
        %4938 = vmatmul.mubr.f32.gmra.mrb[0].mxu0 %v4809
        %v4939 = vpop.f32.mrb[0].mxu0
        %v4940 = vadd.f32 0.0, %v4939
        %v4941 = vpop.f32.mrb[0].mxu0
        %4942 = vmatprep.mubr.f32.mxu0 0.0
        %4943 = vmatmul.mubr.f32.gmra.mrb[0].mxu0 %v4812
        %v4944 = vpop.f32.mrb[0].mxu0
        %v4945 = vadd.f32 0.0, %v4944
        %v4946 = vpop.f32.mrb[0].mxu0
        %4947 = vmatprep.mubr.f32.mxu0 0.0
        %4948 = vmatmul.mubr.f32.gmra.mrb[0].mxu0 %v4815
        %v4949 = vpop.f32.mrb[0].mxu0
        %v4950 = vadd.f32 0.0, %v4949
        %v4951 = vpop.f32.mrb[0].mxu0
        %4952 = vmatprep.mubr.f32.mxu0 0.0
        %4953 = vmatmul.mubr.f32.gmra.mrb[0].mxu0 %v4818
        %v4954 = vpop.f32.mrb[0].mxu0
        %v4955 = vadd.f32 0.0, %v4954
        %v4956 = vpop.f32.mrb[0].mxu0
        %4957 = vmatprep.mubr.f32.mxu0 0.0
        %4958 = vmatmul.mubr.f32.gmra.mrb[0].mxu0 %v4821
        %v4959 = vpop.f32.mrb[0].mxu0
        %v4960 = vadd.f32 0.0, %v4959
        %v4961 = vpop.f32.mrb[0].mxu0
        %4962 = vmatprep.mubr.f32.mxu0 0.0
        %4963 = vmatmul.mubr.f32.gmra.mrb[0].mxu0 %v4824
        %v4964 = vpop.f32.mrb[0].mxu0
        %v4965 = vadd.f32 0.0, %v4964
        %v4966 = vpop.f32.mrb[0].mxu0
        %4967 = vmatprep.mubr.f32.mxu0 0.0
        %4968 = vmatmul.mubr.f32.gmra.mrb[0].mxu0 %v4827
        %v4969 = vpop.f32.mrb[0].mxu0
        %v4970 = vadd.f32 0.0, %v4969
        %v4971 = vpop.f32.mrb[0].mxu0
        %4972 = vmatprep.mubr.f32.mxu0 0.0
        %4973 = vmatmul.mubr.f32.gmra.mrb[0].mxu0 %v4830
        %v4974 = vpop.f32.mrb[0].mxu0
        %v4975 = vadd.f32 0.0, %v4974
        %v4976 = vpop.f32.mrb[0].mxu0
        %4977 = vmatprep.mubr.f32.mxu0 0.0
        %4978 = vmatmul.mubr.f32.gmra.mrb[0].mxu0 %v4833
        %v4979 = vpop.f32.mrb[0].mxu0
        %v4980 = vadd.f32 0.0, %v4979
        %v4981 = vpop.f32.mrb[0].mxu0
        %4982 = vmatprep.mubr.f32.mxu0 0.0
        %4983 = vmatmul.mubr.f32.gmra.mrb[0].mxu0 %v4836
        %v4984 = vpop.f32.mrb[0].mxu0
        %v4985 = vadd.f32 0.0, %v4984
        %v4986 = vpop.f32.mrb[0].mxu0
        %4987 = vmatprep.mubr.f32.mxu0 0.0
        %4988 = vmatmul.mubr.f32.gmra.mrb[0].mxu0 %v4839
        %v4989 = vpop.f32.mrb[0].mxu0
        %v4990 = vadd.f32 0.0, %v4989
        %v4991 = vpop.f32.mrb[0].mxu0
        %4992 = vmatprep.mubr.f32.mxu0 0.0
        %4993 = vmatmul.mubr.f32.gmra.mrb[0].mxu0 %v4842
        %v4994 = vpop.f32.mrb[0].mxu0
        %v4995 = vadd.f32 0.0, %v4994
        %v4996 = vpop.f32.mrb[0].mxu0
        %4997 = vmatprep.mubr.f32.mxu0 0.0
        %4998 = vmatmul.mubr.f32.gmra.mrb[0].mxu0 %v4845
        %v4999 = vpop.f32.mrb[0].mxu0
        %v5000 = vadd.f32 0.0, %v4999
        %v5001 = vpop.f32.mrb[0].mxu0
        %5002 = vmatprep.mubr.f32.mxu0 0.0
        %5003 = vmatmul.mubr.f32.gmra.mrb[0].mxu0 %v4848
        %v5004 = vpop.f32.mrb[0].mxu0
        %v5005 = vadd.f32 0.0, %v5004
        %v5006 = vpop.f32.mrb[0].mxu0
        %5007 = vmatprep.mubr.f32.mxu0 0.0
        %5008 = vmatmul.mubr.f32.gmra.mrb[0].mxu0 %v4851
        %v5009 = vpop.f32.mrb[0].mxu0
        %v5010 = vadd.f32 0.0, %v5009
        %v5011 = vpop.f32.mrb[0].mxu0
        %5012 = vmatprep.mubr.f32.mxu0 0.0
        %5013 = vmatmul.mubr.f32.gmra.mrb[0].mxu0 %v4854
        %v5014 = vpop.f32.mrb[0].mxu0
        %v5015 = vadd.f32 0.0, %v5014
        %v5016 = vpop.f32.mrb[0].mxu0
        %5017 = vmatprep.mubr.f32.mxu0 0.0
        %5018 = vmatmul.mubr.f32.gmra.mrb[0].mxu0 %v4857
        %v5019 = vpop.f32.mrb[0].mxu0
        %v5020 = vadd.f32 0.0, %v5019
        %v5021 = vpop.f32.mrb[0].mxu0
        %5022 = vmatprep.mubr.f32.mxu0 0.0
        %5023 = vmatmul.mubr.f32.gmra.mrb[0].mxu0 %v4860
        %v5024 = vpop.f32.mrb[0].mxu0
        %v5025 = vadd.f32 0.0, %v5024
        %v5026 = vpop.f32.mrb[0].mxu0
        %5027 = vmatprep.mubr.f32.mxu0 0.0
        %5028 = vmatmul.mubr.f32.gmra.mrb[0].mxu0 %v4863
        %v5029 = vpop.f32.mrb[0].mxu0
        %v5030 = vadd.f32 0.0, %v5029
        %v5031 = vpop.f32.mrb[0].mxu0
        %5032 = vmatprep.mubr.f32.mxu0 0.0
        %5033 = vmatmul.mubr.f32.gmra.mrb[0].mxu0 %v4866
        %v5034 = vpop.f32.mrb[0].mxu0
        %v5035 = vadd.f32 0.0, %v5034
        %v5036 = vpop.f32.mrb[0].mxu0
        %5037 = vdwg.mxu0
        %v5038 = vadd.f32 %v4753, %v4935
        %v5039 = vadd.f32 %v4754, %v4940
        %v5040 = vadd.f32 %v4755, %v4945
        %v5041 = vadd.f32 %v4756, %v4950
        %v5042 = vadd.f32 %v4757, %v4955
        %v5043 = vadd.f32 %v4758, %v4960
        %v5044 = vadd.f32 %v4759, %v4965
        %v5045 = vadd.f32 %v4760, %v4970
        %v5046 = vadd.f32 %v4761, %v4975
        %v5047 = vadd.f32 %v4762, %v4980
        %v5048 = vadd.f32 %v4763, %v4985
        %v5049 = vadd.f32 %v4764, %v4990
        %v5050 = vadd.f32 %v4765, %v4995
        %v5051 = vadd.f32 %v4766, %v5000
        %v5052 = vadd.f32 %v4767, %v5005
        %v5053 = vadd.f32 %v4768, %v5010
        %v5054 = vadd.f32 %v4769, %v5015
        %v5055 = vadd.f32 %v4770, %v5020
        %v5056 = vadd.f32 %v4771, %v5025
        %v5057 = vadd.f32 %v4772, %v5030
        %v5058 = vadd.f32 %v4773, %v5035
        %v5059 = vld [vmem:[#allocation2 + $0x2a] sm:$0xff]
        %v5060 = vld [vmem:[#allocation2 + $0x32] sm:$0xff]
        %v5061 = vld [vmem:[#allocation2 + $0x3a] sm:$0xff]
        %v5062 = vld [vmem:[#allocation2 + $0x42] sm:$0xff]
        %v5063 = vld [vmem:[#allocation2 + $0x4a] sm:$0xff]
        %v5064 = vld [vmem:[#allocation2 + $0x52] sm:$0xff]
        %v5065 = vld [vmem:[#allocation2 + $0x5a] sm:$0xff]
        %v5066 = vld [vmem:[#allocation2 + $0x62] sm:$0xff]
        %v5067 = vld [vmem:[#allocation2 + $0x6a] sm:$0xff]
        %v5068 = vld [vmem:[#allocation2 + $0x72] sm:$0xff]
        %v5069 = vld [vmem:[#allocation2 + $0x7a] sm:$0xff]
        %v5070 = vld [vmem:[#allocation2 + $0x82] sm:$0xff]
        %v5071 = vld [vmem:[#allocation2 + $0x8a] sm:$0xff]
        %v5072 = vld [vmem:[#allocation2 + $0x92] sm:$0xff]
        %v5073 = vld [vmem:[#allocation2 + $0x9a] sm:$0xff]
        %v5074 = vld [vmem:[#allocation2 + $0xa2] sm:$0xff]
        %v5075 = vld [vmem:[#allocation2 + $0xaa] sm:$0xff]
        %v5076 = vld [vmem:[#allocation2 + $0xb2] sm:$0xff]
        %v5077 = vld [vmem:[#allocation2 + $0xba] sm:$0xff]
        %v5078 = vld [vmem:[#allocation2 + $0xc2] sm:$0xff]
        %v5079 = vld [vmem:[#allocation2 + $0xca] sm:$0xff]
        %s5080 = scalar_lea.vmem %s5, 504
        %v5081 = vld [vmem:[%s5080] sm:$0xff]
        %v5082 = vld [vmem:[%s5080 + $0x8] sm:$0xff]
        %v5083 = vld [vmem:[%s5080 + $0x10] sm:$0xff]
        %v5084 = vld [vmem:[%s5080 + $0x18] sm:$0xff]
        %v5085 = vld [vmem:[%s5080 + $0x20] sm:$0xff]
        %v5086 = vld [vmem:[%s5080 + $0x28] sm:$0xff]
        %v5087 = vld [vmem:[%s5080 + $0x30] sm:$0xff]
        %v5088 = vld [vmem:[%s5080 + $0x38] sm:$0xff]
        %v5089 = vld [vmem:[%s5080 + $0x40] sm:$0xff]
        %v5091 = vsel %vm3167, %v5059, 0
        %v5094 = vsel %vm3167, %v5060, 0
        %v5097 = vsel %vm3167, %v5061, 0
        %v5100 = vsel %vm3167, %v5062, 0
        %v5103 = vsel %vm3167, %v5063, 0
        %v5106 = vsel %vm3167, %v5064, 0
        %v5109 = vsel %vm3167, %v5065, 0
        %v5112 = vsel %vm3167, %v5066, 0
        %v5115 = vsel %vm3167, %v5067, 0
        %v5118 = vsel %vm3167, %v5068, 0
        %v5121 = vsel %vm3167, %v5069, 0
        %v5124 = vsel %vm3167, %v5070, 0
        %v5127 = vsel %vm3167, %v5071, 0
        %v5130 = vsel %vm3167, %v5072, 0
        %v5133 = vsel %vm3167, %v5073, 0
        %v5136 = vsel %vm3167, %v5074, 0
        %v5139 = vsel %vm3167, %v5075, 0
        %v5142 = vsel %vm3167, %v5076, 0
        %v5145 = vsel %vm3167, %v5077, 0
        %v5148 = vsel %vm3167, %v5078, 0
        %v5151 = vsel %vm3167, %v5079, 0
        %5153 = vmatprep.subr.mxu0 0.0
        %5154 = vmatpush1.msra.mxu0 %v5081
        %5155 = vmatprep.subr.mxu0 0.0
        %5156 = vmatpush1.msra.mxu0 %v5082
        %5157 = vmatprep.subr.mxu0 0.0
        %5158 = vmatpush1.msra.mxu0 %v5083
        %5159 = vmatprep.subr.mxu0 0.0
        %5160 = vmatpush1.msra.mxu0 %v5084
        %5161 = vmatprep.subr.mxu0 0.0
        %5162 = vmatpush1.msra.mxu0 %v5085
        %5163 = vmatprep.subr.mxu0 0.0
        %5164 = vmatpush1.msra.mxu0 %v5086
        %5165 = vmatprep.subr.mxu0 0.0
        %5166 = vmatpush1.msra.mxu0 %v5087
        %5167 = vmatprep.subr.mxu0 0.0
        %5168 = vmatpush1.msra.mxu0 %v5088
        %5169 = vmatprep.subr.mxu0 0.0
        %5170 = vmatpush1.msra.mxu0 %v5089
        %5171 = vmatprep.subr.mxu0 0.0
        %5172 = vmatpush1.msra.mxu0 0.0
        %5173 = vmatprep.subr.mxu0 0.0
        %5174 = vmatpush1.msra.mxu0 0.0
        %5175 = vmatprep.subr.mxu0 0.0
        %5176 = vmatpush1.msra.mxu0 0.0
        %5177 = vmatprep.subr.mxu0 0.0
        %5178 = vmatpush1.msra.mxu0 0.0
        %5179 = vmatprep.subr.mxu0 0.0
        %5180 = vmatpush1.msra.mxu0 0.0
        %5181 = vmatprep.subr.mxu0 0.0
        %5182 = vmatpush1.msra.mxu0 0.0
        %5183 = vmatprep.subr.mxu0 0.0
        %5184 = vmatpush1.msra.mxu0 0.0
        %5185 = vmatprep.subr.mxu0 0.0
        %5186 = vmatpush1.msra.mxu0 0.0
        %5187 = vmatprep.subr.mxu0 0.0
        %5188 = vmatpush1.msra.mxu0 0.0
        %5189 = vmatprep.subr.mxu0 0.0
        %5190 = vmatpush1.msra.mxu0 0.0
        %5191 = vmatprep.subr.mxu0 0.0
        %5192 = vmatpush1.msra.mxu0 0.0
        %5193 = vmatprep.subr.mxu0 0.0
        %5194 = vmatpush1.msra.mxu0 0.0
        %5195 = vmatprep.subr.mxu0 0.0
        %5196 = vmatpush1.msra.mxu0 0.0
        %5197 = vmatprep.subr.mxu0 0.0
        %5198 = vmatpush1.msra.mxu0 0.0
        %5199 = vmatprep.subr.mxu0 0.0
        %5200 = vmatpush1.msra.mxu0 0.0
        %5201 = vmatprep.subr.mxu0 0.0
        %5202 = vmatpush1.msra.mxu0 0.0
        %5203 = vmatprep.subr.mxu0 0.0
        %5204 = vmatpush1.msra.mxu0 0.0
        %5205 = vmatprep.subr.mxu0 0.0
        %5206 = vmatpush1.msra.mxu0 0.0
        %5207 = vmatprep.subr.mxu0 0.0
        %5208 = vmatpush1.msra.mxu0 0.0
        %5209 = vmatprep.subr.mxu0 0.0
        %5210 = vmatpush1.msra.mxu0 0.0
        %5211 = vmatprep.subr.mxu0 0.0
        %5212 = vmatpush1.msra.mxu0 0.0
        %5213 = vmatprep.subr.mxu0 0.0
        %5214 = vmatpush1.msra.mxu0 0.0
        %5215 = vmatprep.subr.mxu0 0.0
        %5216 = vmatpush1.msra.mxu0 0.0
        %5217 = vmatprep.mubr.f32.mxu0 0.0
        %5218 = vmatmul.mubr.f32.gmra.mrb[0].mxu0 %v5091
        %v5219 = vpop.f32.mrb[0].mxu0
        %v5220 = vadd.f32 0.0, %v5219
        %v5221 = vpop.f32.mrb[0].mxu0
        %5222 = vmatprep.mubr.f32.mxu0 0.0
        %5223 = vmatmul.mubr.f32.gmra.mrb[0].mxu0 %v5094
        %v5224 = vpop.f32.mrb[0].mxu0
        %v5225 = vadd.f32 0.0, %v5224
        %v5226 = vpop.f32.mrb[0].mxu0
        %5227 = vmatprep.mubr.f32.mxu0 0.0
        %5228 = vmatmul.mubr.f32.gmra.mrb[0].mxu0 %v5097
        %v5229 = vpop.f32.mrb[0].mxu0
        %v5230 = vadd.f32 0.0, %v5229
        %v5231 = vpop.f32.mrb[0].mxu0
        %5232 = vmatprep.mubr.f32.mxu0 0.0
        %5233 = vmatmul.mubr.f32.gmra.mrb[0].mxu0 %v5100
        %v5234 = vpop.f32.mrb[0].mxu0
        %v5235 = vadd.f32 0.0, %v5234
        %v5236 = vpop.f32.mrb[0].mxu0
        %5237 = vmatprep.mubr.f32.mxu0 0.0
        %5238 = vmatmul.mubr.f32.gmra.mrb[0].mxu0 %v5103
        %v5239 = vpop.f32.mrb[0].mxu0
        %v5240 = vadd.f32 0.0, %v5239
        %v5241 = vpop.f32.mrb[0].mxu0
        %5242 = vmatprep.mubr.f32.mxu0 0.0
        %5243 = vmatmul.mubr.f32.gmra.mrb[0].mxu0 %v5106
        %v5244 = vpop.f32.mrb[0].mxu0
        %v5245 = vadd.f32 0.0, %v5244
        %v5246 = vpop.f32.mrb[0].mxu0
        %5247 = vmatprep.mubr.f32.mxu0 0.0
        %5248 = vmatmul.mubr.f32.gmra.mrb[0].mxu0 %v5109
        %v5249 = vpop.f32.mrb[0].mxu0
        %v5250 = vadd.f32 0.0, %v5249
        %v5251 = vpop.f32.mrb[0].mxu0
        %5252 = vmatprep.mubr.f32.mxu0 0.0
        %5253 = vmatmul.mubr.f32.gmra.mrb[0].mxu0 %v5112
        %v5254 = vpop.f32.mrb[0].mxu0
        %v5255 = vadd.f32 0.0, %v5254
        %v5256 = vpop.f32.mrb[0].mxu0
        %5257 = vmatprep.mubr.f32.mxu0 0.0
        %5258 = vmatmul.mubr.f32.gmra.mrb[0].mxu0 %v5115
        %v5259 = vpop.f32.mrb[0].mxu0
        %v5260 = vadd.f32 0.0, %v5259
        %v5261 = vpop.f32.mrb[0].mxu0
        %5262 = vmatprep.mubr.f32.mxu0 0.0
        %5263 = vmatmul.mubr.f32.gmra.mrb[0].mxu0 %v5118
        %v5264 = vpop.f32.mrb[0].mxu0
        %v5265 = vadd.f32 0.0, %v5264
        %v5266 = vpop.f32.mrb[0].mxu0
        %5267 = vmatprep.mubr.f32.mxu0 0.0
        %5268 = vmatmul.mubr.f32.gmra.mrb[0].mxu0 %v5121
        %v5269 = vpop.f32.mrb[0].mxu0
        %v5270 = vadd.f32 0.0, %v5269
        %v5271 = vpop.f32.mrb[0].mxu0
        %5272 = vmatprep.mubr.f32.mxu0 0.0
        %5273 = vmatmul.mubr.f32.gmra.mrb[0].mxu0 %v5124
        %v5274 = vpop.f32.mrb[0].mxu0
        %v5275 = vadd.f32 0.0, %v5274
        %v5276 = vpop.f32.mrb[0].mxu0
        %5277 = vmatprep.mubr.f32.mxu0 0.0
        %5278 = vmatmul.mubr.f32.gmra.mrb[0].mxu0 %v5127
        %v5279 = vpop.f32.mrb[0].mxu0
        %v5280 = vadd.f32 0.0, %v5279
        %v5281 = vpop.f32.mrb[0].mxu0
        %5282 = vmatprep.mubr.f32.mxu0 0.0
        %5283 = vmatmul.mubr.f32.gmra.mrb[0].mxu0 %v5130
        %v5284 = vpop.f32.mrb[0].mxu0
        %v5285 = vadd.f32 0.0, %v5284
        %v5286 = vpop.f32.mrb[0].mxu0
        %5287 = vmatprep.mubr.f32.mxu0 0.0
        %5288 = vmatmul.mubr.f32.gmra.mrb[0].mxu0 %v5133
        %v5289 = vpop.f32.mrb[0].mxu0
        %v5290 = vadd.f32 0.0, %v5289
        %v5291 = vpop.f32.mrb[0].mxu0
        %5292 = vmatprep.mubr.f32.mxu0 0.0
        %5293 = vmatmul.mubr.f32.gmra.mrb[0].mxu0 %v5136
        %v5294 = vpop.f32.mrb[0].mxu0
        %v5295 = vadd.f32 0.0, %v5294
        %v5296 = vpop.f32.mrb[0].mxu0
        %5297 = vmatprep.mubr.f32.mxu0 0.0
        %5298 = vmatmul.mubr.f32.gmra.mrb[0].mxu0 %v5139
        %v5299 = vpop.f32.mrb[0].mxu0
        %v5300 = vadd.f32 0.0, %v5299
        %v5301 = vpop.f32.mrb[0].mxu0
        %5302 = vmatprep.mubr.f32.mxu0 0.0
        %5303 = vmatmul.mubr.f32.gmra.mrb[0].mxu0 %v5142
        %v5304 = vpop.f32.mrb[0].mxu0
        %v5305 = vadd.f32 0.0, %v5304
        %v5306 = vpop.f32.mrb[0].mxu0
        %5307 = vmatprep.mubr.f32.mxu0 0.0
        %5308 = vmatmul.mubr.f32.gmra.mrb[0].mxu0 %v5145
        %v5309 = vpop.f32.mrb[0].mxu0
        %v5310 = vadd.f32 0.0, %v5309
        %v5311 = vpop.f32.mrb[0].mxu0
        %5312 = vmatprep.mubr.f32.mxu0 0.0
        %5313 = vmatmul.mubr.f32.gmra.mrb[0].mxu0 %v5148
        %v5314 = vpop.f32.mrb[0].mxu0
        %v5315 = vadd.f32 0.0, %v5314
        %v5316 = vpop.f32.mrb[0].mxu0
        %5317 = vmatprep.mubr.f32.mxu0 0.0
        %5318 = vmatmul.mubr.f32.gmra.mrb[0].mxu0 %v5151
        %v5319 = vpop.f32.mrb[0].mxu0
        %v5320 = vadd.f32 0.0, %v5319
        %v5321 = vpop.f32.mrb[0].mxu0
        %5322 = vdwg.mxu0
        %v5323 = vadd.f32 %v5038, %v5220
        %v5324 = vadd.f32 %v5039, %v5225
        %v5325 = vadd.f32 %v5040, %v5230
        %v5326 = vadd.f32 %v5041, %v5235
        %v5327 = vadd.f32 %v5042, %v5240
        %v5328 = vadd.f32 %v5043, %v5245
        %v5329 = vadd.f32 %v5044, %v5250
        %v5330 = vadd.f32 %v5045, %v5255
        %v5331 = vadd.f32 %v5046, %v5260
        %v5332 = vadd.f32 %v5047, %v5265
        %v5333 = vadd.f32 %v5048, %v5270
        %v5334 = vadd.f32 %v5049, %v5275
        %v5335 = vadd.f32 %v5050, %v5280
        %v5336 = vadd.f32 %v5051, %v5285
        %v5337 = vadd.f32 %v5052, %v5290
        %v5338 = vadd.f32 %v5053, %v5295
        %v5339 = vadd.f32 %v5054, %v5300
        %v5340 = vadd.f32 %v5055, %v5305
        %v5341 = vadd.f32 %v5056, %v5310
        %v5342 = vadd.f32 %v5057, %v5315
        %v5343 = vadd.f32 %v5058, %v5320
        %v5344 = vld [vmem:[#allocation2 + $0x2b] sm:$0xff]
        %v5345 = vld [vmem:[#allocation2 + $0x33] sm:$0xff]
        %v5346 = vld [vmem:[#allocation2 + $0x3b] sm:$0xff]
        %v5347 = vld [vmem:[#allocation2 + $0x43] sm:$0xff]
        %v5348 = vld [vmem:[#allocation2 + $0x4b] sm:$0xff]
        %v5349 = vld [vmem:[#allocation2 + $0x53] sm:$0xff]
        %v5350 = vld [vmem:[#allocation2 + $0x5b] sm:$0xff]
        %v5351 = vld [vmem:[#allocation2 + $0x63] sm:$0xff]
        %v5352 = vld [vmem:[#allocation2 + $0x6b] sm:$0xff]
        %v5353 = vld [vmem:[#allocation2 + $0x73] sm:$0xff]
        %v5354 = vld [vmem:[#allocation2 + $0x7b] sm:$0xff]
        %v5355 = vld [vmem:[#allocation2 + $0x83] sm:$0xff]
        %v5356 = vld [vmem:[#allocation2 + $0x8b] sm:$0xff]
        %v5357 = vld [vmem:[#allocation2 + $0x93] sm:$0xff]
        %v5358 = vld [vmem:[#allocation2 + $0x9b] sm:$0xff]
        %v5359 = vld [vmem:[#allocation2 + $0xa3] sm:$0xff]
        %v5360 = vld [vmem:[#allocation2 + $0xab] sm:$0xff]
        %v5361 = vld [vmem:[#allocation2 + $0xb3] sm:$0xff]
        %v5362 = vld [vmem:[#allocation2 + $0xbb] sm:$0xff]
        %v5363 = vld [vmem:[#allocation2 + $0xc3] sm:$0xff]
        %v5364 = vld [vmem:[#allocation2 + $0xcb] sm:$0xff]
        %s5365 = scalar_lea.vmem %s5, 576
        %v5366 = vld [vmem:[%s5365] sm:$0xff]
        %v5367 = vld [vmem:[%s5365 + $0x8] sm:$0xff]
        %v5368 = vld [vmem:[%s5365 + $0x10] sm:$0xff]
        %v5369 = vld [vmem:[%s5365 + $0x18] sm:$0xff]
        %v5370 = vld [vmem:[%s5365 + $0x20] sm:$0xff]
        %v5371 = vld [vmem:[%s5365 + $0x28] sm:$0xff]
        %v5372 = vld [vmem:[%s5365 + $0x30] sm:$0xff]
        %v5373 = vld [vmem:[%s5365 + $0x38] sm:$0xff]
        %v5374 = vld [vmem:[%s5365 + $0x40] sm:$0xff]
        %v5376 = vsel %vm3167, %v5344, 0
        %v5379 = vsel %vm3167, %v5345, 0
        %v5382 = vsel %vm3167, %v5346, 0
        %v5385 = vsel %vm3167, %v5347, 0
        %v5388 = vsel %vm3167, %v5348, 0
        %v5391 = vsel %vm3167, %v5349, 0
        %v5394 = vsel %vm3167, %v5350, 0
        %v5397 = vsel %vm3167, %v5351, 0
        %v5400 = vsel %vm3167, %v5352, 0
        %v5403 = vsel %vm3167, %v5353, 0
        %v5406 = vsel %vm3167, %v5354, 0
        %v5409 = vsel %vm3167, %v5355, 0
        %v5412 = vsel %vm3167, %v5356, 0
        %v5415 = vsel %vm3167, %v5357, 0
        %v5418 = vsel %vm3167, %v5358, 0
        %v5421 = vsel %vm3167, %v5359, 0
        %v5424 = vsel %vm3167, %v5360, 0
        %v5427 = vsel %vm3167, %v5361, 0
        %v5430 = vsel %vm3167, %v5362, 0
        %v5433 = vsel %vm3167, %v5363, 0
        %v5436 = vsel %vm3167, %v5364, 0
        %5438 = vmatprep.subr.mxu0 0.0
        %5439 = vmatpush1.msra.mxu0 %v5366
        %5440 = vmatprep.subr.mxu0 0.0
        %5441 = vmatpush1.msra.mxu0 %v5367
        %5442 = vmatprep.subr.mxu0 0.0
        %5443 = vmatpush1.msra.mxu0 %v5368
        %5444 = vmatprep.subr.mxu0 0.0
        %5445 = vmatpush1.msra.mxu0 %v5369
        %5446 = vmatprep.subr.mxu0 0.0
        %5447 = vmatpush1.msra.mxu0 %v5370
        %5448 = vmatprep.subr.mxu0 0.0
        %5449 = vmatpush1.msra.mxu0 %v5371
        %5450 = vmatprep.subr.mxu0 0.0
        %5451 = vmatpush1.msra.mxu0 %v5372
        %5452 = vmatprep.subr.mxu0 0.0
        %5453 = vmatpush1.msra.mxu0 %v5373
        %5454 = vmatprep.subr.mxu0 0.0
        %5455 = vmatpush1.msra.mxu0 %v5374
        %5456 = vmatprep.subr.mxu0 0.0
        %5457 = vmatpush1.msra.mxu0 0.0
        %5458 = vmatprep.subr.mxu0 0.0
        %5459 = vmatpush1.msra.mxu0 0.0
        %5460 = vmatprep.subr.mxu0 0.0
        %5461 = vmatpush1.msra.mxu0 0.0
        %5462 = vmatprep.subr.mxu0 0.0
        %5463 = vmatpush1.msra.mxu0 0.0
        %5464 = vmatprep.subr.mxu0 0.0
        %5465 = vmatpush1.msra.mxu0 0.0
        %5466 = vmatprep.subr.mxu0 0.0
        %5467 = vmatpush1.msra.mxu0 0.0
        %5468 = vmatprep.subr.mxu0 0.0
        %5469 = vmatpush1.msra.mxu0 0.0
        %5470 = vmatprep.subr.mxu0 0.0
        %5471 = vmatpush1.msra.mxu0 0.0
        %5472 = vmatprep.subr.mxu0 0.0
        %5473 = vmatpush1.msra.mxu0 0.0
        %5474 = vmatprep.subr.mxu0 0.0
        %5475 = vmatpush1.msra.mxu0 0.0
        %5476 = vmatprep.subr.mxu0 0.0
        %5477 = vmatpush1.msra.mxu0 0.0
        %5478 = vmatprep.subr.mxu0 0.0
        %5479 = vmatpush1.msra.mxu0 0.0
        %5480 = vmatprep.subr.mxu0 0.0
        %5481 = vmatpush1.msra.mxu0 0.0
        %5482 = vmatprep.subr.mxu0 0.0
        %5483 = vmatpush1.msra.mxu0 0.0
        %5484 = vmatprep.subr.mxu0 0.0
        %5485 = vmatpush1.msra.mxu0 0.0
        %5486 = vmatprep.subr.mxu0 0.0
        %5487 = vmatpush1.msra.mxu0 0.0
        %5488 = vmatprep.subr.mxu0 0.0
        %5489 = vmatpush1.msra.mxu0 0.0
        %5490 = vmatprep.subr.mxu0 0.0
        %5491 = vmatpush1.msra.mxu0 0.0
        %5492 = vmatprep.subr.mxu0 0.0
        %5493 = vmatpush1.msra.mxu0 0.0
        %5494 = vmatprep.subr.mxu0 0.0
        %5495 = vmatpush1.msra.mxu0 0.0
        %5496 = vmatprep.subr.mxu0 0.0
        %5497 = vmatpush1.msra.mxu0 0.0
        %5498 = vmatprep.subr.mxu0 0.0
        %5499 = vmatpush1.msra.mxu0 0.0
        %5500 = vmatprep.subr.mxu0 0.0
        %5501 = vmatpush1.msra.mxu0 0.0
        %5502 = vmatprep.mubr.f32.mxu0 0.0
        %5503 = vmatmul.mubr.f32.gmra.mrb[0].mxu0 %v5376
        %v5504 = vpop.f32.mrb[0].mxu0
        %v5505 = vadd.f32 0.0, %v5504
        %v5506 = vpop.f32.mrb[0].mxu0
        %5507 = vmatprep.mubr.f32.mxu0 0.0
        %5508 = vmatmul.mubr.f32.gmra.mrb[0].mxu0 %v5379
        %v5509 = vpop.f32.mrb[0].mxu0
        %v5510 = vadd.f32 0.0, %v5509
        %v5511 = vpop.f32.mrb[0].mxu0
        %5512 = vmatprep.mubr.f32.mxu0 0.0
        %5513 = vmatmul.mubr.f32.gmra.mrb[0].mxu0 %v5382
        %v5514 = vpop.f32.mrb[0].mxu0
        %v5515 = vadd.f32 0.0, %v5514
        %v5516 = vpop.f32.mrb[0].mxu0
        %5517 = vmatprep.mubr.f32.mxu0 0.0
        %5518 = vmatmul.mubr.f32.gmra.mrb[0].mxu0 %v5385
        %v5519 = vpop.f32.mrb[0].mxu0
        %v5520 = vadd.f32 0.0, %v5519
        %v5521 = vpop.f32.mrb[0].mxu0
        %5522 = vmatprep.mubr.f32.mxu0 0.0
        %5523 = vmatmul.mubr.f32.gmra.mrb[0].mxu0 %v5388
        %v5524 = vpop.f32.mrb[0].mxu0
        %v5525 = vadd.f32 0.0, %v5524
        %v5526 = vpop.f32.mrb[0].mxu0
        %5527 = vmatprep.mubr.f32.mxu0 0.0
        %5528 = vmatmul.mubr.f32.gmra.mrb[0].mxu0 %v5391
        %v5529 = vpop.f32.mrb[0].mxu0
        %v5530 = vadd.f32 0.0, %v5529
        %v5531 = vpop.f32.mrb[0].mxu0
        %5532 = vmatprep.mubr.f32.mxu0 0.0
        %5533 = vmatmul.mubr.f32.gmra.mrb[0].mxu0 %v5394
        %v5534 = vpop.f32.mrb[0].mxu0
        %v5535 = vadd.f32 0.0, %v5534
        %v5536 = vpop.f32.mrb[0].mxu0
        %5537 = vmatprep.mubr.f32.mxu0 0.0
        %5538 = vmatmul.mubr.f32.gmra.mrb[0].mxu0 %v5397
        %v5539 = vpop.f32.mrb[0].mxu0
        %v5540 = vadd.f32 0.0, %v5539
        %v5541 = vpop.f32.mrb[0].mxu0
        %5542 = vmatprep.mubr.f32.mxu0 0.0
        %5543 = vmatmul.mubr.f32.gmra.mrb[0].mxu0 %v5400
        %v5544 = vpop.f32.mrb[0].mxu0
        %v5545 = vadd.f32 0.0, %v5544
        %v5546 = vpop.f32.mrb[0].mxu0
        %5547 = vmatprep.mubr.f32.mxu0 0.0
        %5548 = vmatmul.mubr.f32.gmra.mrb[0].mxu0 %v5403
        %v5549 = vpop.f32.mrb[0].mxu0
        %v5550 = vadd.f32 0.0, %v5549
        %v5551 = vpop.f32.mrb[0].mxu0
        %5552 = vmatprep.mubr.f32.mxu0 0.0
        %5553 = vmatmul.mubr.f32.gmra.mrb[0].mxu0 %v5406
        %v5554 = vpop.f32.mrb[0].mxu0
        %v5555 = vadd.f32 0.0, %v5554
        %v5556 = vpop.f32.mrb[0].mxu0
        %5557 = vmatprep.mubr.f32.mxu0 0.0
        %5558 = vmatmul.mubr.f32.gmra.mrb[0].mxu0 %v5409
        %v5559 = vpop.f32.mrb[0].mxu0
        %v5560 = vadd.f32 0.0, %v5559
        %v5561 = vpop.f32.mrb[0].mxu0
        %5562 = vmatprep.mubr.f32.mxu0 0.0
        %5563 = vmatmul.mubr.f32.gmra.mrb[0].mxu0 %v5412
        %v5564 = vpop.f32.mrb[0].mxu0
        %v5565 = vadd.f32 0.0, %v5564
        %v5566 = vpop.f32.mrb[0].mxu0
        %5567 = vmatprep.mubr.f32.mxu0 0.0
        %5568 = vmatmul.mubr.f32.gmra.mrb[0].mxu0 %v5415
        %v5569 = vpop.f32.mrb[0].mxu0
        %v5570 = vadd.f32 0.0, %v5569
        %v5571 = vpop.f32.mrb[0].mxu0
        %5572 = vmatprep.mubr.f32.mxu0 0.0
        %5573 = vmatmul.mubr.f32.gmra.mrb[0].mxu0 %v5418
        %v5574 = vpop.f32.mrb[0].mxu0
        %v5575 = vadd.f32 0.0, %v5574
        %v5576 = vpop.f32.mrb[0].mxu0
        %5577 = vmatprep.mubr.f32.mxu0 0.0
        %5578 = vmatmul.mubr.f32.gmra.mrb[0].mxu0 %v5421
        %v5579 = vpop.f32.mrb[0].mxu0
        %v5580 = vadd.f32 0.0, %v5579
        %v5581 = vpop.f32.mrb[0].mxu0
        %5582 = vmatprep.mubr.f32.mxu0 0.0
        %5583 = vmatmul.mubr.f32.gmra.mrb[0].mxu0 %v5424
        %v5584 = vpop.f32.mrb[0].mxu0
        %v5585 = vadd.f32 0.0, %v5584
        %v5586 = vpop.f32.mrb[0].mxu0
        %5587 = vmatprep.mubr.f32.mxu0 0.0
        %5588 = vmatmul.mubr.f32.gmra.mrb[0].mxu0 %v5427
        %v5589 = vpop.f32.mrb[0].mxu0
        %v5590 = vadd.f32 0.0, %v5589
        %v5591 = vpop.f32.mrb[0].mxu0
        %5592 = vmatprep.mubr.f32.mxu0 0.0
        %5593 = vmatmul.mubr.f32.gmra.mrb[0].mxu0 %v5430
        %v5594 = vpop.f32.mrb[0].mxu0
        %v5595 = vadd.f32 0.0, %v5594
        %v5596 = vpop.f32.mrb[0].mxu0
        %5597 = vmatprep.mubr.f32.mxu0 0.0
        %5598 = vmatmul.mubr.f32.gmra.mrb[0].mxu0 %v5433
        %v5599 = vpop.f32.mrb[0].mxu0
        %v5600 = vadd.f32 0.0, %v5599
        %v5601 = vpop.f32.mrb[0].mxu0
        %5602 = vmatprep.mubr.f32.mxu0 0.0
        %5603 = vmatmul.mubr.f32.gmra.mrb[0].mxu0 %v5436
        %v5604 = vpop.f32.mrb[0].mxu0
        %v5605 = vadd.f32 0.0, %v5604
        %v5606 = vpop.f32.mrb[0].mxu0
        %5607 = vdwg.mxu0
        %v5608 = vadd.f32 %v5323, %v5505
        %v5609 = vadd.f32 %v5324, %v5510
        %v5610 = vadd.f32 %v5325, %v5515
        %v5611 = vadd.f32 %v5326, %v5520
        %v5612 = vadd.f32 %v5327, %v5525
        %v5613 = vadd.f32 %v5328, %v5530
        %v5614 = vadd.f32 %v5329, %v5535
        %v5615 = vadd.f32 %v5330, %v5540
        %v5616 = vadd.f32 %v5331, %v5545
        %v5617 = vadd.f32 %v5332, %v5550
        %v5618 = vadd.f32 %v5333, %v5555
        %v5619 = vadd.f32 %v5334, %v5560
        %v5620 = vadd.f32 %v5335, %v5565
        %v5621 = vadd.f32 %v5336, %v5570
        %v5622 = vadd.f32 %v5337, %v5575
        %v5623 = vadd.f32 %v5338, %v5580
        %v5624 = vadd.f32 %v5339, %v5585
        %v5625 = vadd.f32 %v5340, %v5590
        %v5626 = vadd.f32 %v5341, %v5595
        %v5627 = vadd.f32 %v5342, %v5600
        %v5628 = vadd.f32 %v5343, %v5605
        %v5629 = vld [vmem:[%s6] sm:$0x1]
        %v5631 = vlaneseq
        %v5632 = vshrl.u32 %v5631, 7
        %v5633 = vsub.s32 0, %v5632
        %v5634 = vrot.slane %v5629, %v5633
        %v5636 = vadd.f32 %v5608, %v5634
        %v5637 = vadd.f32 %v5609, %v5634
        %v5638 = vadd.f32 %v5610, %v5634
        %v5639 = vadd.f32 %v5611, %v5634
        %v5640 = vadd.f32 %v5612, %v5634
        %v5641 = vadd.f32 %v5613, %v5634
        %v5642 = vadd.f32 %v5614, %v5634
        %v5643 = vadd.f32 %v5615, %v5634
        %v5644 = vadd.f32 %v5616, %v5634
        %v5645 = vadd.f32 %v5617, %v5634
        %v5646 = vadd.f32 %v5618, %v5634
        %v5647 = vadd.f32 %v5619, %v5634
        %v5648 = vadd.f32 %v5620, %v5634
        %v5649 = vadd.f32 %v5621, %v5634
        %v5650 = vadd.f32 %v5622, %v5634
        %v5651 = vadd.f32 %v5623, %v5634
        %v5652 = vadd.f32 %v5624, %v5634
        %v5653 = vadd.f32 %v5625, %v5634
        %v5654 = vadd.f32 %v5626, %v5634
        %v5655 = vadd.f32 %v5627, %v5634
        %v5656 = vadd.f32 %v5628, %v5634
        %v5657 = vmax.f32 %v5636, 0.0
        %v5658 = vmax.f32 %v5637, 0.0
        %v5659 = vmax.f32 %v5638, 0.0
        %v5660 = vmax.f32 %v5639, 0.0
        %v5661 = vmax.f32 %v5640, 0.0
        %v5662 = vmax.f32 %v5641, 0.0
        %v5663 = vmax.f32 %v5642, 0.0
        %v5664 = vmax.f32 %v5643, 0.0
        %v5665 = vmax.f32 %v5644, 0.0
        %v5666 = vmax.f32 %v5645, 0.0
        %v5667 = vmax.f32 %v5646, 0.0
        %v5668 = vmax.f32 %v5647, 0.0
        %v5669 = vmax.f32 %v5648, 0.0
        %v5670 = vmax.f32 %v5649, 0.0
        %v5671 = vmax.f32 %v5650, 0.0
        %v5672 = vmax.f32 %v5651, 0.0
        %v5673 = vmax.f32 %v5652, 0.0
        %v5674 = vmax.f32 %v5653, 0.0
        %v5675 = vmax.f32 %v5654, 0.0
        %v5676 = vmax.f32 %v5655, 0.0
        %v5677 = vmax.f32 %v5656, 0.0
        %5678 = vst [vmem:[%s271] sm:$0xff] %v5657
        %5679 = vst [vmem:[%s271 + $0x8] sm:$0xff] %v5658
        %5680 = vst [vmem:[%s271 + $0x10] sm:$0xff] %v5659
        %5681 = vst [vmem:[%s271 + $0x18] sm:$0xff] %v5660
        %5682 = vst [vmem:[%s271 + $0x20] sm:$0xff] %v5661
        %5683 = vst [vmem:[%s271 + $0x28] sm:$0xff] %v5662
        %5684 = vst [vmem:[%s271 + $0x30] sm:$0xff] %v5663
        %5685 = vst [vmem:[%s271 + $0x38] sm:$0xff] %v5664
        %5686 = vst [vmem:[%s271 + $0x40] sm:$0xff] %v5665
        %5687 = vst [vmem:[%s271 + $0x48] sm:$0xff] %v5666
        %5688 = vst [vmem:[%s271 + $0x50] sm:$0xff] %v5667
        %5689 = vst [vmem:[%s271 + $0x58] sm:$0xff] %v5668
        %5690 = vst [vmem:[%s271 + $0x60] sm:$0xff] %v5669
        %5691 = vst [vmem:[%s271 + $0x68] sm:$0xff] %v5670
        %5692 = vst [vmem:[%s271 + $0x70] sm:$0xff] %v5671
        %5693 = vst [vmem:[%s271 + $0x78] sm:$0xff] %v5672
        %5694 = vst [vmem:[%s271 + $0x80] sm:$0xff] %v5673
        %5695 = vst [vmem:[%s271 + $0x88] sm:$0xff] %v5674
        %5696 = vst [vmem:[%s271 + $0x90] sm:$0xff] %v5675
        %5697 = vst [vmem:[%s271 + $0x98] sm:$0xff] %v5676
        %5698 = vst [vmem:[%s271 + $0xa0] sm:$0xff] %v5677
        %s5699 = sand.u32 %s181, 1
        %s5700 = scalar_lea.sflag [#allocation4], %s5699
        %s5701 = sand.u32 %s181, 1
        %s5702 = smul.addr %s5701, 168
        %s5703 = scalar_lea.vmem [#allocation3], %s5702
        // Predicated region
        $region49: #{tpu_custom_call.1} parent=47 // pred_check
          %p5704 = pneg %p191
        $region50: #{tpu_custom_call.1} parent=47 // pred_check_branch
          %5706 = sbr.rel (%p5704) target = $region52
        $region51: #{tpu_custom_call.1} parent=47 // pred_region
          %s5708 = ssub.s32 2688, 2688
          %5709 = vsyncadd %s5700, %s5708
          %s5710 = smul.addr %s21, 21
          %s5711 = smul.addr %s5710, 128
          %s5712 = scalar_lea.hbm %s7, %s5711
          %s5713 = sshll.u32 %s5703, 4
          %s5714 = int_to_ptr.vmem [resolvable:$true] %s5713
          %5719 = dma.vmem_to_hbm [thread:$0]  %s5714, 2688, %s5712, %s5700, 128, 128, 8
        $region52: #{tpu_custom_call.1} parent=47 // pred_fallthru
          _
      $region48: #{tpu_custom_call.1} parent=5 // pred_fallthru
        _
      %p5720 = scmp.le.s32.totalorder 2, %s16
      // Predicated region
      $region53: #{tpu_custom_call.1} parent=5 // pred_check
        %p5721 = pneg %p5720
      $region54: #{tpu_custom_call.1} parent=5 // pred_check_branch
        %5723 = sbr.rel (%p5721) target = $region56
      $region55: #{tpu_custom_call.1} parent=5 // pred_region
        %s5724 = ssub.s32 %s16, 2
        // Predicated region
        $region57: #{tpu_custom_call.1} parent=55 // pred_check
          %p5725 = pneg %p197
        $region58: #{tpu_custom_call.1} parent=55 // pred_check_branch
          %5727 = sbr.rel (%p5725) target = $region60
        $region59: #{tpu_custom_call.1} parent=55 // pred_region
          %s5728 = sand.u32 %s182, 1
          %s5729 = scalar_lea.sflag [#allocation4], %s5728
          %s5730 = sand.u32 %s182, 1
          %s5731 = smul.addr %s5730, 168
          %s5732 = scalar_lea.vmem [#allocation3], %s5731
          %5733 = dma.done %s5729, 2688
        $region60: #{tpu_custom_call.1} parent=55 // pred_fallthru
          _
      $region56: #{tpu_custom_call.1} parent=5 // pred_fallthru
        _
    $region6: #{tpu_custom_call.1} parent=1 // loop_footer
      %s20 = sadd.s32 1, %s16
    $region7: #{tpu_custom_call.1} parent=1 // loop_footer_branch
      %15 = sbr.rel target = $region3
    $region8: #{tpu_custom_call.1} parent=1 // loop_exit
      _
    %5734 = vsyncpa [#allocation4], 1
    %s5735 = scalar_lea.sflag [#allocation4], 1
    %5736 = vsyncpa %s5735, 1

</llo_original>
